<compile_context>
chip_gen: v5e
topology: v5e:2x2
jax: 0.10.0
libtpu: 0.0.40
codegen_flags: <defaults>
</compile_context>

<pallas_src>
import math

import jax
import jax.numpy as jnp
import numpy as np
from jax.experimental import pallas as pl
from jax.experimental.pallas import tpu as pltpu

NUM_HEADS = 2
CONV_MID = 32  # hard-coded intermediate channels in the PyTorch module


# --------------------------------------------------------------------------- #
# Pallas kernel (one grid step == one block of attention channels)
# --------------------------------------------------------------------------- #
def encoder_kernel(xcat_ref, w1_ref, b1_ref, w2_ref, wqkvs_ref, qkvb_ref,
                   wo_ref, bo_ref, out_ref):
    L, T, F3 = xcat_ref.shape          # L = B*S, F3 = 3*feat_dim (im2col'd)
    C3 = w2_ref.shape[1]               # 3 * C_blk (tap-stacked conv2 outputs)
    C_blk = C3 // 3
    E3 = wqkvs_ref.shape[1]            # 3 * E
    E = E3 // 3                        # E == T == hidden_dim
    B, _ = out_ref.shape
    S = L // B
    D = E // NUM_HEADS
    scale = 1.0 / math.sqrt(D)
    f32, bf16 = jnp.float32, jnp.bfloat16

    # ---- conv1 (k=3, pad=1) as ONE matmul (im2col done on host): K = 3*F ----
    h1 = jnp.dot(xcat_ref[...].reshape(L * T, F3), w1_ref[...],
                 preferred_element_type=f32) + b1_ref[...]
    h1 = jnp.maximum(h1, 0.0)                              # (L*T, Cm) f32

    # ---- conv2: per-tap partials z_k in one matmul; the temporal shift of ----
    # ---- the taps is folded into the host-shifted fused QKV weights.      ----
    z = jnp.dot(h1.astype(bf16), w2_ref[...], preferred_element_type=f32)
    z = z.reshape(L, T, C3)                                # [l, t, k*C_blk + j]
    z = jnp.swapaxes(z, 1, 2)                              # (L, 3*C_blk, T)
    z = jnp.transpose(z, (1, 0, 2))                        # (3*C_blk, L, T)
    zcat = jnp.concatenate(
        [z[:C_blk], z[C_blk:2 * C_blk], z[2 * C_blk:]], axis=-1)  # (C_blk, L, 3T)

    # ---- fused (shifted) Q|K|V projection: one matmul, K = 3T, N = 3E ----
    qkv = jnp.dot(zcat.reshape(C_blk * L, 3 * T).astype(bf16), wqkvs_ref[...],
                  preferred_element_type=f32)
    qkv = qkv.reshape(C_blk, L, E3) + qkvb_ref[...].reshape(C_blk, 1, E3)

    q = qkv[:, :, :E] * scale
    k = qkv[:, :, E:2 * E]
    v = qkv[:, :, 2 * E:]

    def split_heads(t):   # (C_blk, L, E) -> (NUM_HEADS*C_blk, L, D), head-major
        return jnp.concatenate(
            [t[:, :, h * D:(h + 1) * D] for h in range(NUM_HEADS)], axis=0)

    qh = split_heads(q).astype(bf16)
    kh = split_heads(k).astype(bf16)
    vh = split_heads(v).astype(bf16)

    # Batched attention over n = head*C_blk + channel (single einsum pair).
    s = jnp.einsum('nld,nmd->nlm', qh, kh, preferred_element_type=f32)
    s = s - jnp.max(s, axis=-1, keepdims=True)
    p = jnp.exp(s)
    p = p * pl.reciprocal(jnp.sum(p, axis=-1, keepdims=True), approx=True)
    a = jnp.einsum('nlm,nmd->nld', p.astype(bf16), vh,
                   preferred_element_type=f32)             # (NH*C_blk, L, D)

    # Fold the (linear) channel & S means BEFORE the output projection.
    a = jnp.mean(a.reshape(NUM_HEADS, C_blk, L, D), axis=1)       # (NH, L, D)
    a = jnp.mean(a.reshape(NUM_HEADS, B, S, D), axis=2)           # (NH, B, D)
    pre = jnp.transpose(a, (1, 0, 2)).reshape(B, NUM_HEADS * D)   # (B, E)

    out_ref[...] = (jnp.dot(pre, wo_ref[...], preferred_element_type=f32)
                    + bo_ref[...])                                 # (B, E)


# --------------------------------------------------------------------------- #
# Wrapper: host-side operand preparation + pallas_call
# --------------------------------------------------------------------------- #
def dynamic_service_encoder(x4, params, num_channel_blocks=2):
    B, S, T, F = x4.shape
    H = params['conv2_w'].shape[0]
    E = H
    assert T == H, "module requires time_steps == hidden_dim (MHA embed_dim)"
    assert E % NUM_HEADS == 0
    L = B * S
    if H % num_channel_blocks != 0:
        num_channel_blocks = 1
    NB = num_channel_blocks
    C_blk = H // NB
    Cm = CONV_MID
    f32, bf16 = jnp.float32, jnp.bfloat16

    # --- conv1: host-side im2col along T (k=3, pad=1) -> one in-kernel matmul
    x = x4.reshape(L, T, F).astype(f32)
    zrow = jnp.zeros((L, 1, F), f32)
    x_prev = jnp.concatenate([zrow, x[:, :-1, :]], axis=1)
    x_next = jnp.concatenate([x[:, 1:, :], zrow], axis=1)
    x_cat = jnp.concatenate([x_prev, x, x_next], axis=-1).astype(bf16)  # (L,T,3F)

    w1cat = jnp.transpose(params['conv1_w'], (2, 1, 0)).reshape(
        3 * F, Cm).astype(bf16)                                         # (3F, Cm)
    b1 = params['conv1_b'].reshape(1, Cm).astype(f32)

    # --- conv2 weights, tap-stacked on the output axis and channel-blocked:
    #     w2stack[blk, cin, k*C_blk + j] = W2[blk*C_blk + j, cin, k]
    w2t = jnp.transpose(params['conv2_w'], (1, 2, 0))          # (Cm, 3, H)
    w2t = w2t.reshape(Cm, 3, NB, C_blk)
    w2stack = jnp.transpose(w2t, (2, 0, 1, 3)).reshape(
        NB, Cm, 3 * C_blk).astype(bf16)

    # --- fused QKV weights with the conv2 k=3/pad=1 shift folded in:
    #     tap k uses WqkvT rows shifted by (1 - k), zero at the boundary.
    ipw, ipb = params['in_proj_w'], params['in_proj_b']
    wqkvT = jnp.concatenate([ipw[:E].T, ipw[E:2 * E].T, ipw[2 * E:].T],
                            axis=1)                            # (T, 3E)
    zr = jnp.zeros((1, 3 * E), f32)
    ws0 = jnp.concatenate([wqkvT[1:], zr], axis=0)             # row t -> W[t+1]
    ws2 = jnp.concatenate([zr, wqkvT[:-1]], axis=0)            # row t -> W[t-1]
    wqkvS = jnp.concatenate([ws0, wqkvT, ws2], axis=0).astype(bf16)  # (3T, 3E)

    # conv2 bias folded through the T-sum of the projection + in_proj bias.
    colsum = jnp.sum(wqkvT, axis=0)                            # (3E,)
    qkv_bias = params['conv2_b'][:, None] * colsum[None, :] + ipb[None, :]
    qkv_bias = qkv_bias.reshape(NB, C_blk, 3 * E).astype(f32)

    woT = params['out_proj_w'].T.astype(f32)                   # (E, E)
    bo = params['out_proj_b'].reshape(1, E).astype(f32)

    out_blocks = pl.pallas_call(
        encoder_kernel,
        out_shape=jax.ShapeDtypeStruct((NB, B, E), f32),
        grid=(NB,),
        in_specs=[
            pl.BlockSpec((L, T, 3 * F), lambda c: (0, 0, 0)),          # x_cat
            pl.BlockSpec((3 * F, Cm), lambda c: (0, 0)),               # w1cat
            pl.BlockSpec((1, Cm), lambda c: (0, 0)),                   # b1
            pl.BlockSpec((None, Cm, 3 * C_blk), lambda c: (c, 0, 0)),  # w2stack
            pl.BlockSpec((3 * T, 3 * E), lambda c: (0, 0)),            # wqkvS
            pl.BlockSpec((None, C_blk, 3 * E), lambda c: (c, 0, 0)),   # qkv_bias
            pl.BlockSpec((E, E), lambda c: (0, 0)),                    # woT
            pl.BlockSpec((1, E), lambda c: (0, 0)),                    # bo
        ],
        out_specs=pl.BlockSpec((None, B, E), lambda c: (c, 0, 0)),
        compiler_params=pltpu.CompilerParams(
            dimension_semantics=("parallel",)),
    )(x_cat, w1cat, b1, w2stack, wqkvS, qkv_bias, woT, bo)

    # Per-block partial results (equal-size channel blocks) -> global mean.
    return jnp.mean(out_blocks, axis=0)


# --------------------------------------------------------------------------- #
# Deterministic parameter init (shapes follow the PyTorch module __init__)
# --------------------------------------------------------------------------- #
def make_params(key, feat_dim, hidden_dim):
    ks = jax.random.split(key, 8)

    def init(k, shape, scale=0.1):
        return scale * jax.random.normal(k, shape, dtype=jnp.float32)

    E = hidden_dim
    return dict(
        conv1_w=init(ks[0], (CONV_MID, feat_dim, 3)),
        conv1_b=init(ks[1], (CONV_MID,)),
        conv2_w=init(ks[2], (hidden_dim, CONV_MID, 3)),
        conv2_b=init(ks[3], (hidden_dim,)),
        in_proj_w=init(ks[4], (3 * E, E)),
        in_proj_b=init(ks[5], (3 * E,)),
        out_proj_w=init(ks[6], (E, E)),
        out_proj_b=init(ks[7], (E,)),
    )


# --------------------------------------------------------------------------- #
# Pure-JAX reference (mirrors the PyTorch forward exactly) for validation
# --------------------------------------------------------------------------- #
def reference(x4, params):
    B, S, T, Fdim = x4.shape
    x = x4.reshape(B * S, T, Fdim)
    xc = jnp.transpose(x, (0, 2, 1))                     # (L, F, T)  NCT

    def conv1d(h, w, b):
        hp = jnp.pad(h, ((0, 0), (0, 0), (1, 1)))
        Tn = h.shape[-1]
        y = sum(jnp.einsum('nct,oc->not', hp[:, :, k:k + Tn], w[:, :, k])
                for k in range(3))
        return y + b[None, :, None]

    h1 = jax.nn.relu(conv1d(xc, params['conv1_w'], params['conv1_b']))
    h2 = conv1d(h1, params['conv2_w'], params['conv2_b'])   # (L, H, T)

    E = T
    ipw, ipb = params['in_proj_w'], params['in_proj_b']
    wq, wk, wv = ipw[:E], ipw[E:2 * E], ipw[2 * E:]
    bq, bk, bv = ipb[:E], ipb[E:2 * E], ipb[2 * E:]
    q = jnp.einsum('lne,fe->lnf', h2, wq) + bq
    k = jnp.einsum('lne,fe->lnf', h2, wk) + bk
    v = jnp.einsum('lne,fe->lnf', h2, wv) + bv

    D = E // NUM_HEADS
    outs = []
    for hd in range(NUM_HEADS):
        sl = slice(hd * D, (hd + 1) * D)
        s = jnp.einsum('lnd,mnd->nlm', q[..., sl], k[..., sl]) / jnp.sqrt(
            jnp.float32(D))
        p = jax.nn.softmax(s, axis=-1)
        outs.append(jnp.einsum('nlm,mnd->lnd', p, v[..., sl]))
    a = jnp.concatenate(outs, axis=-1)                        # (L, H, E)
    o = jnp.einsum('lne,fe->lnf', a, params['out_proj_w']) + params['out_proj_b']
    m = o.mean(axis=1)                                        # (L, E)
    return m.reshape(B, S, E).mean(axis=1)


if __name__ == "__main__":
    # Small shapes consistent with the module. The PyTorch forward only runs
    # when time_steps == hidden_dim (MHA embed_dim check), so T = HIDDEN.
    B, S, T, FEAT, HIDDEN = 2, 3, 32, 8, 32
    key = jax.random.PRNGKey(0)
    kx, kp = jax.random.split(key)
    x = jax.random.normal(kx, (B, S, T, FEAT), dtype=jnp.float32)
    params = make_params(kp, feat_dim=FEAT, hidden_dim=HIDDEN)

    out = dynamic_service_encoder(x, params)
    out = jax.block_until_ready(out)

    ref = reference(x, params)
    assert out.shape == (B, HIDDEN)
    np.testing.assert_allclose(np.asarray(out), np.asarray(ref),
                               rtol=1e-2, atol=1e-2)
    print("KERNEL_OK")
</pallas_src>

<mosaic_0001>
module attributes {stable_mosaic.version = 11 : i64} {
  func.func @encoder_kernel(%arg0: i32, %arg1: memref<6x32x24xbf16, #tpu.memory_space<vmem>>, %arg2: memref<24x32xbf16, #tpu.memory_space<vmem>>, %arg3: memref<1x32xf32, #tpu.memory_space<vmem>>, %arg4: memref<1x32x48xbf16, #tpu.memory_space<vmem>>, %arg5: memref<96x96xbf16, #tpu.memory_space<vmem>>, %arg6: memref<1x16x96xf32, #tpu.memory_space<vmem>>, %arg7: memref<32x32xf32, #tpu.memory_space<vmem>>, %arg8: memref<1x32xf32, #tpu.memory_space<vmem>>, %arg9: memref<1x2x32xf32, #tpu.memory_space<vmem>>) attributes {dimension_semantics = [#tpu.dimension_semantics<parallel>], iteration_bounds = array<i64: 2>, scalar_prefetch = 0 : i64, scratch_operands = 0 : i64, tpu.core_type = #tpu.core_type<tc>, window_params = [{pipeline_mode = #tpu.pipeline_mode<synchronous>, transform_indices = @transform_0, window_bounds = array<i64: 6, 32, 24>}, {pipeline_mode = #tpu.pipeline_mode<synchronous>, transform_indices = @transform_1, window_bounds = array<i64: 24, 32>}, {pipeline_mode = #tpu.pipeline_mode<synchronous>, transform_indices = @transform_2, window_bounds = array<i64: 1, 32>}, {transform_indices = @transform_3, window_bounds = array<i64: 1, 32, 48>}, {pipeline_mode = #tpu.pipeline_mode<synchronous>, transform_indices = @transform_4, window_bounds = array<i64: 96, 96>}, {transform_indices = @transform_5, window_bounds = array<i64: 1, 16, 96>}, {pipeline_mode = #tpu.pipeline_mode<synchronous>, transform_indices = @transform_6, window_bounds = array<i64: 32, 32>}, {pipeline_mode = #tpu.pipeline_mode<synchronous>, transform_indices = @transform_7, window_bounds = array<i64: 1, 32>}, {transform_indices = @transform_8, window_bounds = array<i64: 1, 2, 32>}]} {
    %c0 = arith.constant 0 : index
    %c0_0 = arith.constant 0 : index
    %c0_1 = arith.constant 0 : index
    %0 = vector.load %arg1[%c0, %c0_0, %c0_1] : memref<6x32x24xbf16, #tpu.memory_space<vmem>>, vector<6x32x24xbf16>
    %1 = vector.shape_cast %0 : vector<6x32x24xbf16> to vector<192x24xbf16>
    %c0_2 = arith.constant 0 : index
    %c0_3 = arith.constant 0 : index
    %2 = vector.load %arg2[%c0_2, %c0_3] : memref<24x32xbf16, #tpu.memory_space<vmem>>, vector<24x32xbf16>
    %cst = arith.constant dense<0.000000e+00> : vector<192x32xf32>
    %3 = tpu.matmul %1, %2, %cst {dimension_numbers = #tpu.dot_dimension_numbers<[1], [0], [0], [1], [0, 0, 1, 1], [], []>} : vector<192x24xbf16>, vector<24x32xbf16>, vector<192x32xf32> -> vector<192x32xf32>
    %c0_4 = arith.constant 0 : index
    %c0_5 = arith.constant 0 : index
    %4 = vector.load %arg3[%c0_4, %c0_5] : memref<1x32xf32, #tpu.memory_space<vmem>>, vector<1x32xf32>
    %5 = vector.broadcast %4 : vector<1x32xf32> to vector<192x32xf32>
    %6 = arith.addf %3, %5 : vector<192x32xf32>
    %cst_6 = arith.constant 0.000000e+00 : f32
    %7 = vector.broadcast %cst_6 : f32 to vector<192x32xf32>
    %8 = arith.maximumf %6, %7 : vector<192x32xf32>
    %9 = arith.truncf %8 : vector<192x32xf32> to vector<192x32xbf16>
    %c0_7 = arith.constant 0 : index
    %c0_8 = arith.constant 0 : index
    %c0_9 = arith.constant 0 : index
    %10 = vector.load %arg4[%c0_7, %c0_8, %c0_9] : memref<1x32x48xbf16, #tpu.memory_space<vmem>>, vector<1x32x48xbf16>
    %11 = vector.shape_cast %10 : vector<1x32x48xbf16> to vector<32x48xbf16>
    %cst_10 = arith.constant dense<0.000000e+00> : vector<192x48xf32>
    %12 = tpu.matmul %9, %11, %cst_10 {dimension_numbers = #tpu.dot_dimension_numbers<[1], [0], [0], [1], [0, 0, 1, 1], [], []>} : vector<192x32xbf16>, vector<32x48xbf16>, vector<192x48xf32> -> vector<192x48xf32>
    %13 = vector.shape_cast %12 : vector<192x48xf32> to vector<6x32x48xf32>
    %14 = tpu.transpose %13, [0, 2, 1] : vector<6x32x48xf32> -> vector<6x48x32xf32>
    %15 = tpu.transpose %14, [1, 0, 2] : vector<6x48x32xf32> -> vector<48x6x32xf32>
    %16 = vector.extract_strided_slice %15 {offsets = [0, 0, 0], sizes = [16, 6, 32], strides = [1, 1, 1]} : vector<48x6x32xf32> to vector<16x6x32xf32>
    %17 = vector.extract_strided_slice %15 {offsets = [16, 0, 0], sizes = [16, 6, 32], strides = [1, 1, 1]} : vector<48x6x32xf32> to vector<16x6x32xf32>
    %18 = vector.extract_strided_slice %15 {offsets = [32, 0, 0], sizes = [16, 6, 32], strides = [1, 1, 1]} : vector<48x6x32xf32> to vector<16x6x32xf32>
    %19 = tpu.concatenate %16, %17, %18 in 2 : vector<16x6x32xf32>, vector<16x6x32xf32>, vector<16x6x32xf32> -> vector<16x6x96xf32>
    %20 = vector.shape_cast %19 : vector<16x6x96xf32> to vector<96x96xf32>
    %21 = arith.truncf %20 : vector<96x96xf32> to vector<96x96xbf16>
    %c0_11 = arith.constant 0 : index
    %c0_12 = arith.constant 0 : index
    %22 = vector.load %arg5[%c0_11, %c0_12] : memref<96x96xbf16, #tpu.memory_space<vmem>>, vector<96x96xbf16>
    %cst_13 = arith.constant dense<0.000000e+00> : vector<96x96xf32>
    %23 = tpu.matmul %21, %22, %cst_13 {dimension_numbers = #tpu.dot_dimension_numbers<[1], [0], [0], [1], [0, 0, 1, 1], [], []>} : vector<96x96xbf16>, vector<96x96xbf16>, vector<96x96xf32> -> vector<96x96xf32>
    %24 = vector.shape_cast %23 : vector<96x96xf32> to vector<16x6x96xf32>
    %c0_14 = arith.constant 0 : index
    %c0_15 = arith.constant 0 : index
    %c0_16 = arith.constant 0 : index
    %25 = vector.load %arg6[%c0_14, %c0_15, %c0_16] : memref<1x16x96xf32, #tpu.memory_space<vmem>>, vector<1x16x96xf32>
    %26 = vector.shape_cast %25 : vector<1x16x96xf32> to vector<16x96xf32>
    %27 = vector.shape_cast %26 : vector<16x96xf32> to vector<16x1x96xf32>
    %28 = vector.broadcast %27 : vector<16x1x96xf32> to vector<16x6x96xf32>
    %29 = arith.addf %24, %28 : vector<16x6x96xf32>
    %30 = vector.extract_strided_slice %29 {offsets = [0, 0, 0], sizes = [16, 6, 32], strides = [1, 1, 1]} : vector<16x6x96xf32> to vector<16x6x32xf32>
    %cst_17 = arith.constant 2.500000e-01 : f32
    %31 = vector.broadcast %cst_17 : f32 to vector<16x6x32xf32>
    %32 = arith.mulf %30, %31 : vector<16x6x32xf32>
    %33 = vector.extract_strided_slice %29 {offsets = [0, 0, 32], sizes = [16, 6, 32], strides = [1, 1, 1]} : vector<16x6x96xf32> to vector<16x6x32xf32>
    %34 = vector.extract_strided_slice %29 {offsets = [0, 0, 64], sizes = [16, 6, 32], strides = [1, 1, 1]} : vector<16x6x96xf32> to vector<16x6x32xf32>
    %35 = vector.extract_strided_slice %32 {offsets = [0, 0, 0], sizes = [16, 6, 16], strides = [1, 1, 1]} : vector<16x6x32xf32> to vector<16x6x16xf32>
    %36 = vector.extract_strided_slice %32 {offsets = [0, 0, 16], sizes = [16, 6, 16], strides = [1, 1, 1]} : vector<16x6x32xf32> to vector<16x6x16xf32>
    %37 = tpu.concatenate %35, %36 in 0 : vector<16x6x16xf32>, vector<16x6x16xf32> -> vector<32x6x16xf32>
    %38 = arith.truncf %37 : vector<32x6x16xf32> to vector<32x6x16xbf16>
    %39 = vector.extract_strided_slice %33 {offsets = [0, 0, 0], sizes = [16, 6, 16], strides = [1, 1, 1]} : vector<16x6x32xf32> to vector<16x6x16xf32>
    %40 = vector.extract_strided_slice %33 {offsets = [0, 0, 16], sizes = [16, 6, 16], strides = [1, 1, 1]} : vector<16x6x32xf32> to vector<16x6x16xf32>
    %41 = tpu.concatenate %39, %40 in 0 : vector<16x6x16xf32>, vector<16x6x16xf32> -> vector<32x6x16xf32>
    %42 = arith.truncf %41 : vector<32x6x16xf32> to vector<32x6x16xbf16>
    %43 = vector.extract_strided_slice %34 {offsets = [0, 0, 0], sizes = [16, 6, 16], strides = [1, 1, 1]} : vector<16x6x32xf32> to vector<16x6x16xf32>
    %44 = vector.extract_strided_slice %34 {offsets = [0, 0, 16], sizes = [16, 6, 16], strides = [1, 1, 1]} : vector<16x6x32xf32> to vector<16x6x16xf32>
    %45 = tpu.concatenate %43, %44 in 0 : vector<16x6x16xf32>, vector<16x6x16xf32> -> vector<32x6x16xf32>
    %46 = arith.truncf %45 : vector<32x6x16xf32> to vector<32x6x16xbf16>
    "tpu.trace_start"() <{level = 10 : i32, message = "nld,nmd->nlm"}> : () -> ()
    %cst_18 = arith.constant dense<0.000000e+00> : vector<32x6x6xf32>
    %47 = tpu.matmul %38, %42, %cst_18 {dimension_numbers = #tpu.dot_dimension_numbers<[2], [2], [1], [1], [0, 0, 0, 1, 1, 1], [0], [0]>} : vector<32x6x16xbf16>, vector<32x6x16xbf16>, vector<32x6x6xf32> -> vector<32x6x6xf32>
    "tpu.trace_stop"() : () -> ()
    %cst_19 = arith.constant dense<0xFF800000> : vector<32x6xf32>
    %48 = vector.multi_reduction <maximumf>, %47, %cst_19 [2] : vector<32x6x6xf32> to vector<32x6xf32>
    %49 = vector.shape_cast %48 : vector<32x6xf32> to vector<32x6x1xf32>
    %50 = vector.broadcast %49 : vector<32x6x1xf32> to vector<32x6x6xf32>
    %51 = arith.subf %47, %50 : vector<32x6x6xf32>
    %52 = math.exp %51 : vector<32x6x6xf32>
    %cst_20 = arith.constant dense<0.000000e+00> : vector<32x6xf32>
    %53 = vector.multi_reduction <add>, %52, %cst_20 [2] : vector<32x6x6xf32> to vector<32x6xf32>
    %54 = vector.shape_cast %53 : vector<32x6xf32> to vector<32x6x1xf32>
    %55 = tpu.reciprocal %54 {approx = true} : vector<32x6x1xf32> -> vector<32x6x1xf32>
    %56 = vector.broadcast %55 : vector<32x6x1xf32> to vector<32x6x6xf32>
    %57 = arith.mulf %52, %56 : vector<32x6x6xf32>
    %58 = arith.truncf %57 : vector<32x6x6xf32> to vector<32x6x6xbf16>
    "tpu.trace_start"() <{level = 10 : i32, message = "nlm,nmd->nld"}> : () -> ()
    %cst_21 = arith.constant dense<0.000000e+00> : vector<32x6x16xf32>
    %59 = tpu.matmul %58, %46, %cst_21 {dimension_numbers = #tpu.dot_dimension_numbers<[2], [1], [1], [2], [0, 0, 0, 1, 1, 2], [0], [0]>} : vector<32x6x6xbf16>, vector<32x6x16xbf16>, vector<32x6x16xf32> -> vector<32x6x16xf32>
    "tpu.trace_stop"() : () -> ()
    %60 = vector.shape_cast %59 : vector<32x6x16xf32> to vector<2x16x6x16xf32>
    %cst_22 = arith.constant dense<0.000000e+00> : vector<2x6x16xf32>
    %61 = vector.multi_reduction <add>, %60, %cst_22 [1] : vector<2x16x6x16xf32> to vector<2x6x16xf32>
    %cst_23 = arith.constant 1.600000e+01 : f32
    %62 = vector.broadcast %cst_23 : f32 to vector<2x6x16xf32>
    %63 = arith.divf %61, %62 : vector<2x6x16xf32>
    %64 = vector.shape_cast %63 : vector<2x6x16xf32> to vector<2x2x3x16xf32>
    %cst_24 = arith.constant dense<0.000000e+00> : vector<2x2x16xf32>
    %65 = vector.multi_reduction <add>, %64, %cst_24 [2] : vector<2x2x3x16xf32> to vector<2x2x16xf32>
    %cst_25 = arith.constant 3.000000e+00 : f32
    %66 = vector.broadcast %cst_25 : f32 to vector<2x2x16xf32>
    %67 = arith.divf %65, %66 : vector<2x2x16xf32>
    %68 = tpu.transpose %67, [1, 0, 2] : vector<2x2x16xf32> -> vector<2x2x16xf32>
    %69 = vector.shape_cast %68 : vector<2x2x16xf32> to vector<2x32xf32>
    %c0_26 = arith.constant 0 : index
    %c0_27 = arith.constant 0 : index
    %70 = vector.load %arg7[%c0_26, %c0_27] : memref<32x32xf32, #tpu.memory_space<vmem>>, vector<32x32xf32>
    %cst_28 = arith.constant dense<0.000000e+00> : vector<2x32xf32>
    %71 = tpu.matmul %69, %70, %cst_28 {dimension_numbers = #tpu.dot_dimension_numbers<[1], [0], [0], [1], [0, 0, 1, 1], [], []>} : vector<2x32xf32>, vector<32x32xf32>, vector<2x32xf32> -> vector<2x32xf32>
    %c0_29 = arith.constant 0 : index
    %c0_30 = arith.constant 0 : index
    %72 = vector.load %arg8[%c0_29, %c0_30] : memref<1x32xf32, #tpu.memory_space<vmem>>, vector<1x32xf32>
    %73 = vector.broadcast %72 : vector<1x32xf32> to vector<2x32xf32>
    %74 = arith.addf %71, %73 : vector<2x32xf32>
    %c0_31 = arith.constant 0 : index
    %c0_32 = arith.constant 0 : index
    %c0_33 = arith.constant 0 : index
    %75 = vector.load %arg9[%c0_31, %c0_32, %c0_33] : memref<1x2x32xf32, #tpu.memory_space<vmem>>, vector<1x2x32xf32>
    %76 = vector.shape_cast %75 : vector<1x2x32xf32> to vector<2x32xf32>
    %77 = vector.shape_cast %74 : vector<2x32xf32> to vector<1x2x32xf32>
    tpu.vector_store %arg9[%c0_31, %c0_32, %c0_33], %77 {strides = array<i32>} : memref<1x2x32xf32, #tpu.memory_space<vmem>>, vector<1x2x32xf32>,
    return
  }
  func.func @transform_0(%arg0: i32) -> (i32, i32, i32) {
    %c0_i32 = arith.constant 0 : i32
    %c0_i32_0 = arith.constant 0 : i32
    %c0_i32_1 = arith.constant 0 : i32
    %c0_i32_2 = arith.constant 0 : i32
    return %c0_i32, %c0_i32_0, %c0_i32_1 : i32, i32, i32
  }
  func.func @transform_1(%arg0: i32) -> (i32, i32) {
    %c0_i32 = arith.constant 0 : i32
    %c0_i32_0 = arith.constant 0 : i32
    %c0_i32_1 = arith.constant 0 : i32
    return %c0_i32, %c0_i32_0 : i32, i32
  }
  func.func @transform_2(%arg0: i32) -> (i32, i32) {
    %c0_i32 = arith.constant 0 : i32
    %c0_i32_0 = arith.constant 0 : i32
    %c0_i32_1 = arith.constant 0 : i32
    return %c0_i32, %c0_i32_0 : i32, i32
  }
  func.func @transform_3(%arg0: i32) -> (i32, i32, i32) {
    %c0_i32 = arith.constant 0 : i32
    %c0_i32_0 = arith.constant 0 : i32
    %c0_i32_1 = arith.constant 0 : i32
    return %arg0, %c0_i32, %c0_i32_0 : i32, i32, i32
  }
  func.func @transform_4(%arg0: i32) -> (i32, i32) {
    %c0_i32 = arith.constant 0 : i32
    %c0_i32_0 = arith.constant 0 : i32
    %c0_i32_1 = arith.constant 0 : i32
    return %c0_i32, %c0_i32_0 : i32, i32
  }
  func.func @transform_5(%arg0: i32) -> (i32, i32, i32) {
    %c0_i32 = arith.constant 0 : i32
    %c0_i32_0 = arith.constant 0 : i32
    %c0_i32_1 = arith.constant 0 : i32
    return %arg0, %c0_i32, %c0_i32_0 : i32, i32, i32
  }
  func.func @transform_6(%arg0: i32) -> (i32, i32) {
    %c0_i32 = arith.constant 0 : i32
    %c0_i32_0 = arith.constant 0 : i32
    %c0_i32_1 = arith.constant 0 : i32
    return %c0_i32, %c0_i32_0 : i32, i32
  }
  func.func @transform_7(%arg0: i32) -> (i32, i32) {
    %c0_i32 = arith.constant 0 : i32
    %c0_i32_0 = arith.constant 0 : i32
    %c0_i32_1 = arith.constant 0 : i32
    return %c0_i32, %c0_i32_0 : i32, i32
  }
  func.func @transform_8(%arg0: i32) -> (i32, i32, i32) {
    %c0_i32 = arith.constant 0 : i32
    %c0_i32_0 = arith.constant 0 : i32
    %c0_i32_1 = arith.constant 0 : i32
    return %arg0, %c0_i32, %c0_i32_0 : i32, i32, i32
  }
}

</mosaic_0001>

<llo_original>
// kernel: tpu_custom_call.1
$region0: #{tpu_custom_call.1}
  #allocation0 [shape = 'u32[]', space=smem, size = 0x4, offset = 0x4, fixed_abs, tag = 'smem constant byte address 0x4 - core index']
  #allocation1 [shape = 'u32[72,128]{1,0:T(1,128)}', space=vmem, size = 0x9000, scoped, tag = 'internal scratch']
  %s0 = inlined_call_operand.vmem [shape: bf16[6,32,24], index: 0, kind: input, shape index: {}]
  %s1 = inlined_call_operand.vmem [shape: bf16[24,32], index: 1, kind: input, shape index: {}]
  %s2 = inlined_call_operand.vmem [shape: f32[1,32], index: 2, kind: input, shape index: {}]
  %s3 = inlined_call_operand.vmem [shape: bf16[2,32,48], index: 3, kind: input, shape index: {}]
  %s4 = inlined_call_operand.vmem [shape: bf16[96,96], index: 4, kind: input, shape index: {}]
  %s5 = inlined_call_operand.vmem [shape: f32[2,16,96], index: 5, kind: input, shape index: {}]
  %s6 = inlined_call_operand.vmem [shape: f32[32,32], index: 6, kind: input, shape index: {}]
  %s7 = inlined_call_operand.vmem [shape: f32[1,32], index: 7, kind: input, shape index: {}]
  %s8 = inlined_call_operand.hbm [shape: f32[2,2,32], index: 8, kind: output, shape index: {}]
  %s9 = sld [smem:[#allocation0]]
  $region65: #{tpu_custom_call.1} parent=0
    _
  %s11 = ssub.s32 1, %s9
  %s12 = scalar_select 0, %s11, %s9
  $region1: #{tpu_custom_call.1} parent=0
    #allocation2 [shape = 'u8[2048]{0}', space=vmem, size = 0x800, scoped, tag = 'output window, operand 0']
    #allocation3 [shape = 's32[2]{0}', space=sflag, size = 0x8, scoped, tag = 'scoped memory for tpu_custom_call.1']
    %13 = vsyncpa [#allocation3], 0
    %s14 = scalar_lea.sflag [#allocation3], 1
    %15 = vsyncpa %s14, 0
    loop: start=0, step=1, limit=4
    $region2: #{tpu_custom_call.1} parent=1 // loop_pre_header
      _
    $region3: #{tpu_custom_call.1} parent=1 // loop_header
      %s17 = sphi 0, %s21
      %p18 = scmp.ge.s32.totalorder %s17, 4
      %s25 = sphi 0, %s25
      %s27 = sphi 0, %s25
      %s28 = sphi 0, %s27
      %s42 = sphi 0, %s28
      %s46 = sphi 0, %s46
      %s48 = sphi 0, %s46
      %s49 = sphi 0, %s48
      %s63 = sphi 0, %s49
      %s67 = sphi 0, %s67
      %s69 = sphi 0, %s67
      %s70 = sphi 0, %s69
      %s84 = sphi 0, %s70
      %s90 = sphi 0, %s92
      %s93 = sphi 0, %s90
      %s94 = sphi 0, %s93
      %s110 = sphi 0, %s94
      %s114 = sphi 0, %s114
      %s116 = sphi 0, %s114
      %s117 = sphi 0, %s116
      %s131 = sphi 0, %s117
      %s137 = sphi 0, %s139
      %s140 = sphi 0, %s137
      %s141 = sphi 0, %s140
      %s157 = sphi 0, %s141
      %s161 = sphi 0, %s161
      %s163 = sphi 0, %s161
      %s164 = sphi 0, %s163
      %s178 = sphi 0, %s164
      %s182 = sphi 0, %s182
      %s184 = sphi 0, %s182
      %s185 = sphi 0, %s184
      %s199 = sphi 0, %s185
      %s205 = sphi 0, %s207
      %s208 = sphi 0, %s205
      %s209 = sphi 0, %s208
      %s225 = sphi 0, %s209
    $region4: #{tpu_custom_call.1} parent=1 // loop_header_branch
      %20 = sbr.rel (%p18) target = $region8
    $region5: #{tpu_custom_call.1} parent=1 // loop_body
      %s22 = ssub.s32 %s17, 1
      %s23 = ssub.s32 %s17, 2
      %s24 = sadd.s32 %s17, 1
      %s26 = sadd.s32 %s25, 1
      %p29 = scmp.eq.s32.totalorder %s17, 1
      %p30 = scmp.ne.s32.totalorder %s25, %s27
      %p31 = scmp.eq.s32.totalorder %s17, 0
      %p32 = por %p30, %p31
      %p33 = scmp.ne.s32.totalorder %s25, %s27
      %p34 = scmp.eq.s32.totalorder %s22, 1
      %p35 = por %p33, %p34
      %p36 = scmp.ne.s32.totalorder %s27, %s28
      %p37 = scmp.eq.s32.totalorder %s22, 0
      %p38 = por %p36, %p37
      %p39 = scmp.ne.s32.totalorder %s27, %s28
      %p40 = scmp.eq.s32.totalorder %s23, 1
      %p41 = por %p39, %p40
      %p43 = scmp.ne.s32.totalorder %s28, %s42
      %p44 = scmp.eq.s32.totalorder %s23, 0
      %p45 = por %p43, %p44
      %s47 = sadd.s32 %s46, 1
      %p50 = scmp.eq.s32.totalorder %s17, 1
      %p51 = scmp.ne.s32.totalorder %s46, %s48
      %p52 = scmp.eq.s32.totalorder %s17, 0
      %p53 = por %p51, %p52
      %p54 = scmp.ne.s32.totalorder %s46, %s48
      %p55 = scmp.eq.s32.totalorder %s22, 1
      %p56 = por %p54, %p55
      %p57 = scmp.ne.s32.totalorder %s48, %s49
      %p58 = scmp.eq.s32.totalorder %s22, 0
      %p59 = por %p57, %p58
      %p60 = scmp.ne.s32.totalorder %s48, %s49
      %p61 = scmp.eq.s32.totalorder %s23, 1
      %p62 = por %p60, %p61
      %p64 = scmp.ne.s32.totalorder %s49, %s63
      %p65 = scmp.eq.s32.totalorder %s23, 0
      %p66 = por %p64, %p65
      %s68 = sadd.s32 %s67, 1
      %p71 = scmp.eq.s32.totalorder %s17, 1
      %p72 = scmp.ne.s32.totalorder %s67, %s69
      %p73 = scmp.eq.s32.totalorder %s17, 0
      %p74 = por %p72, %p73
      %p75 = scmp.ne.s32.totalorder %s67, %s69
      %p76 = scmp.eq.s32.totalorder %s22, 1
      %p77 = por %p75, %p76
      %p78 = scmp.ne.s32.totalorder %s69, %s70
      %p79 = scmp.eq.s32.totalorder %s22, 0
      %p80 = por %p78, %p79
      %p81 = scmp.ne.s32.totalorder %s69, %s70
      %p82 = scmp.eq.s32.totalorder %s23, 1
      %p83 = por %p81, %p82
      %p85 = scmp.ne.s32.totalorder %s70, %s84
      %p86 = scmp.eq.s32.totalorder %s23, 0
      %p87 = por %p85, %p86
      %s88 = ssub.s32 %s17, %s24
      %p89 = scmp.eq.s32.totalorder %s88, 0
      %s91 = sadd.s32 %s90, 1
      %s92 = scalar_select %p89, %s90, %s91
      %p95 = pneg %p89
      %p96 = scmp.eq.s32.totalorder %s17, 1
      %p97 = por %p95, %p96
      %p98 = scmp.ne.s32.totalorder %s90, %s93
      %p99 = scmp.eq.s32.totalorder %s17, 0
      %p100 = por %p98, %p99
      %p101 = scmp.ne.s32.totalorder %s90, %s93
      %p102 = scmp.eq.s32.totalorder %s22, 1
      %p103 = por %p101, %p102
      %p104 = scmp.ne.s32.totalorder %s93, %s94
      %p105 = scmp.eq.s32.totalorder %s22, 0
      %p106 = por %p104, %p105
      %p107 = scmp.ne.s32.totalorder %s93, %s94
      %p108 = scmp.eq.s32.totalorder %s23, 1
      %p109 = por %p107, %p108
      %p111 = scmp.ne.s32.totalorder %s94, %s110
      %p112 = scmp.eq.s32.totalorder %s23, 0
      %p113 = por %p111, %p112
      %s115 = sadd.s32 %s114, 1
      %p118 = scmp.eq.s32.totalorder %s17, 1
      %p119 = scmp.ne.s32.totalorder %s114, %s116
      %p120 = scmp.eq.s32.totalorder %s17, 0
      %p121 = por %p119, %p120
      %p122 = scmp.ne.s32.totalorder %s114, %s116
      %p123 = scmp.eq.s32.totalorder %s22, 1
      %p124 = por %p122, %p123
      %p125 = scmp.ne.s32.totalorder %s116, %s117
      %p126 = scmp.eq.s32.totalorder %s22, 0
      %p127 = por %p125, %p126
      %p128 = scmp.ne.s32.totalorder %s116, %s117
      %p129 = scmp.eq.s32.totalorder %s23, 1
      %p130 = por %p128, %p129
      %p132 = scmp.ne.s32.totalorder %s117, %s131
      %p133 = scmp.eq.s32.totalorder %s23, 0
      %p134 = por %p132, %p133
      %s135 = ssub.s32 %s17, %s24
      %p136 = scmp.eq.s32.totalorder %s135, 0
      %s138 = sadd.s32 %s137, 1
      %s139 = scalar_select %p136, %s137, %s138
      %p142 = pneg %p136
      %p143 = scmp.eq.s32.totalorder %s17, 1
      %p144 = por %p142, %p143
      %p145 = scmp.ne.s32.totalorder %s137, %s140
      %p146 = scmp.eq.s32.totalorder %s17, 0
      %p147 = por %p145, %p146
      %p148 = scmp.ne.s32.totalorder %s137, %s140
      %p149 = scmp.eq.s32.totalorder %s22, 1
      %p150 = por %p148, %p149
      %p151 = scmp.ne.s32.totalorder %s140, %s141
      %p152 = scmp.eq.s32.totalorder %s22, 0
      %p153 = por %p151, %p152
      %p154 = scmp.ne.s32.totalorder %s140, %s141
      %p155 = scmp.eq.s32.totalorder %s23, 1
      %p156 = por %p154, %p155
      %p158 = scmp.ne.s32.totalorder %s141, %s157
      %p159 = scmp.eq.s32.totalorder %s23, 0
      %p160 = por %p158, %p159
      %s162 = sadd.s32 %s161, 1
      %p165 = scmp.eq.s32.totalorder %s17, 1
      %p166 = scmp.ne.s32.totalorder %s161, %s163
      %p167 = scmp.eq.s32.totalorder %s17, 0
      %p168 = por %p166, %p167
      %p169 = scmp.ne.s32.totalorder %s161, %s163
      %p170 = scmp.eq.s32.totalorder %s22, 1
      %p171 = por %p169, %p170
      %p172 = scmp.ne.s32.totalorder %s163, %s164
      %p173 = scmp.eq.s32.totalorder %s22, 0
      %p174 = por %p172, %p173
      %p175 = scmp.ne.s32.totalorder %s163, %s164
      %p176 = scmp.eq.s32.totalorder %s23, 1
      %p177 = por %p175, %p176
      %p179 = scmp.ne.s32.totalorder %s164, %s178
      %p180 = scmp.eq.s32.totalorder %s23, 0
      %p181 = por %p179, %p180
      %s183 = sadd.s32 %s182, 1
      %p186 = scmp.eq.s32.totalorder %s17, 1
      %p187 = scmp.ne.s32.totalorder %s182, %s184
      %p188 = scmp.eq.s32.totalorder %s17, 0
      %p189 = por %p187, %p188
      %p190 = scmp.ne.s32.totalorder %s182, %s184
      %p191 = scmp.eq.s32.totalorder %s22, 1
      %p192 = por %p190, %p191
      %p193 = scmp.ne.s32.totalorder %s184, %s185
      %p194 = scmp.eq.s32.totalorder %s22, 0
      %p195 = por %p193, %p194
      %p196 = scmp.ne.s32.totalorder %s184, %s185
      %p197 = scmp.eq.s32.totalorder %s23, 1
      %p198 = por %p196, %p197
      %p200 = scmp.ne.s32.totalorder %s185, %s199
      %p201 = scmp.eq.s32.totalorder %s23, 0
      %p202 = por %p200, %p201
      %s203 = ssub.s32 %s17, %s24
      %p204 = scmp.eq.s32.totalorder %s203, 0
      %s206 = sadd.s32 %s205, 1
      %s207 = scalar_select %p204, %s205, %s206
      %p210 = pneg %p204
      %p211 = scmp.eq.s32.totalorder %s17, 1
      %p212 = por %p210, %p211
      %p213 = scmp.ne.s32.totalorder %s205, %s208
      %p214 = scmp.eq.s32.totalorder %s17, 0
      %p215 = por %p213, %p214
      %p216 = scmp.ne.s32.totalorder %s205, %s208
      %p217 = scmp.eq.s32.totalorder %s22, 1
      %p218 = por %p216, %p217
      %p219 = scmp.ne.s32.totalorder %s208, %s209
      %p220 = scmp.eq.s32.totalorder %s22, 0
      %p221 = por %p219, %p220
      %p222 = scmp.ne.s32.totalorder %s208, %s209
      %p223 = scmp.eq.s32.totalorder %s23, 1
      %p224 = por %p222, %p223
      %p226 = scmp.ne.s32.totalorder %s209, %s225
      %p227 = scmp.eq.s32.totalorder %s23, 0
      %p228 = por %p226, %p227
      %p229 = scmp.le.s32.totalorder 1, %s17
      %p230 = scmp.lt.s32.totalorder %s17, 3
      %p231 = pnand %p229, %p230
      %p232 = pneg %p231
      // Predicated region
      $region9: #{tpu_custom_call.1} parent=5 // pred_check
        _
      $region10: #{tpu_custom_call.1} parent=5 // pred_check_branch
        %234 = sbr.rel (%p231) target = $region12
      $region11: #{tpu_custom_call.1} parent=5 // pred_region
        %s235 = ssub.s32 %s17, 1
        // Predicated region
        $region13: #{tpu_custom_call.1} parent=11 // pred_check
          %p236 = pneg %p38
        $region14: #{tpu_custom_call.1} parent=11 // pred_check_branch
          %238 = sbr.rel (%p236) target = $region16
        $region15: #{tpu_custom_call.1} parent=11 // pred_region
          _
        $region16: #{tpu_custom_call.1} parent=11 // pred_fallthru
          _
        // Predicated region
        $region17: #{tpu_custom_call.1} parent=11 // pred_check
          %p239 = pneg %p59
        $region18: #{tpu_custom_call.1} parent=11 // pred_check_branch
          %241 = sbr.rel (%p239) target = $region20
        $region19: #{tpu_custom_call.1} parent=11 // pred_region
          _
        $region20: #{tpu_custom_call.1} parent=11 // pred_fallthru
          _
        // Predicated region
        $region21: #{tpu_custom_call.1} parent=11 // pred_check
          %p242 = pneg %p80
        $region22: #{tpu_custom_call.1} parent=11 // pred_check_branch
          %244 = sbr.rel (%p242) target = $region24
        $region23: #{tpu_custom_call.1} parent=11 // pred_region
          _
        $region24: #{tpu_custom_call.1} parent=11 // pred_fallthru
          _
        // Predicated region
        $region25: #{tpu_custom_call.1} parent=11 // pred_check
          %p245 = pneg %p127
        $region26: #{tpu_custom_call.1} parent=11 // pred_check_branch
          %247 = sbr.rel (%p245) target = $region28
        $region27: #{tpu_custom_call.1} parent=11 // pred_region
          _
        $region28: #{tpu_custom_call.1} parent=11 // pred_fallthru
          _
        // Predicated region
        $region29: #{tpu_custom_call.1} parent=11 // pred_check
          %p248 = pneg %p174
        $region30: #{tpu_custom_call.1} parent=11 // pred_check_branch
          %250 = sbr.rel (%p248) target = $region32
        $region31: #{tpu_custom_call.1} parent=11 // pred_region
          _
        $region32: #{tpu_custom_call.1} parent=11 // pred_fallthru
          _
        // Predicated region
        $region33: #{tpu_custom_call.1} parent=11 // pred_check
          %p251 = pneg %p195
        $region34: #{tpu_custom_call.1} parent=11 // pred_check_branch
          %253 = sbr.rel (%p251) target = $region36
        $region35: #{tpu_custom_call.1} parent=11 // pred_region
          _
        $region36: #{tpu_custom_call.1} parent=11 // pred_fallthru
          _
      $region12: #{tpu_custom_call.1} parent=5 // pred_fallthru
        _
      %p254 = scmp.lt.s32.totalorder %s17, 2
      // Predicated region
      $region37: #{tpu_custom_call.1} parent=5 // pred_check
        %p255 = pneg %p254
      $region38: #{tpu_custom_call.1} parent=5 // pred_check_branch
        %257 = sbr.rel (%p255) target = $region40
      $region39: #{tpu_custom_call.1} parent=5 // pred_region
        // Predicated region
        $region41: #{tpu_custom_call.1} parent=39 // pred_check
          %p258 = pneg %p100
        $region42: #{tpu_custom_call.1} parent=39 // pred_check_branch
          %260 = sbr.rel (%p258) target = $region44
        $region43: #{tpu_custom_call.1} parent=39 // pred_region
          %p261 = scmp.lt.s32.totalorder %s17, 1
          %s262 = scalar_select %p261, %s17, 1
          %s263 = smul.addr %s262, 4
          %s264 = smul.addr %s263, 4
          %s265 = scalar_lea.vmem %s3, %s264
        $region44: #{tpu_custom_call.1} parent=39 // pred_fallthru
          _
        // Predicated region
        $region45: #{tpu_custom_call.1} parent=39 // pred_check
          %p266 = pneg %p147
        $region46: #{tpu_custom_call.1} parent=39 // pred_check_branch
          %268 = sbr.rel (%p266) target = $region48
        $region47: #{tpu_custom_call.1} parent=39 // pred_region
          %p269 = scmp.lt.s32.totalorder %s17, 1
          %s270 = scalar_select %p269, %s17, 1
          %s271 = smul.addr %s270, 2
          %s272 = smul.addr %s271, 8
          %s273 = scalar_lea.vmem %s5, %s272
        $region48: #{tpu_custom_call.1} parent=39 // pred_fallthru
          _
      $region40: #{tpu_custom_call.1} parent=5 // pred_fallthru
        _
      %p274 = scmp.le.s32.totalorder 1, %s17
      %p275 = scmp.lt.s32.totalorder %s17, 3
      %p276 = pnand %p274, %p275
      %p277 = pneg %p276
      // Predicated region
      $region49: #{tpu_custom_call.1} parent=5 // pred_check
        _
      $region50: #{tpu_custom_call.1} parent=5 // pred_check_branch
        %279 = sbr.rel (%p276) target = $region52
      $region51: #{tpu_custom_call.1} parent=5 // pred_region
        %s280 = ssub.s32 %s17, 1
        %p281 = pneg %p38
        %p282 = pneg %p35
        %p283 = pneg %p59
        %p284 = pneg %p56
        %p285 = pneg %p80
        %p286 = pneg %p77
        %p287 = scmp.lt.s32.totalorder %s22, 1
        %s288 = scalar_select %p287, %s22, 1
        %s289 = smul.addr %s288, 4
        %s290 = smul.addr %s289, 4
        %s291 = scalar_lea.vmem %s3, %s290
        %p292 = pneg %p106
        %p293 = pneg %p103
        %p294 = pneg %p127
        %p295 = pneg %p124
        %p296 = scmp.lt.s32.totalorder %s22, 1
        %s297 = scalar_select %p296, %s22, 1
        %s298 = smul.addr %s297, 2
        %s299 = smul.addr %s298, 8
        %s300 = scalar_lea.vmem %s5, %s299
        %p301 = pneg %p153
        %p302 = pneg %p150
        %p303 = pneg %p174
        %p304 = pneg %p171
        %p305 = pneg %p195
        %p306 = pneg %p192
        %p307 = pneg %p221
        %p308 = pneg %p218
        %s309 = sand.u32 %s208, 1
        %s310 = scalar_lea.sflag [#allocation3], %s309
        %s311 = sand.u32 %s208, 1
        %s312 = smul.addr %s311, 2
        %s313 = scalar_lea.vmem [#allocation2], %s312
        %p314 = scmp.lt.s32.totalorder %s22, 1
        %s315 = scalar_select %p314, %s22, 1
        %s316 = smul.addr %s315, 4
        %s317 = smul.addr %s316, 4
        %s318 = scalar_lea.vmem %s3, %s317
        %p319 = scmp.lt.s32.totalorder %s22, 1
        %s320 = scalar_select %p319, %s22, 1
        %s321 = smul.addr %s320, 2
        %s322 = smul.addr %s321, 8
        %s323 = scalar_lea.vmem %s5, %s322
        %v325 = vld [vmem:[%s0] sm:$0xf]
        %v326 = vld [vmem:[%s0 + $0x4] sm:$0xf]
        %v327 = vld [vmem:[%s0 + $0x8] sm:$0xf]
        %v328 = vld [vmem:[%s0 + $0xc] sm:$0xf]
        %v329 = vld [vmem:[%s0 + $0x10] sm:$0xf]
        %v330 = vld [vmem:[%s0 + $0x14] sm:$0xf]
        %v331 = vld [vmem:[%s0 + $0x18] sm:$0xf]
        %v332 = vld [vmem:[%s0 + $0x1c] sm:$0xf]
        %v333 = vld [vmem:[%s0 + $0x20] sm:$0xf]
        %v334 = vld [vmem:[%s0 + $0x24] sm:$0xf]
        %v335 = vld [vmem:[%s0 + $0x28] sm:$0xf]
        %v336 = vld [vmem:[%s0 + $0x2c] sm:$0xf]
        %v337 = vld [vmem:[%s0 + $0x30] sm:$0xf]
        %v338 = vld [vmem:[%s0 + $0x34] sm:$0xf]
        %v339 = vld [vmem:[%s0 + $0x38] sm:$0xf]
        %v340 = vld [vmem:[%s0 + $0x3c] sm:$0xf]
        %v341 = vld [vmem:[%s0 + $0x40] sm:$0xf]
        %v342 = vld [vmem:[%s0 + $0x44] sm:$0xf]
        %v343 = vld [vmem:[%s0 + $0x48] sm:$0xf]
        %v344 = vld [vmem:[%s0 + $0x4c] sm:$0xf]
        %v345 = vld [vmem:[%s0 + $0x50] sm:$0xf]
        %v346 = vld [vmem:[%s0 + $0x54] sm:$0xf]
        %v347 = vld [vmem:[%s0 + $0x58] sm:$0xf]
        %v348 = vld [vmem:[%s0 + $0x5c] sm:$0xf]
        %v349 = vld [vmem:[%s1] sm:$0xf]
        %v350 = vld [vmem:[%s1 + $0x4] sm:$0xf]
        %v351 = vld [vmem:[%s1 + $0x8] sm:$0xf]
        %v352 = vld [vmem:[%s2] sm:$0x1]
        %v354 = vperm.slane %v352, 0
        %v380 = vunpack.c.l.b16 %v325
        %v381 = vunpack.c.l.b16 %v326
        %v382 = vunpack.c.l.b16 %v327
        %v383 = vunpack.c.l.b16 %v328
        %v384 = vunpack.c.l.b16 %v329
        %v385 = vunpack.c.l.b16 %v330
        %v386 = vunpack.c.l.b16 %v331
        %v387 = vunpack.c.l.b16 %v332
        %v388 = vunpack.c.l.b16 %v333
        %v389 = vunpack.c.l.b16 %v334
        %v390 = vunpack.c.l.b16 %v335
        %v391 = vunpack.c.l.b16 %v336
        %v392 = vunpack.c.l.b16 %v337
        %v393 = vunpack.c.l.b16 %v338
        %v394 = vunpack.c.l.b16 %v339
        %v395 = vunpack.c.l.b16 %v340
        %v396 = vunpack.c.l.b16 %v341
        %v397 = vunpack.c.l.b16 %v342
        %v398 = vunpack.c.l.b16 %v343
        %v399 = vunpack.c.l.b16 %v344
        %v400 = vunpack.c.l.b16 %v345
        %v401 = vunpack.c.l.b16 %v346
        %v402 = vunpack.c.l.b16 %v347
        %v403 = vunpack.c.l.b16 %v348
        %v404 = vpack.c.b16 %v381, %v380
        %v405 = vpack.c.b16 %v383, %v382
        %v406 = vpack.c.b16 %v385, %v384
        %v407 = vpack.c.b16 %v387, %v386
        %v408 = vpack.c.b16 %v389, %v388
        %v409 = vpack.c.b16 %v391, %v390
        %v410 = vpack.c.b16 %v393, %v392
        %v411 = vpack.c.b16 %v395, %v394
        %v412 = vpack.c.b16 %v397, %v396
        %v413 = vpack.c.b16 %v399, %v398
        %v414 = vpack.c.b16 %v401, %v400
        %v415 = vpack.c.b16 %v403, %v402
        %v419 = vunpack.c.l.b16 %v349
        %v420 = vunpack.c.l.b16 %v350
        %v421 = vunpack.c.l.b16 %v351
        %v422 = vpack.c.b16 %v420, %v419
        %v423 = vpack.c.b16 %v421, %v421
        %vm425 = vcmask 195584
        %v427 = vsel %vm425, %v404, 0
        %v430 = vsel %vm425, %v405, 0
        %v433 = vsel %vm425, %v406, 0
        %v436 = vsel %vm425, %v407, 0
        %v439 = vsel %vm425, %v408, 0
        %v442 = vsel %vm425, %v409, 0
        %v445 = vsel %vm425, %v410, 0
        %v448 = vsel %vm425, %v411, 0
        %v451 = vsel %vm425, %v412, 0
        %v454 = vsel %vm425, %v413, 0
        %v457 = vsel %vm425, %v414, 0
        %v460 = vsel %vm425, %v415, 0
        %vm462 = vcmask 1043456
        %v464 = vsel %vm462, %v423, 0
        %466 = vmatpush.bf16.msra.mxu0 0
        %467 = vmatpush.bf16.msra.mxu0 0
        %468 = vmatpush.bf16.msra.mxu0 0
        %469 = vmatpush.bf16.msra.mxu0 0
        %470 = vmatpush.bf16.msra.mxu0 0
        %471 = vmatpush.bf16.msra.mxu0 0
        %472 = vmatpush.bf16.msra.mxu0 %v464
        %473 = vmatpush.bf16.msra.mxu0 %v422
        %474 = vmatmul.bf16.gmra.mxu0 %v427
        %v475 = vpop.f32.mrf.mxu0
        %v476 = vadd.f32 %v354, %v475
        %v477 = vpop.f32.mrf.mxu0
        %v478 = vadd.f32 %v354, %v477
        %479 = vmatmul.bf16.gmra.mxu0 %v430
        %v480 = vpop.f32.mrf.mxu0
        %v481 = vadd.f32 %v354, %v480
        %v482 = vpop.f32.mrf.mxu0
        %v483 = vadd.f32 %v354, %v482
        %484 = vmatmul.bf16.gmra.mxu0 %v433
        %v485 = vpop.f32.mrf.mxu0
        %v486 = vadd.f32 %v354, %v485
        %v487 = vpop.f32.mrf.mxu0
        %v488 = vadd.f32 %v354, %v487
        %489 = vmatmul.bf16.gmra.mxu0 %v436
        %v490 = vpop.f32.mrf.mxu0
        %v491 = vadd.f32 %v354, %v490
        %v492 = vpop.f32.mrf.mxu0
        %v493 = vadd.f32 %v354, %v492
        %494 = vmatmul.bf16.gmra.mxu0 %v439
        %v495 = vpop.f32.mrf.mxu0
        %v496 = vadd.f32 %v354, %v495
        %v497 = vpop.f32.mrf.mxu0
        %v498 = vadd.f32 %v354, %v497
        %499 = vmatmul.bf16.gmra.mxu0 %v442
        %v500 = vpop.f32.mrf.mxu0
        %v501 = vadd.f32 %v354, %v500
        %v502 = vpop.f32.mrf.mxu0
        %v503 = vadd.f32 %v354, %v502
        %504 = vmatmul.bf16.gmra.mxu0 %v445
        %v505 = vpop.f32.mrf.mxu0
        %v506 = vadd.f32 %v354, %v505
        %v507 = vpop.f32.mrf.mxu0
        %v508 = vadd.f32 %v354, %v507
        %509 = vmatmul.bf16.gmra.mxu0 %v448
        %v510 = vpop.f32.mrf.mxu0
        %v511 = vadd.f32 %v354, %v510
        %v512 = vpop.f32.mrf.mxu0
        %v513 = vadd.f32 %v354, %v512
        %514 = vmatmul.bf16.gmra.mxu0 %v451
        %v515 = vpop.f32.mrf.mxu0
        %v516 = vadd.f32 %v354, %v515
        %v517 = vpop.f32.mrf.mxu0
        %v518 = vadd.f32 %v354, %v517
        %519 = vmatmul.bf16.gmra.mxu0 %v454
        %v520 = vpop.f32.mrf.mxu0
        %v521 = vadd.f32 %v354, %v520
        %v522 = vpop.f32.mrf.mxu0
        %v523 = vadd.f32 %v354, %v522
        %524 = vmatmul.bf16.gmra.mxu0 %v457
        %v525 = vpop.f32.mrf.mxu0
        %v526 = vadd.f32 %v354, %v525
        %v527 = vpop.f32.mrf.mxu0
        %v528 = vadd.f32 %v354, %v527
        %529 = vmatmul.bf16.gmra.mxu0 %v460
        %v530 = vpop.f32.mrf.mxu0
        %v531 = vadd.f32 %v354, %v530
        %v532 = vpop.f32.mrf.mxu0
        %v533 = vadd.f32 %v354, %v532
        %534 = vdwg.mxu0
        %v535 = vmax.f32 %v476, 0.0
        %v536 = vmax.f32 %v478, 0.0
        %v537 = vmax.f32 %v481, 0.0
        %v538 = vmax.f32 %v483, 0.0
        %v539 = vmax.f32 %v486, 0.0
        %v540 = vmax.f32 %v488, 0.0
        %v541 = vmax.f32 %v491, 0.0
        %v542 = vmax.f32 %v493, 0.0
        %v543 = vmax.f32 %v496, 0.0
        %v544 = vmax.f32 %v498, 0.0
        %v545 = vmax.f32 %v501, 0.0
        %v546 = vmax.f32 %v503, 0.0
        %v547 = vmax.f32 %v506, 0.0
        %v548 = vmax.f32 %v508, 0.0
        %v549 = vmax.f32 %v511, 0.0
        %v550 = vmax.f32 %v513, 0.0
        %v551 = vmax.f32 %v516, 0.0
        %v552 = vmax.f32 %v518, 0.0
        %v553 = vmax.f32 %v521, 0.0
        %v554 = vmax.f32 %v523, 0.0
        %v555 = vmax.f32 %v526, 0.0
        %v556 = vmax.f32 %v528, 0.0
        %v557 = vmax.f32 %v531, 0.0
        %v558 = vmax.f32 %v533, 0.0
        %v559 = vpack.c.bf16 %v536, %v535
        %v560 = vpack.c.bf16 %v538, %v537
        %v561 = vpack.c.bf16 %v540, %v539
        %v562 = vpack.c.bf16 %v542, %v541
        %v563 = vpack.c.bf16 %v544, %v543
        %v564 = vpack.c.bf16 %v546, %v545
        %v565 = vpack.c.bf16 %v548, %v547
        %v566 = vpack.c.bf16 %v550, %v549
        %v567 = vpack.c.bf16 %v552, %v551
        %v568 = vpack.c.bf16 %v554, %v553
        %v569 = vpack.c.bf16 %v556, %v555
        %v570 = vpack.c.bf16 %v558, %v557
        %v571 = vld [vmem:[%s318] sm:$0xf]
        %v572 = vld [vmem:[%s318 + $0x4] sm:$0xf]
        %v573 = vld [vmem:[%s318 + $0x8] sm:$0xf]
        %v574 = vld [vmem:[%s318 + $0xc] sm:$0xf]
        %v579 = vunpack.c.l.b16 %v571
        %v580 = vunpack.c.l.b16 %v572
        %v581 = vunpack.c.l.b16 %v573
        %v582 = vunpack.c.l.b16 %v574
        %v583 = vpack.c.b16 %v580, %v579
        %v584 = vpack.c.b16 %v582, %v581
        %vm587 = vcmask 261120
        %v589 = vsel %vm587, %v559, 0
        %v592 = vsel %vm587, %v560, 0
        %v595 = vsel %vm587, %v561, 0
        %v598 = vsel %vm587, %v562, 0
        %v601 = vsel %vm587, %v563, 0
        %v604 = vsel %vm587, %v564, 0
        %v607 = vsel %vm587, %v565, 0
        %v610 = vsel %vm587, %v566, 0
        %v613 = vsel %vm587, %v567, 0
        %v616 = vsel %vm587, %v568, 0
        %v619 = vsel %vm587, %v569, 0
        %v622 = vsel %vm587, %v570, 0
        %624 = vmatpush.bf16.msra.mxu0 0
        %625 = vmatpush.bf16.msra.mxu0 0
        %626 = vmatpush.bf16.msra.mxu0 0
        %627 = vmatpush.bf16.msra.mxu0 0
        %628 = vmatpush.bf16.msra.mxu0 0
        %629 = vmatpush.bf16.msra.mxu0 0
        %630 = vmatpush.bf16.msra.mxu0 %v584
        %631 = vmatpush.bf16.msra.mxu0 %v583
        %632 = vmatmul.bf16.gmra.mxu0 %v589
        %v633 = vpop.f32.mrf.mxu0
        %v634 = vadd.f32 0.0, %v633
        %v635 = vpop.f32.mrf.mxu0
        %v636 = vadd.f32 0.0, %v635
        %637 = vmatmul.bf16.gmra.mxu0 %v592
        %v638 = vpop.f32.mrf.mxu0
        %v639 = vadd.f32 0.0, %v638
        %v640 = vpop.f32.mrf.mxu0
        %v641 = vadd.f32 0.0, %v640
        %642 = vmatmul.bf16.gmra.mxu0 %v595
        %v643 = vpop.f32.mrf.mxu0
        %v644 = vadd.f32 0.0, %v643
        %v645 = vpop.f32.mrf.mxu0
        %v646 = vadd.f32 0.0, %v645
        %647 = vmatmul.bf16.gmra.mxu0 %v598
        %v648 = vpop.f32.mrf.mxu0
        %v649 = vadd.f32 0.0, %v648
        %v650 = vpop.f32.mrf.mxu0
        %v651 = vadd.f32 0.0, %v650
        %652 = vmatmul.bf16.gmra.mxu0 %v601
        %v653 = vpop.f32.mrf.mxu0
        %v654 = vadd.f32 0.0, %v653
        %v655 = vpop.f32.mrf.mxu0
        %v656 = vadd.f32 0.0, %v655
        %657 = vmatmul.bf16.gmra.mxu0 %v604
        %v658 = vpop.f32.mrf.mxu0
        %v659 = vadd.f32 0.0, %v658
        %v660 = vpop.f32.mrf.mxu0
        %v661 = vadd.f32 0.0, %v660
        %662 = vmatmul.bf16.gmra.mxu0 %v607
        %v663 = vpop.f32.mrf.mxu0
        %v664 = vadd.f32 0.0, %v663
        %v665 = vpop.f32.mrf.mxu0
        %v666 = vadd.f32 0.0, %v665
        %667 = vmatmul.bf16.gmra.mxu0 %v610
        %v668 = vpop.f32.mrf.mxu0
        %v669 = vadd.f32 0.0, %v668
        %v670 = vpop.f32.mrf.mxu0
        %v671 = vadd.f32 0.0, %v670
        %672 = vmatmul.bf16.gmra.mxu0 %v613
        %v673 = vpop.f32.mrf.mxu0
        %v674 = vadd.f32 0.0, %v673
        %v675 = vpop.f32.mrf.mxu0
        %v676 = vadd.f32 0.0, %v675
        %677 = vmatmul.bf16.gmra.mxu0 %v616
        %v678 = vpop.f32.mrf.mxu0
        %v679 = vadd.f32 0.0, %v678
        %v680 = vpop.f32.mrf.mxu0
        %v681 = vadd.f32 0.0, %v680
        %682 = vmatmul.bf16.gmra.mxu0 %v619
        %v683 = vpop.f32.mrf.mxu0
        %v684 = vadd.f32 0.0, %v683
        %v685 = vpop.f32.mrf.mxu0
        %v686 = vadd.f32 0.0, %v685
        %687 = vmatmul.bf16.gmra.mxu0 %v622
        %v688 = vpop.f32.mrf.mxu0
        %v689 = vadd.f32 0.0, %v688
        %v690 = vpop.f32.mrf.mxu0
        %v691 = vadd.f32 0.0, %v690
        %692 = vdwg.mxu0
        %693 = vxpose.xlu0.b32.start [1/16] %v634, 128
        %694 = vxpose.xlu0.b32.cont [2/16] %v636, 128
        %695 = vxpose.xlu0.b32.cont [3/16] %v639, 128
        %696 = vxpose.xlu0.b32.cont [4/16] %v641, 128
        %697 = vxpose.xlu0.b32.cont [5/16] 0.0, 128
        %698 = vxpose.xlu0.b32.cont [6/16] 0.0, 128
        %699 = vxpose.xlu0.b32.cont [7/16] 0.0, 128
        %700 = vxpose.xlu0.b32.cont [8/16] 0.0, 128
        %701 = vxpose.xlu0.b32.cont [9/16] 0.0, 128
        %702 = vxpose.xlu0.b32.cont [10/16] 0.0, 128
        %703 = vxpose.xlu0.b32.cont [11/16] 0.0, 128
        %704 = vxpose.xlu0.b32.cont [12/16] 0.0, 128
        %705 = vxpose.xlu0.b32.cont [13/16] 0.0, 128
        %706 = vxpose.xlu0.b32.cont [14/16] 0.0, 128
        %707 = vxpose.xlu0.b32.cont [15/16] 0.0, 128
        %708 = vxpose.xlu0.b32.end [16/16] 0.0, 128
        %v709 = vpop.trf.xlu0
        %v710 = vpop.trf.xlu0
        %v711 = vpop.trf.xlu0
        %v712 = vpop.trf.xlu0
        %v713 = vpop.trf.xlu0
        %v714 = vpop.trf.xlu0
        %v715 = vpop.trf.xlu0
        %v716 = vpop.trf.xlu0
        %v717 = vpop.trf.xlu0
        %v718 = vpop.trf.xlu0
        %v719 = vpop.trf.xlu0
        %v720 = vpop.trf.xlu0
        %v721 = vpop.trf.xlu0
        %v722 = vpop.trf.xlu0
        %v723 = vpop.trf.xlu0
        %v724 = vpop.trf.xlu0
        %725 = vxpose.xlu0.b32.start [1/16] %v644, 128
        %726 = vxpose.xlu0.b32.cont [2/16] %v646, 128
        %727 = vxpose.xlu0.b32.cont [3/16] %v649, 128
        %728 = vxpose.xlu0.b32.cont [4/16] %v651, 128
        %729 = vxpose.xlu0.b32.cont [5/16] 0.0, 128
        %730 = vxpose.xlu0.b32.cont [6/16] 0.0, 128
        %731 = vxpose.xlu0.b32.cont [7/16] 0.0, 128
        %732 = vxpose.xlu0.b32.cont [8/16] 0.0, 128
        %733 = vxpose.xlu0.b32.cont [9/16] 0.0, 128
        %734 = vxpose.xlu0.b32.cont [10/16] 0.0, 128
        %735 = vxpose.xlu0.b32.cont [11/16] 0.0, 128
        %736 = vxpose.xlu0.b32.cont [12/16] 0.0, 128
        %737 = vxpose.xlu0.b32.cont [13/16] 0.0, 128
        %738 = vxpose.xlu0.b32.cont [14/16] 0.0, 128
        %739 = vxpose.xlu0.b32.cont [15/16] 0.0, 128
        %740 = vxpose.xlu0.b32.end [16/16] 0.0, 128
        %v741 = vpop.trf.xlu0
        %v742 = vpop.trf.xlu0
        %v743 = vpop.trf.xlu0
        %v744 = vpop.trf.xlu0
        %v745 = vpop.trf.xlu0
        %v746 = vpop.trf.xlu0
        %v747 = vpop.trf.xlu0
        %v748 = vpop.trf.xlu0
        %v749 = vpop.trf.xlu0
        %v750 = vpop.trf.xlu0
        %v751 = vpop.trf.xlu0
        %v752 = vpop.trf.xlu0
        %v753 = vpop.trf.xlu0
        %v754 = vpop.trf.xlu0
        %v755 = vpop.trf.xlu0
        %v756 = vpop.trf.xlu0
        %757 = vxpose.xlu0.b32.start [1/16] %v654, 128
        %758 = vxpose.xlu0.b32.cont [2/16] %v656, 128
        %759 = vxpose.xlu0.b32.cont [3/16] %v659, 128
        %760 = vxpose.xlu0.b32.cont [4/16] %v661, 128
        %761 = vxpose.xlu0.b32.cont [5/16] 0.0, 128
        %762 = vxpose.xlu0.b32.cont [6/16] 0.0, 128
        %763 = vxpose.xlu0.b32.cont [7/16] 0.0, 128
        %764 = vxpose.xlu0.b32.cont [8/16] 0.0, 128
        %765 = vxpose.xlu0.b32.cont [9/16] 0.0, 128
        %766 = vxpose.xlu0.b32.cont [10/16] 0.0, 128
        %767 = vxpose.xlu0.b32.cont [11/16] 0.0, 128
        %768 = vxpose.xlu0.b32.cont [12/16] 0.0, 128
        %769 = vxpose.xlu0.b32.cont [13/16] 0.0, 128
        %770 = vxpose.xlu0.b32.cont [14/16] 0.0, 128
        %771 = vxpose.xlu0.b32.cont [15/16] 0.0, 128
        %772 = vxpose.xlu0.b32.end [16/16] 0.0, 128
        %v773 = vpop.trf.xlu0
        %v774 = vpop.trf.xlu0
        %v775 = vpop.trf.xlu0
        %v776 = vpop.trf.xlu0
        %v777 = vpop.trf.xlu0
        %v778 = vpop.trf.xlu0
        %v779 = vpop.trf.xlu0
        %v780 = vpop.trf.xlu0
        %v781 = vpop.trf.xlu0
        %v782 = vpop.trf.xlu0
        %v783 = vpop.trf.xlu0
        %v784 = vpop.trf.xlu0
        %v785 = vpop.trf.xlu0
        %v786 = vpop.trf.xlu0
        %v787 = vpop.trf.xlu0
        %v788 = vpop.trf.xlu0
        %789 = vxpose.xlu0.b32.start [1/16] %v664, 128
        %790 = vxpose.xlu0.b32.cont [2/16] %v666, 128
        %791 = vxpose.xlu0.b32.cont [3/16] %v669, 128
        %792 = vxpose.xlu0.b32.cont [4/16] %v671, 128
        %793 = vxpose.xlu0.b32.cont [5/16] 0.0, 128
        %794 = vxpose.xlu0.b32.cont [6/16] 0.0, 128
        %795 = vxpose.xlu0.b32.cont [7/16] 0.0, 128
        %796 = vxpose.xlu0.b32.cont [8/16] 0.0, 128
        %797 = vxpose.xlu0.b32.cont [9/16] 0.0, 128
        %798 = vxpose.xlu0.b32.cont [10/16] 0.0, 128
        %799 = vxpose.xlu0.b32.cont [11/16] 0.0, 128
        %800 = vxpose.xlu0.b32.cont [12/16] 0.0, 128
        %801 = vxpose.xlu0.b32.cont [13/16] 0.0, 128
        %802 = vxpose.xlu0.b32.cont [14/16] 0.0, 128
        %803 = vxpose.xlu0.b32.cont [15/16] 0.0, 128
        %804 = vxpose.xlu0.b32.end [16/16] 0.0, 128
        %v805 = vpop.trf.xlu0
        %v806 = vpop.trf.xlu0
        %v807 = vpop.trf.xlu0
        %v808 = vpop.trf.xlu0
        %v809 = vpop.trf.xlu0
        %v810 = vpop.trf.xlu0
        %v811 = vpop.trf.xlu0
        %v812 = vpop.trf.xlu0
        %v813 = vpop.trf.xlu0
        %v814 = vpop.trf.xlu0
        %v815 = vpop.trf.xlu0
        %v816 = vpop.trf.xlu0
        %v817 = vpop.trf.xlu0
        %v818 = vpop.trf.xlu0
        %v819 = vpop.trf.xlu0
        %v820 = vpop.trf.xlu0
        %821 = vxpose.xlu0.b32.start [1/16] %v674, 128
        %822 = vxpose.xlu0.b32.cont [2/16] %v676, 128
        %823 = vxpose.xlu0.b32.cont [3/16] %v679, 128
        %824 = vxpose.xlu0.b32.cont [4/16] %v681, 128
        %825 = vxpose.xlu0.b32.cont [5/16] 0.0, 128
        %826 = vxpose.xlu0.b32.cont [6/16] 0.0, 128
        %827 = vxpose.xlu0.b32.cont [7/16] 0.0, 128
        %828 = vxpose.xlu0.b32.cont [8/16] 0.0, 128
        %829 = vxpose.xlu0.b32.cont [9/16] 0.0, 128
        %830 = vxpose.xlu0.b32.cont [10/16] 0.0, 128
        %831 = vxpose.xlu0.b32.cont [11/16] 0.0, 128
        %832 = vxpose.xlu0.b32.cont [12/16] 0.0, 128
        %833 = vxpose.xlu0.b32.cont [13/16] 0.0, 128
        %834 = vxpose.xlu0.b32.cont [14/16] 0.0, 128
        %835 = vxpose.xlu0.b32.cont [15/16] 0.0, 128
        %836 = vxpose.xlu0.b32.end [16/16] 0.0, 128
        %v837 = vpop.trf.xlu0
        %v838 = vpop.trf.xlu0
        %v839 = vpop.trf.xlu0
        %v840 = vpop.trf.xlu0
        %v841 = vpop.trf.xlu0
        %v842 = vpop.trf.xlu0
        %v843 = vpop.trf.xlu0
        %v844 = vpop.trf.xlu0
        %v845 = vpop.trf.xlu0
        %v846 = vpop.trf.xlu0
        %v847 = vpop.trf.xlu0
        %v848 = vpop.trf.xlu0
        %v849 = vpop.trf.xlu0
        %v850 = vpop.trf.xlu0
        %v851 = vpop.trf.xlu0
        %v852 = vpop.trf.xlu0
        %853 = vxpose.xlu0.b32.start [1/16] %v684, 128
        %854 = vxpose.xlu0.b32.cont [2/16] %v686, 128
        %855 = vxpose.xlu0.b32.cont [3/16] %v689, 128
        %856 = vxpose.xlu0.b32.cont [4/16] %v691, 128
        %857 = vxpose.xlu0.b32.cont [5/16] 0.0, 128
        %858 = vxpose.xlu0.b32.cont [6/16] 0.0, 128
        %859 = vxpose.xlu0.b32.cont [7/16] 0.0, 128
        %860 = vxpose.xlu0.b32.cont [8/16] 0.0, 128
        %861 = vxpose.xlu0.b32.cont [9/16] 0.0, 128
        %862 = vxpose.xlu0.b32.cont [10/16] 0.0, 128
        %863 = vxpose.xlu0.b32.cont [11/16] 0.0, 128
        %864 = vxpose.xlu0.b32.cont [12/16] 0.0, 128
        %865 = vxpose.xlu0.b32.cont [13/16] 0.0, 128
        %866 = vxpose.xlu0.b32.cont [14/16] 0.0, 128
        %867 = vxpose.xlu0.b32.cont [15/16] 0.0, 128
        %868 = vxpose.xlu0.b32.end [16/16] 0.0, 128
        %v869 = vpop.trf.xlu0
        %v870 = vpop.trf.xlu0
        %v871 = vpop.trf.xlu0
        %v872 = vpop.trf.xlu0
        %v873 = vpop.trf.xlu0
        %v874 = vpop.trf.xlu0
        %v875 = vpop.trf.xlu0
        %v876 = vpop.trf.xlu0
        %v877 = vpop.trf.xlu0
        %v878 = vpop.trf.xlu0
        %v879 = vpop.trf.xlu0
        %v880 = vpop.trf.xlu0
        %v881 = vpop.trf.xlu0
        %v882 = vpop.trf.xlu0
        %v883 = vpop.trf.xlu0
        %v884 = vpop.trf.xlu0
        %v885 = vrot.slane %v773, 4
        %vm886 = vcmask 1047556
        %v887 = vsel %vm886, %v885, %v709
        %v888 = vrot.slane %v709, 4
        %v889 = vsel %vm886, %v773, %v888
        %v891 = vunpack.c.l.s4 1983009808
        %v892 = vunpack.c.0.s8 %v891
        %v893 = vperm.slane %v887, %v892
        %v895 = vunpack.c.l.s4 1983009808
        %v896 = vunpack.c.0.s8 %v895
        %v897 = vperm.slane %v889, %v896
        %v898 = vrot.slane %v805, 4
        %v899 = vsel %vm886, %v898, %v741
        %v900 = vrot.slane %v741, 4
        %v901 = vsel %vm886, %v805, %v900
        %v903 = vunpack.c.l.s4 1983009808
        %v904 = vunpack.c.0.s8 %v903
        %v905 = vperm.slane %v899, %v904
        %v907 = vunpack.c.l.s4 1983009808
        %v908 = vunpack.c.0.s8 %v907
        %v909 = vperm.slane %v901, %v908
        %v910 = vrot.slane %v837, 4
        %v911 = vsel %vm886, 0.0, %v910
        %v913 = vunpack.c.l.s4 1983009808
        %v914 = vunpack.c.0.s8 %v913
        %v915 = vperm.slane %v837, %v914
        %v917 = vunpack.c.l.s4 1983009808
        %v918 = vunpack.c.0.s8 %v917
        %v919 = vperm.slane %v911, %v918
        %v920 = vrot.slane %v869, 4
        %v921 = vsel %vm886, 0.0, %v920
        %v923 = vunpack.c.l.s4 1983009808
        %v924 = vunpack.c.0.s8 %v923
        %v925 = vperm.slane %v869, %v924
        %v927 = vunpack.c.l.s4 1983009808
        %v928 = vunpack.c.0.s8 %v927
        %v929 = vperm.slane %v921, %v928
        %v930 = vrot.slane %v905, 4
        %v931 = vsel %vm886, %v930, %v893
        %v932 = vrot.slane %v893, 4
        %v933 = vsel %vm886, %v905, %v932
        %v935 = vunpack.c.l.s4 1934713408
        %v936 = vunpack.c.0.s8 %v935
        %v937 = vperm.slane %v931, %v936
        %v939 = vunpack.c.l.s4 1934713408
        %v940 = vunpack.c.0.s8 %v939
        %v941 = vperm.slane %v933, %v940
        %v942 = vrot.slane %v909, 4
        %v943 = vsel %vm886, %v942, %v897
        %v944 = vrot.slane %v897, 4
        %v945 = vsel %vm886, %v909, %v944
        %v947 = vunpack.c.l.s4 1934713408
        %v948 = vunpack.c.0.s8 %v947
        %v949 = vperm.slane %v943, %v948
        %v951 = vunpack.c.l.s4 1934713408
        %v952 = vunpack.c.0.s8 %v951
        %v953 = vperm.slane %v945, %v952
        %v954 = vrot.slane %v925, 4
        %v955 = vsel %vm886, %v954, %v915
        %v956 = vrot.slane %v915, 4
        %v957 = vsel %vm886, %v925, %v956
        %v959 = vunpack.c.l.s4 1934713408
        %v960 = vunpack.c.0.s8 %v959
        %v961 = vperm.slane %v955, %v960
        %v963 = vunpack.c.l.s4 1934713408
        %v964 = vunpack.c.0.s8 %v963
        %v965 = vperm.slane %v957, %v964
        %v966 = vrot.slane %v929, 4
        %v967 = vsel %vm886, %v966, %v919
        %v968 = vrot.slane %v919, 4
        %v969 = vsel %vm886, %v929, %v968
        %v971 = vunpack.c.l.s4 1934713408
        %v972 = vunpack.c.0.s8 %v971
        %v973 = vperm.slane %v967, %v972
        %v975 = vunpack.c.l.s4 1934713408
        %v976 = vunpack.c.0.s8 %v975
        %v977 = vperm.slane %v969, %v976
        %v978 = vrot.slane %v961, 4
        %v979 = vsel %vm886, %v978, %v937
        %v980 = vrot.slane %v937, 4
        %v981 = vsel %vm886, %v961, %v980
        %v982 = vrot.slane %v965, 4
        %v983 = vsel %vm886, %v982, %v941
        %v984 = vrot.slane %v941, 4
        %v985 = vsel %vm886, %v965, %v984
        %v986 = vrot.slane %v973, 4
        %v987 = vsel %vm886, %v986, %v949
        %v988 = vrot.slane %v949, 4
        %v989 = vsel %vm886, %v973, %v988
        %v990 = vrot.slane %v977, 4
        %v991 = vsel %vm886, %v990, %v953
        %v992 = vrot.slane %v953, 4
        %v993 = vsel %vm886, %v977, %v992
        %v994 = vrot.slane %v774, 4
        %v995 = vsel %vm886, %v994, %v710
        %v996 = vrot.slane %v710, 4
        %v997 = vsel %vm886, %v774, %v996
        %v999 = vunpack.c.l.s4 1983009808
        %v1000 = vunpack.c.0.s8 %v999
        %v1001 = vperm.slane %v995, %v1000
        %v1003 = vunpack.c.l.s4 1983009808
        %v1004 = vunpack.c.0.s8 %v1003
        %v1005 = vperm.slane %v997, %v1004
        %v1006 = vrot.slane %v806, 4
        %v1007 = vsel %vm886, %v1006, %v742
        %v1008 = vrot.slane %v742, 4
        %v1009 = vsel %vm886, %v806, %v1008
        %v1011 = vunpack.c.l.s4 1983009808
        %v1012 = vunpack.c.0.s8 %v1011
        %v1013 = vperm.slane %v1007, %v1012
        %v1015 = vunpack.c.l.s4 1983009808
        %v1016 = vunpack.c.0.s8 %v1015
        %v1017 = vperm.slane %v1009, %v1016
        %v1018 = vrot.slane %v838, 4
        %v1019 = vsel %vm886, 0.0, %v1018
        %v1021 = vunpack.c.l.s4 1983009808
        %v1022 = vunpack.c.0.s8 %v1021
        %v1023 = vperm.slane %v838, %v1022
        %v1025 = vunpack.c.l.s4 1983009808
        %v1026 = vunpack.c.0.s8 %v1025
        %v1027 = vperm.slane %v1019, %v1026
        %v1028 = vrot.slane %v870, 4
        %v1029 = vsel %vm886, 0.0, %v1028
        %v1031 = vunpack.c.l.s4 1983009808
        %v1032 = vunpack.c.0.s8 %v1031
        %v1033 = vperm.slane %v870, %v1032
        %v1035 = vunpack.c.l.s4 1983009808
        %v1036 = vunpack.c.0.s8 %v1035
        %v1037 = vperm.slane %v1029, %v1036
        %v1038 = vrot.slane %v1013, 4
        %v1039 = vsel %vm886, %v1038, %v1001
        %v1040 = vrot.slane %v1001, 4
        %v1041 = vsel %vm886, %v1013, %v1040
        %v1043 = vunpack.c.l.s4 1934713408
        %v1044 = vunpack.c.0.s8 %v1043
        %v1045 = vperm.slane %v1039, %v1044
        %v1047 = vunpack.c.l.s4 1934713408
        %v1048 = vunpack.c.0.s8 %v1047
        %v1049 = vperm.slane %v1041, %v1048
        %v1050 = vrot.slane %v1017, 4
        %v1051 = vsel %vm886, %v1050, %v1005
        %v1052 = vrot.slane %v1005, 4
        %v1053 = vsel %vm886, %v1017, %v1052
        %v1055 = vunpack.c.l.s4 1934713408
        %v1056 = vunpack.c.0.s8 %v1055
        %v1057 = vperm.slane %v1051, %v1056
        %v1059 = vunpack.c.l.s4 1934713408
        %v1060 = vunpack.c.0.s8 %v1059
        %v1061 = vperm.slane %v1053, %v1060
        %v1062 = vrot.slane %v1033, 4
        %v1063 = vsel %vm886, %v1062, %v1023
        %v1064 = vrot.slane %v1023, 4
        %v1065 = vsel %vm886, %v1033, %v1064
        %v1067 = vunpack.c.l.s4 1934713408
        %v1068 = vunpack.c.0.s8 %v1067
        %v1069 = vperm.slane %v1063, %v1068
        %v1071 = vunpack.c.l.s4 1934713408
        %v1072 = vunpack.c.0.s8 %v1071
        %v1073 = vperm.slane %v1065, %v1072
        %v1074 = vrot.slane %v1037, 4
        %v1075 = vsel %vm886, %v1074, %v1027
        %v1076 = vrot.slane %v1027, 4
        %v1077 = vsel %vm886, %v1037, %v1076
        %v1079 = vunpack.c.l.s4 1934713408
        %v1080 = vunpack.c.0.s8 %v1079
        %v1081 = vperm.slane %v1075, %v1080
        %v1083 = vunpack.c.l.s4 1934713408
        %v1084 = vunpack.c.0.s8 %v1083
        %v1085 = vperm.slane %v1077, %v1084
        %v1086 = vrot.slane %v1069, 4
        %v1087 = vsel %vm886, %v1086, %v1045
        %v1088 = vrot.slane %v1045, 4
        %v1089 = vsel %vm886, %v1069, %v1088
        %v1090 = vrot.slane %v1073, 4
        %v1091 = vsel %vm886, %v1090, %v1049
        %v1092 = vrot.slane %v1049, 4
        %v1093 = vsel %vm886, %v1073, %v1092
        %v1094 = vrot.slane %v1081, 4
        %v1095 = vsel %vm886, %v1094, %v1057
        %v1096 = vrot.slane %v1057, 4
        %v1097 = vsel %vm886, %v1081, %v1096
        %v1098 = vrot.slane %v1085, 4
        %v1099 = vsel %vm886, %v1098, %v1061
        %v1100 = vrot.slane %v1061, 4
        %v1101 = vsel %vm886, %v1085, %v1100
        %v1102 = vrot.slane %v775, 4
        %v1103 = vsel %vm886, %v1102, %v711
        %v1104 = vrot.slane %v711, 4
        %v1105 = vsel %vm886, %v775, %v1104
        %v1107 = vunpack.c.l.s4 1983009808
        %v1108 = vunpack.c.0.s8 %v1107
        %v1109 = vperm.slane %v1103, %v1108
        %v1111 = vunpack.c.l.s4 1983009808
        %v1112 = vunpack.c.0.s8 %v1111
        %v1113 = vperm.slane %v1105, %v1112
        %v1114 = vrot.slane %v807, 4
        %v1115 = vsel %vm886, %v1114, %v743
        %v1116 = vrot.slane %v743, 4
        %v1117 = vsel %vm886, %v807, %v1116
        %v1119 = vunpack.c.l.s4 1983009808
        %v1120 = vunpack.c.0.s8 %v1119
        %v1121 = vperm.slane %v1115, %v1120
        %v1123 = vunpack.c.l.s4 1983009808
        %v1124 = vunpack.c.0.s8 %v1123
        %v1125 = vperm.slane %v1117, %v1124
        %v1126 = vrot.slane %v839, 4
        %v1127 = vsel %vm886, 0.0, %v1126
        %v1129 = vunpack.c.l.s4 1983009808
        %v1130 = vunpack.c.0.s8 %v1129
        %v1131 = vperm.slane %v839, %v1130
        %v1133 = vunpack.c.l.s4 1983009808
        %v1134 = vunpack.c.0.s8 %v1133
        %v1135 = vperm.slane %v1127, %v1134
        %v1136 = vrot.slane %v871, 4
        %v1137 = vsel %vm886, 0.0, %v1136
        %v1139 = vunpack.c.l.s4 1983009808
        %v1140 = vunpack.c.0.s8 %v1139
        %v1141 = vperm.slane %v871, %v1140
        %v1143 = vunpack.c.l.s4 1983009808
        %v1144 = vunpack.c.0.s8 %v1143
        %v1145 = vperm.slane %v1137, %v1144
        %v1146 = vrot.slane %v1121, 4
        %v1147 = vsel %vm886, %v1146, %v1109
        %v1148 = vrot.slane %v1109, 4
        %v1149 = vsel %vm886, %v1121, %v1148
        %v1151 = vunpack.c.l.s4 1934713408
        %v1152 = vunpack.c.0.s8 %v1151
        %v1153 = vperm.slane %v1147, %v1152
        %v1155 = vunpack.c.l.s4 1934713408
        %v1156 = vunpack.c.0.s8 %v1155
        %v1157 = vperm.slane %v1149, %v1156
        %v1158 = vrot.slane %v1125, 4
        %v1159 = vsel %vm886, %v1158, %v1113
        %v1160 = vrot.slane %v1113, 4
        %v1161 = vsel %vm886, %v1125, %v1160
        %v1163 = vunpack.c.l.s4 1934713408
        %v1164 = vunpack.c.0.s8 %v1163
        %v1165 = vperm.slane %v1159, %v1164
        %v1167 = vunpack.c.l.s4 1934713408
        %v1168 = vunpack.c.0.s8 %v1167
        %v1169 = vperm.slane %v1161, %v1168
        %v1170 = vrot.slane %v1141, 4
        %v1171 = vsel %vm886, %v1170, %v1131
        %v1172 = vrot.slane %v1131, 4
        %v1173 = vsel %vm886, %v1141, %v1172
        %v1175 = vunpack.c.l.s4 1934713408
        %v1176 = vunpack.c.0.s8 %v1175
        %v1177 = vperm.slane %v1171, %v1176
        %v1179 = vunpack.c.l.s4 1934713408
        %v1180 = vunpack.c.0.s8 %v1179
        %v1181 = vperm.slane %v1173, %v1180
        %v1182 = vrot.slane %v1145, 4
        %v1183 = vsel %vm886, %v1182, %v1135
        %v1184 = vrot.slane %v1135, 4
        %v1185 = vsel %vm886, %v1145, %v1184
        %v1187 = vunpack.c.l.s4 1934713408
        %v1188 = vunpack.c.0.s8 %v1187
        %v1189 = vperm.slane %v1183, %v1188
        %v1191 = vunpack.c.l.s4 1934713408
        %v1192 = vunpack.c.0.s8 %v1191
        %v1193 = vperm.slane %v1185, %v1192
        %v1194 = vrot.slane %v1177, 4
        %v1195 = vsel %vm886, %v1194, %v1153
        %v1196 = vrot.slane %v1153, 4
        %v1197 = vsel %vm886, %v1177, %v1196
        %v1198 = vrot.slane %v1181, 4
        %v1199 = vsel %vm886, %v1198, %v1157
        %v1200 = vrot.slane %v1157, 4
        %v1201 = vsel %vm886, %v1181, %v1200
        %v1202 = vrot.slane %v1189, 4
        %v1203 = vsel %vm886, %v1202, %v1165
        %v1204 = vrot.slane %v1165, 4
        %v1205 = vsel %vm886, %v1189, %v1204
        %v1206 = vrot.slane %v1193, 4
        %v1207 = vsel %vm886, %v1206, %v1169
        %v1208 = vrot.slane %v1169, 4
        %v1209 = vsel %vm886, %v1193, %v1208
        %v1210 = vrot.slane %v776, 4
        %v1211 = vsel %vm886, %v1210, %v712
        %v1212 = vrot.slane %v712, 4
        %v1213 = vsel %vm886, %v776, %v1212
        %v1215 = vunpack.c.l.s4 1983009808
        %v1216 = vunpack.c.0.s8 %v1215
        %v1217 = vperm.slane %v1211, %v1216
        %v1219 = vunpack.c.l.s4 1983009808
        %v1220 = vunpack.c.0.s8 %v1219
        %v1221 = vperm.slane %v1213, %v1220
        %v1222 = vrot.slane %v808, 4
        %v1223 = vsel %vm886, %v1222, %v744
        %v1224 = vrot.slane %v744, 4
        %v1225 = vsel %vm886, %v808, %v1224
        %v1227 = vunpack.c.l.s4 1983009808
        %v1228 = vunpack.c.0.s8 %v1227
        %v1229 = vperm.slane %v1223, %v1228
        %v1231 = vunpack.c.l.s4 1983009808
        %v1232 = vunpack.c.0.s8 %v1231
        %v1233 = vperm.slane %v1225, %v1232
        %v1234 = vrot.slane %v840, 4
        %v1235 = vsel %vm886, 0.0, %v1234
        %v1237 = vunpack.c.l.s4 1983009808
        %v1238 = vunpack.c.0.s8 %v1237
        %v1239 = vperm.slane %v840, %v1238
        %v1241 = vunpack.c.l.s4 1983009808
        %v1242 = vunpack.c.0.s8 %v1241
        %v1243 = vperm.slane %v1235, %v1242
        %v1244 = vrot.slane %v872, 4
        %v1245 = vsel %vm886, 0.0, %v1244
        %v1247 = vunpack.c.l.s4 1983009808
        %v1248 = vunpack.c.0.s8 %v1247
        %v1249 = vperm.slane %v872, %v1248
        %v1251 = vunpack.c.l.s4 1983009808
        %v1252 = vunpack.c.0.s8 %v1251
        %v1253 = vperm.slane %v1245, %v1252
        %v1254 = vrot.slane %v1229, 4
        %v1255 = vsel %vm886, %v1254, %v1217
        %v1256 = vrot.slane %v1217, 4
        %v1257 = vsel %vm886, %v1229, %v1256
        %v1259 = vunpack.c.l.s4 1934713408
        %v1260 = vunpack.c.0.s8 %v1259
        %v1261 = vperm.slane %v1255, %v1260
        %v1263 = vunpack.c.l.s4 1934713408
        %v1264 = vunpack.c.0.s8 %v1263
        %v1265 = vperm.slane %v1257, %v1264
        %v1266 = vrot.slane %v1233, 4
        %v1267 = vsel %vm886, %v1266, %v1221
        %v1268 = vrot.slane %v1221, 4
        %v1269 = vsel %vm886, %v1233, %v1268
        %v1271 = vunpack.c.l.s4 1934713408
        %v1272 = vunpack.c.0.s8 %v1271
        %v1273 = vperm.slane %v1267, %v1272
        %v1275 = vunpack.c.l.s4 1934713408
        %v1276 = vunpack.c.0.s8 %v1275
        %v1277 = vperm.slane %v1269, %v1276
        %v1278 = vrot.slane %v1249, 4
        %v1279 = vsel %vm886, %v1278, %v1239
        %v1280 = vrot.slane %v1239, 4
        %v1281 = vsel %vm886, %v1249, %v1280
        %v1283 = vunpack.c.l.s4 1934713408
        %v1284 = vunpack.c.0.s8 %v1283
        %v1285 = vperm.slane %v1279, %v1284
        %v1287 = vunpack.c.l.s4 1934713408
        %v1288 = vunpack.c.0.s8 %v1287
        %v1289 = vperm.slane %v1281, %v1288
        %v1290 = vrot.slane %v1253, 4
        %v1291 = vsel %vm886, %v1290, %v1243
        %v1292 = vrot.slane %v1243, 4
        %v1293 = vsel %vm886, %v1253, %v1292
        %v1295 = vunpack.c.l.s4 1934713408
        %v1296 = vunpack.c.0.s8 %v1295
        %v1297 = vperm.slane %v1291, %v1296
        %v1299 = vunpack.c.l.s4 1934713408
        %v1300 = vunpack.c.0.s8 %v1299
        %v1301 = vperm.slane %v1293, %v1300
        %v1302 = vrot.slane %v1285, 4
        %v1303 = vsel %vm886, %v1302, %v1261
        %v1304 = vrot.slane %v1261, 4
        %v1305 = vsel %vm886, %v1285, %v1304
        %v1306 = vrot.slane %v1289, 4
        %v1307 = vsel %vm886, %v1306, %v1265
        %v1308 = vrot.slane %v1265, 4
        %v1309 = vsel %vm886, %v1289, %v1308
        %v1310 = vrot.slane %v1297, 4
        %v1311 = vsel %vm886, %v1310, %v1273
        %v1312 = vrot.slane %v1273, 4
        %v1313 = vsel %vm886, %v1297, %v1312
        %v1314 = vrot.slane %v1301, 4
        %v1315 = vsel %vm886, %v1314, %v1277
        %v1316 = vrot.slane %v1277, 4
        %v1317 = vsel %vm886, %v1301, %v1316
        %v1318 = vrot.slane %v777, 4
        %v1319 = vsel %vm886, %v1318, %v713
        %v1320 = vrot.slane %v713, 4
        %v1321 = vsel %vm886, %v777, %v1320
        %v1323 = vunpack.c.l.s4 1983009808
        %v1324 = vunpack.c.0.s8 %v1323
        %v1325 = vperm.slane %v1319, %v1324
        %v1327 = vunpack.c.l.s4 1983009808
        %v1328 = vunpack.c.0.s8 %v1327
        %v1329 = vperm.slane %v1321, %v1328
        %v1330 = vrot.slane %v809, 4
        %v1331 = vsel %vm886, %v1330, %v745
        %v1332 = vrot.slane %v745, 4
        %v1333 = vsel %vm886, %v809, %v1332
        %v1335 = vunpack.c.l.s4 1983009808
        %v1336 = vunpack.c.0.s8 %v1335
        %v1337 = vperm.slane %v1331, %v1336
        %v1339 = vunpack.c.l.s4 1983009808
        %v1340 = vunpack.c.0.s8 %v1339
        %v1341 = vperm.slane %v1333, %v1340
        %v1342 = vrot.slane %v841, 4
        %v1343 = vsel %vm886, 0.0, %v1342
        %v1345 = vunpack.c.l.s4 1983009808
        %v1346 = vunpack.c.0.s8 %v1345
        %v1347 = vperm.slane %v841, %v1346
        %v1349 = vunpack.c.l.s4 1983009808
        %v1350 = vunpack.c.0.s8 %v1349
        %v1351 = vperm.slane %v1343, %v1350
        %v1352 = vrot.slane %v873, 4
        %v1353 = vsel %vm886, 0.0, %v1352
        %v1355 = vunpack.c.l.s4 1983009808
        %v1356 = vunpack.c.0.s8 %v1355
        %v1357 = vperm.slane %v873, %v1356
        %v1359 = vunpack.c.l.s4 1983009808
        %v1360 = vunpack.c.0.s8 %v1359
        %v1361 = vperm.slane %v1353, %v1360
        %v1362 = vrot.slane %v1337, 4
        %v1363 = vsel %vm886, %v1362, %v1325
        %v1364 = vrot.slane %v1325, 4
        %v1365 = vsel %vm886, %v1337, %v1364
        %v1367 = vunpack.c.l.s4 1934713408
        %v1368 = vunpack.c.0.s8 %v1367
        %v1369 = vperm.slane %v1363, %v1368
        %v1371 = vunpack.c.l.s4 1934713408
        %v1372 = vunpack.c.0.s8 %v1371
        %v1373 = vperm.slane %v1365, %v1372
        %v1374 = vrot.slane %v1341, 4
        %v1375 = vsel %vm886, %v1374, %v1329
        %v1376 = vrot.slane %v1329, 4
        %v1377 = vsel %vm886, %v1341, %v1376
        %v1379 = vunpack.c.l.s4 1934713408
        %v1380 = vunpack.c.0.s8 %v1379
        %v1381 = vperm.slane %v1375, %v1380
        %v1383 = vunpack.c.l.s4 1934713408
        %v1384 = vunpack.c.0.s8 %v1383
        %v1385 = vperm.slane %v1377, %v1384
        %v1386 = vrot.slane %v1357, 4
        %v1387 = vsel %vm886, %v1386, %v1347
        %v1388 = vrot.slane %v1347, 4
        %v1389 = vsel %vm886, %v1357, %v1388
        %v1391 = vunpack.c.l.s4 1934713408
        %v1392 = vunpack.c.0.s8 %v1391
        %v1393 = vperm.slane %v1387, %v1392
        %v1395 = vunpack.c.l.s4 1934713408
        %v1396 = vunpack.c.0.s8 %v1395
        %v1397 = vperm.slane %v1389, %v1396
        %v1398 = vrot.slane %v1361, 4
        %v1399 = vsel %vm886, %v1398, %v1351
        %v1400 = vrot.slane %v1351, 4
        %v1401 = vsel %vm886, %v1361, %v1400
        %v1403 = vunpack.c.l.s4 1934713408
        %v1404 = vunpack.c.0.s8 %v1403
        %v1405 = vperm.slane %v1399, %v1404
        %v1407 = vunpack.c.l.s4 1934713408
        %v1408 = vunpack.c.0.s8 %v1407
        %v1409 = vperm.slane %v1401, %v1408
        %v1410 = vrot.slane %v1393, 4
        %v1411 = vsel %vm886, %v1410, %v1369
        %v1412 = vrot.slane %v1369, 4
        %v1413 = vsel %vm886, %v1393, %v1412
        %v1414 = vrot.slane %v1397, 4
        %v1415 = vsel %vm886, %v1414, %v1373
        %v1416 = vrot.slane %v1373, 4
        %v1417 = vsel %vm886, %v1397, %v1416
        %v1418 = vrot.slane %v1405, 4
        %v1419 = vsel %vm886, %v1418, %v1381
        %v1420 = vrot.slane %v1381, 4
        %v1421 = vsel %vm886, %v1405, %v1420
        %v1422 = vrot.slane %v1409, 4
        %v1423 = vsel %vm886, %v1422, %v1385
        %v1424 = vrot.slane %v1385, 4
        %v1425 = vsel %vm886, %v1409, %v1424
        %v1426 = vrot.slane %v778, 4
        %v1427 = vsel %vm886, %v1426, %v714
        %v1428 = vrot.slane %v714, 4
        %v1429 = vsel %vm886, %v778, %v1428
        %v1431 = vunpack.c.l.s4 1983009808
        %v1432 = vunpack.c.0.s8 %v1431
        %v1433 = vperm.slane %v1427, %v1432
        %v1435 = vunpack.c.l.s4 1983009808
        %v1436 = vunpack.c.0.s8 %v1435
        %v1437 = vperm.slane %v1429, %v1436
        %v1438 = vrot.slane %v810, 4
        %v1439 = vsel %vm886, %v1438, %v746
        %v1440 = vrot.slane %v746, 4
        %v1441 = vsel %vm886, %v810, %v1440
        %v1443 = vunpack.c.l.s4 1983009808
        %v1444 = vunpack.c.0.s8 %v1443
        %v1445 = vperm.slane %v1439, %v1444
        %v1447 = vunpack.c.l.s4 1983009808
        %v1448 = vunpack.c.0.s8 %v1447
        %v1449 = vperm.slane %v1441, %v1448
        %v1450 = vrot.slane %v842, 4
        %v1451 = vsel %vm886, 0.0, %v1450
        %v1453 = vunpack.c.l.s4 1983009808
        %v1454 = vunpack.c.0.s8 %v1453
        %v1455 = vperm.slane %v842, %v1454
        %v1457 = vunpack.c.l.s4 1983009808
        %v1458 = vunpack.c.0.s8 %v1457
        %v1459 = vperm.slane %v1451, %v1458
        %v1460 = vrot.slane %v874, 4
        %v1461 = vsel %vm886, 0.0, %v1460
        %v1463 = vunpack.c.l.s4 1983009808
        %v1464 = vunpack.c.0.s8 %v1463
        %v1465 = vperm.slane %v874, %v1464
        %v1467 = vunpack.c.l.s4 1983009808
        %v1468 = vunpack.c.0.s8 %v1467
        %v1469 = vperm.slane %v1461, %v1468
        %v1470 = vrot.slane %v1445, 4
        %v1471 = vsel %vm886, %v1470, %v1433
        %v1472 = vrot.slane %v1433, 4
        %v1473 = vsel %vm886, %v1445, %v1472
        %v1475 = vunpack.c.l.s4 1934713408
        %v1476 = vunpack.c.0.s8 %v1475
        %v1477 = vperm.slane %v1471, %v1476
        %v1479 = vunpack.c.l.s4 1934713408
        %v1480 = vunpack.c.0.s8 %v1479
        %v1481 = vperm.slane %v1473, %v1480
        %v1482 = vrot.slane %v1449, 4
        %v1483 = vsel %vm886, %v1482, %v1437
        %v1484 = vrot.slane %v1437, 4
        %v1485 = vsel %vm886, %v1449, %v1484
        %v1487 = vunpack.c.l.s4 1934713408
        %v1488 = vunpack.c.0.s8 %v1487
        %v1489 = vperm.slane %v1483, %v1488
        %v1491 = vunpack.c.l.s4 1934713408
        %v1492 = vunpack.c.0.s8 %v1491
        %v1493 = vperm.slane %v1485, %v1492
        %v1494 = vrot.slane %v1465, 4
        %v1495 = vsel %vm886, %v1494, %v1455
        %v1496 = vrot.slane %v1455, 4
        %v1497 = vsel %vm886, %v1465, %v1496
        %v1499 = vunpack.c.l.s4 1934713408
        %v1500 = vunpack.c.0.s8 %v1499
        %v1501 = vperm.slane %v1495, %v1500
        %v1503 = vunpack.c.l.s4 1934713408
        %v1504 = vunpack.c.0.s8 %v1503
        %v1505 = vperm.slane %v1497, %v1504
        %v1506 = vrot.slane %v1469, 4
        %v1507 = vsel %vm886, %v1506, %v1459
        %v1508 = vrot.slane %v1459, 4
        %v1509 = vsel %vm886, %v1469, %v1508
        %v1511 = vunpack.c.l.s4 1934713408
        %v1512 = vunpack.c.0.s8 %v1511
        %v1513 = vperm.slane %v1507, %v1512
        %v1515 = vunpack.c.l.s4 1934713408
        %v1516 = vunpack.c.0.s8 %v1515
        %v1517 = vperm.slane %v1509, %v1516
        %v1518 = vrot.slane %v1501, 4
        %v1519 = vsel %vm886, %v1518, %v1477
        %v1520 = vrot.slane %v1477, 4
        %v1521 = vsel %vm886, %v1501, %v1520
        %v1522 = vrot.slane %v1505, 4
        %v1523 = vsel %vm886, %v1522, %v1481
        %v1524 = vrot.slane %v1481, 4
        %v1525 = vsel %vm886, %v1505, %v1524
        %v1526 = vrot.slane %v1513, 4
        %v1527 = vsel %vm886, %v1526, %v1489
        %v1528 = vrot.slane %v1489, 4
        %v1529 = vsel %vm886, %v1513, %v1528
        %v1530 = vrot.slane %v1517, 4
        %v1531 = vsel %vm886, %v1530, %v1493
        %v1532 = vrot.slane %v1493, 4
        %v1533 = vsel %vm886, %v1517, %v1532
        %1550 = vrot.lane.b32.xlu0 %v1195, 32
        %v1551 = vpop.permute.xlu0 %1550
        %1552 = vrot.lane.b32.xlu0 %v1197, 32
        %v1553 = vpop.permute.xlu0 %1552
        %1554 = vrot.lane.b32.xlu0 %v1199, 32
        %v1555 = vpop.permute.xlu0 %1554
        %1556 = vrot.lane.b32.xlu0 %v1201, 32
        %v1557 = vpop.permute.xlu0 %1556
        %1558 = vrot.lane.b32.xlu0 %v1203, 32
        %v1559 = vpop.permute.xlu0 %1558
        %1560 = vrot.lane.b32.xlu0 %v1205, 32
        %v1561 = vpop.permute.xlu0 %1560
        %1562 = vrot.lane.b32.xlu0 %v1207, 32
        %v1563 = vpop.permute.xlu0 %1562
        %1564 = vrot.lane.b32.xlu0 %v1209, 32
        %v1565 = vpop.permute.xlu0 %1564
        %1566 = vrot.lane.b32.xlu0 %v1303, 32
        %v1567 = vpop.permute.xlu0 %1566
        %1568 = vrot.lane.b32.xlu0 %v1305, 32
        %v1569 = vpop.permute.xlu0 %1568
        %1570 = vrot.lane.b32.xlu0 %v1307, 32
        %v1571 = vpop.permute.xlu0 %1570
        %1572 = vrot.lane.b32.xlu0 %v1309, 32
        %v1573 = vpop.permute.xlu0 %1572
        %1574 = vrot.lane.b32.xlu0 %v1311, 32
        %v1575 = vpop.permute.xlu0 %1574
        %1576 = vrot.lane.b32.xlu0 %v1313, 32
        %v1577 = vpop.permute.xlu0 %1576
        %1578 = vrot.lane.b32.xlu0 %v1315, 32
        %v1579 = vpop.permute.xlu0 %1578
        %1580 = vrot.lane.b32.xlu0 %v1317, 32
        %v1581 = vpop.permute.xlu0 %1580
        %1614 = vrot.lane.b32.xlu0 %v1411, 64
        %v1615 = vpop.permute.xlu0 %1614
        %1616 = vrot.lane.b32.xlu0 %v1413, 64
        %v1617 = vpop.permute.xlu0 %1616
        %1618 = vrot.lane.b32.xlu0 %v1415, 64
        %v1619 = vpop.permute.xlu0 %1618
        %1620 = vrot.lane.b32.xlu0 %v1417, 64
        %v1621 = vpop.permute.xlu0 %1620
        %1622 = vrot.lane.b32.xlu0 %v1419, 64
        %v1623 = vpop.permute.xlu0 %1622
        %1624 = vrot.lane.b32.xlu0 %v1421, 64
        %v1625 = vpop.permute.xlu0 %1624
        %1626 = vrot.lane.b32.xlu0 %v1423, 64
        %v1627 = vpop.permute.xlu0 %1626
        %1628 = vrot.lane.b32.xlu0 %v1425, 64
        %v1629 = vpop.permute.xlu0 %1628
        %1630 = vrot.lane.b32.xlu0 %v1519, 64
        %v1631 = vpop.permute.xlu0 %1630
        %1632 = vrot.lane.b32.xlu0 %v1521, 64
        %v1633 = vpop.permute.xlu0 %1632
        %1634 = vrot.lane.b32.xlu0 %v1523, 64
        %v1635 = vpop.permute.xlu0 %1634
        %1636 = vrot.lane.b32.xlu0 %v1525, 64
        %v1637 = vpop.permute.xlu0 %1636
        %1638 = vrot.lane.b32.xlu0 %v1527, 64
        %v1639 = vpop.permute.xlu0 %1638
        %1640 = vrot.lane.b32.xlu0 %v1529, 64
        %v1641 = vpop.permute.xlu0 %1640
        %1642 = vrot.lane.b32.xlu0 %v1531, 64
        %v1643 = vpop.permute.xlu0 %1642
        %1644 = vrot.lane.b32.xlu0 %v1533, 64
        %v1645 = vpop.permute.xlu0 %1644
        %v1662 = vsel %vm587, %v979, %v1551
        %v1663 = vsel %vm587, %v981, %v1553
        %v1664 = vsel %vm587, %v983, %v1555
        %v1665 = vsel %vm587, %v985, %v1557
        %v1666 = vsel %vm587, %v987, %v1559
        %v1667 = vsel %vm587, %v989, %v1561
        %v1668 = vsel %vm587, %v991, %v1563
        %v1669 = vsel %vm587, %v993, %v1565
        %v1670 = vsel %vm587, %v1087, %v1567
        %v1671 = vsel %vm587, %v1089, %v1569
        %v1672 = vsel %vm587, %v1091, %v1571
        %v1673 = vsel %vm587, %v1093, %v1573
        %v1674 = vsel %vm587, %v1095, %v1575
        %v1675 = vsel %vm587, %v1097, %v1577
        %v1676 = vsel %vm587, %v1099, %v1579
        %v1677 = vsel %vm587, %v1101, %v1581
        %vm1678 = vcmask 523264
        %v1679 = vsel %vm1678, %v1662, %v1615
        %v1680 = vsel %vm1678, %v1663, %v1617
        %v1681 = vsel %vm1678, %v1664, %v1619
        %v1682 = vsel %vm1678, %v1665, %v1621
        %v1683 = vsel %vm1678, %v1666, %v1623
        %v1684 = vsel %vm1678, %v1667, %v1625
        %v1685 = vsel %vm1678, %v1668, %v1627
        %v1686 = vsel %vm1678, %v1669, %v1629
        %v1687 = vsel %vm1678, %v1670, %v1631
        %v1688 = vsel %vm1678, %v1671, %v1633
        %v1689 = vsel %vm1678, %v1672, %v1635
        %v1690 = vsel %vm1678, %v1673, %v1637
        %v1691 = vsel %vm1678, %v1674, %v1639
        %v1692 = vsel %vm1678, %v1675, %v1641
        %v1693 = vsel %vm1678, %v1676, %v1643
        %v1694 = vsel %vm1678, %v1677, %v1645
        %v1711 = vrot.slane %v1679, 2
        %v1712 = vrot.slane %v1679, 4
        %v1713 = vrot.slane %v1680, 2
        %v1714 = vrot.slane %v1680, 4
        %v1715 = vrot.slane %v1681, 2
        %v1716 = vrot.slane %v1681, 4
        %v1717 = vrot.slane %v1682, 2
        %v1718 = vrot.slane %v1682, 4
        %v1719 = vrot.slane %v1683, 2
        %v1720 = vrot.slane %v1683, 4
        %v1721 = vrot.slane %v1684, 2
        %v1722 = vrot.slane %v1684, 4
        %v1723 = vrot.slane %v1685, 2
        %v1724 = vrot.slane %v1685, 4
        %v1725 = vrot.slane %v1686, 2
        %v1726 = vrot.slane %v1686, 4
        %v1727 = vrot.slane %v1687, 2
        %v1728 = vrot.slane %v1687, 4
        %v1729 = vrot.slane %v1688, 2
        %v1730 = vrot.slane %v1688, 4
        %v1731 = vrot.slane %v1689, 2
        %v1732 = vrot.slane %v1689, 4
        %v1733 = vrot.slane %v1690, 2
        %v1734 = vrot.slane %v1690, 4
        %v1735 = vrot.slane %v1691, 2
        %v1736 = vrot.slane %v1691, 4
        %v1737 = vrot.slane %v1692, 2
        %v1738 = vrot.slane %v1692, 4
        %v1739 = vrot.slane %v1693, 2
        %v1740 = vrot.slane %v1693, 4
        %v1741 = vrot.slane %v1694, 2
        %v1742 = vrot.slane %v1694, 4
        %1743 = vst [vmem:[#allocation1] ss:$4 sm:$0xff] %v1679
        %s1744 = scalar_lea.vmem [#allocation1], 1
        %1745 = vst [vmem:[%s1744] ss:$4 sm:$0xff] %v1711
        %s1746 = scalar_lea.vmem [#allocation1], 2
        %1747 = vst [vmem:[%s1746] ss:$4 sm:$0xff] %v1712
        %s1748 = scalar_lea.vmem [#allocation1], 3
        %1749 = vst [vmem:[%s1748] ss:$4 sm:$0xff] %v1680
        %s1750 = scalar_lea.vmem [#allocation1], 32
        %1751 = vst [vmem:[%s1750] ss:$4 sm:$0xff] %v1713
        %s1752 = scalar_lea.vmem [#allocation1], 33
        %1753 = vst [vmem:[%s1752] ss:$4 sm:$0xff] %v1714
        %s1754 = scalar_lea.vmem [#allocation1], 34
        %1755 = vst [vmem:[%s1754] ss:$4 sm:$0xff] %v1681
        %s1756 = scalar_lea.vmem [#allocation1], 35
        %1757 = vst [vmem:[%s1756] ss:$4 sm:$0xff] %v1715
        %v1758 = vld.sshfl [vmem:[#allocation1] sm:$0xff pattern:$0x73625140]
        %v1759 = vld.sshfl [vmem:[#allocation1 + $0x20] sm:$0xff pattern:$0x73625140]
        %1760 = vst [vmem:[#allocation1] ss:$4 sm:$0xff] %v1716
        %1761 = vst [vmem:[%s1744] ss:$4 sm:$0xff] %v1682
        %1762 = vst [vmem:[%s1746] ss:$4 sm:$0xff] %v1717
        %1763 = vst [vmem:[%s1748] ss:$4 sm:$0xff] %v1718
        %1764 = vst [vmem:[%s1750] ss:$4 sm:$0xff] %v1683
        %1765 = vst [vmem:[%s1752] ss:$4 sm:$0xff] %v1719
        %1766 = vst [vmem:[%s1754] ss:$4 sm:$0xff] %v1720
        %1767 = vst [vmem:[%s1756] ss:$4 sm:$0xff] %v1684
        %v1768 = vld.sshfl [vmem:[#allocation1] sm:$0xff pattern:$0x73625140]
        %v1769 = vld.sshfl [vmem:[#allocation1 + $0x20] sm:$0xff pattern:$0x73625140]
        %1770 = vst [vmem:[#allocation1] ss:$4 sm:$0xff] %v1721
        %1771 = vst [vmem:[%s1744] ss:$4 sm:$0xff] %v1722
        %1772 = vst [vmem:[%s1746] ss:$4 sm:$0xff] %v1685
        %1773 = vst [vmem:[%s1748] ss:$4 sm:$0xff] %v1723
        %1774 = vst [vmem:[%s1750] ss:$4 sm:$0xff] %v1724
        %1775 = vst [vmem:[%s1752] ss:$4 sm:$0xff] %v1686
        %1776 = vst [vmem:[%s1754] ss:$4 sm:$0xff] %v1725
        %1777 = vst [vmem:[%s1756] ss:$4 sm:$0xff] %v1726
        %v1778 = vld.sshfl [vmem:[#allocation1] sm:$0xff pattern:$0x73625140]
        %v1779 = vld.sshfl [vmem:[#allocation1 + $0x20] sm:$0xff pattern:$0x73625140]
        %1780 = vst [vmem:[#allocation1] ss:$4 sm:$0xff] %v1687
        %1781 = vst [vmem:[%s1744] ss:$4 sm:$0xff] %v1727
        %1782 = vst [vmem:[%s1746] ss:$4 sm:$0xff] %v1728
        %1783 = vst [vmem:[%s1748] ss:$4 sm:$0xff] %v1688
        %1784 = vst [vmem:[%s1750] ss:$4 sm:$0xff] %v1729
        %1785 = vst [vmem:[%s1752] ss:$4 sm:$0xff] %v1730
        %1786 = vst [vmem:[%s1754] ss:$4 sm:$0xff] %v1689
        %1787 = vst [vmem:[%s1756] ss:$4 sm:$0xff] %v1731
        %v1788 = vld.sshfl [vmem:[#allocation1] sm:$0xff pattern:$0x73625140]
        %v1789 = vld.sshfl [vmem:[#allocation1 + $0x20] sm:$0xff pattern:$0x73625140]
        %1790 = vst [vmem:[#allocation1] ss:$4 sm:$0xff] %v1732
        %1791 = vst [vmem:[%s1744] ss:$4 sm:$0xff] %v1690
        %1792 = vst [vmem:[%s1746] ss:$4 sm:$0xff] %v1733
        %1793 = vst [vmem:[%s1748] ss:$4 sm:$0xff] %v1734
        %1794 = vst [vmem:[%s1750] ss:$4 sm:$0xff] %v1691
        %1795 = vst [vmem:[%s1752] ss:$4 sm:$0xff] %v1735
        %1796 = vst [vmem:[%s1754] ss:$4 sm:$0xff] %v1736
        %1797 = vst [vmem:[%s1756] ss:$4 sm:$0xff] %v1692
        %v1798 = vld.sshfl [vmem:[#allocation1] sm:$0xff pattern:$0x73625140]
        %v1799 = vld.sshfl [vmem:[#allocation1 + $0x20] sm:$0xff pattern:$0x73625140]
        %1800 = vst [vmem:[#allocation1] ss:$4 sm:$0xff] %v1737
        %1801 = vst [vmem:[%s1744] ss:$4 sm:$0xff] %v1738
        %1802 = vst [vmem:[%s1746] ss:$4 sm:$0xff] %v1693
        %1803 = vst [vmem:[%s1748] ss:$4 sm:$0xff] %v1739
        %1804 = vst [vmem:[%s1750] ss:$4 sm:$0xff] %v1740
        %1805 = vst [vmem:[%s1752] ss:$4 sm:$0xff] %v1694
        %1806 = vst [vmem:[%s1754] ss:$4 sm:$0xff] %v1741
        %1807 = vst [vmem:[%s1756] ss:$4 sm:$0xff] %v1742
        %v1808 = vld.sshfl [vmem:[#allocation1] sm:$0xff pattern:$0x73625140]
        %v1809 = vld.sshfl [vmem:[#allocation1 + $0x20] sm:$0xff pattern:$0x73625140]
        %v1822 = vpack.c.bf16 %v1759, %v1758
        %v1823 = vpack.c.bf16 %v1769, %v1768
        %v1824 = vpack.c.bf16 %v1779, %v1778
        %v1825 = vpack.c.bf16 %v1789, %v1788
        %v1826 = vpack.c.bf16 %v1799, %v1798
        %v1827 = vpack.c.bf16 %v1809, %v1808
        %v1828 = vld [vmem:[%s4] sm:$0xf]
        %v1829 = vld [vmem:[%s4 + $0x4] sm:$0xf]
        %v1830 = vld [vmem:[%s4 + $0x8] sm:$0xf]
        %v1831 = vld [vmem:[%s4 + $0xc] sm:$0xf]
        %v1832 = vld [vmem:[%s4 + $0x10] sm:$0xf]
        %v1833 = vld [vmem:[%s4 + $0x14] sm:$0xf]
        %v1834 = vld [vmem:[%s4 + $0x18] sm:$0xf]
        %v1835 = vld [vmem:[%s4 + $0x1c] sm:$0xf]
        %v1836 = vld [vmem:[%s4 + $0x20] sm:$0xf]
        %v1837 = vld [vmem:[%s4 + $0x24] sm:$0xf]
        %v1838 = vld [vmem:[%s4 + $0x28] sm:$0xf]
        %v1839 = vld [vmem:[%s4 + $0x2c] sm:$0xf]
        %v1852 = vunpack.c.l.b16 %v1828
        %v1853 = vunpack.c.l.b16 %v1829
        %v1854 = vunpack.c.l.b16 %v1830
        %v1855 = vunpack.c.l.b16 %v1831
        %v1856 = vunpack.c.l.b16 %v1832
        %v1857 = vunpack.c.l.b16 %v1833
        %v1858 = vunpack.c.l.b16 %v1834
        %v1859 = vunpack.c.l.b16 %v1835
        %v1860 = vunpack.c.l.b16 %v1836
        %v1861 = vunpack.c.l.b16 %v1837
        %v1862 = vunpack.c.l.b16 %v1838
        %v1863 = vunpack.c.l.b16 %v1839
        %v1864 = vpack.c.b16 %v1853, %v1852
        %v1865 = vpack.c.b16 %v1855, %v1854
        %v1866 = vpack.c.b16 %v1857, %v1856
        %v1867 = vpack.c.b16 %v1859, %v1858
        %v1868 = vpack.c.b16 %v1861, %v1860
        %v1869 = vpack.c.b16 %v1863, %v1862
        %vm1876 = vcmask 785408
        %v1878 = vsel %vm1876, %v1822, 0
        %v1881 = vsel %vm1876, %v1823, 0
        %v1884 = vsel %vm1876, %v1824, 0
        %v1887 = vsel %vm1876, %v1825, 0
        %v1890 = vsel %vm1876, %v1826, 0
        %v1893 = vsel %vm1876, %v1827, 0
        %1895 = vmatpush.bf16.msra.mxu0 0
        %1896 = vmatpush.bf16.msra.mxu0 0
        %1897 = vmatpush.bf16.msra.mxu0 %v1869
        %1898 = vmatpush.bf16.msra.mxu0 %v1868
        %1899 = vmatpush.bf16.msra.mxu0 %v1867
        %1900 = vmatpush.bf16.msra.mxu0 %v1866
        %1901 = vmatpush.bf16.msra.mxu0 %v1865
        %1902 = vmatpush.bf16.msra.mxu0 %v1864
        %1903 = vmatmul.bf16.gmra.mxu0 %v1878
        %v1904 = vpop.f32.mrf.mxu0
        %v1905 = vadd.f32 0.0, %v1904
        %v1906 = vpop.f32.mrf.mxu0
        %v1907 = vadd.f32 0.0, %v1906
        %1908 = vmatmul.bf16.gmra.mxu0 %v1881
        %v1909 = vpop.f32.mrf.mxu0
        %v1910 = vadd.f32 0.0, %v1909
        %v1911 = vpop.f32.mrf.mxu0
        %v1912 = vadd.f32 0.0, %v1911
        %1913 = vmatmul.bf16.gmra.mxu0 %v1884
        %v1914 = vpop.f32.mrf.mxu0
        %v1915 = vadd.f32 0.0, %v1914
        %v1916 = vpop.f32.mrf.mxu0
        %v1917 = vadd.f32 0.0, %v1916
        %1918 = vmatmul.bf16.gmra.mxu0 %v1887
        %v1919 = vpop.f32.mrf.mxu0
        %v1920 = vadd.f32 0.0, %v1919
        %v1921 = vpop.f32.mrf.mxu0
        %v1922 = vadd.f32 0.0, %v1921
        %1923 = vmatmul.bf16.gmra.mxu0 %v1890
        %v1924 = vpop.f32.mrf.mxu0
        %v1925 = vadd.f32 0.0, %v1924
        %v1926 = vpop.f32.mrf.mxu0
        %v1927 = vadd.f32 0.0, %v1926
        %1928 = vmatmul.bf16.gmra.mxu0 %v1893
        %v1929 = vpop.f32.mrf.mxu0
        %v1930 = vadd.f32 0.0, %v1929
        %v1931 = vpop.f32.mrf.mxu0
        %v1932 = vadd.f32 0.0, %v1931
        %1933 = vdwg.mxu0
        %v1946 = vrot.slane %v1905, 2
        %v1947 = vrot.slane %v1905, 4
        %v1948 = vrot.slane %v1905, 6
        %v1949 = vrot.slane %v1907, 2
        %v1950 = vrot.slane %v1907, 4
        %v1951 = vrot.slane %v1907, 6
        %v1952 = vrot.slane %v1910, 2
        %v1953 = vrot.slane %v1910, 4
        %v1954 = vrot.slane %v1910, 6
        %v1955 = vrot.slane %v1912, 2
        %v1956 = vrot.slane %v1912, 4
        %v1957 = vrot.slane %v1912, 6
        %v1958 = vrot.slane %v1915, 2
        %v1959 = vrot.slane %v1915, 4
        %v1960 = vrot.slane %v1915, 6
        %v1961 = vrot.slane %v1917, 2
        %v1962 = vrot.slane %v1917, 4
        %v1963 = vrot.slane %v1917, 6
        %v1964 = vrot.slane %v1920, 2
        %v1965 = vrot.slane %v1920, 4
        %v1966 = vrot.slane %v1920, 6
        %v1967 = vrot.slane %v1922, 2
        %v1968 = vrot.slane %v1922, 4
        %v1969 = vrot.slane %v1922, 6
        %v1970 = vrot.slane %v1925, 2
        %v1971 = vrot.slane %v1925, 4
        %v1972 = vrot.slane %v1925, 6
        %v1973 = vrot.slane %v1927, 2
        %v1974 = vrot.slane %v1927, 4
        %v1975 = vrot.slane %v1927, 6
        %v1976 = vrot.slane %v1930, 2
        %v1977 = vrot.slane %v1930, 4
        %v1978 = vrot.slane %v1930, 6
        %v1979 = vrot.slane %v1932, 2
        %v1980 = vrot.slane %v1932, 4
        %v1981 = vrot.slane %v1932, 6
        %v2018 = vld [vmem:[%s323] sm:$0xff]
        %v2019 = vld [vmem:[%s323 + $0x8] sm:$0xff]
        %v2022 = vrot.slane %v2018, 1
        %v2023 = vrot.slane %v2018, 2
        %v2024 = vrot.slane %v2018, 3
        %v2025 = vrot.slane %v2018, 4
        %v2026 = vrot.slane %v2018, 5
        %v2027 = vrot.slane %v2018, 6
        %v2028 = vrot.slane %v2018, 7
        %v2029 = vrot.slane %v2019, 1
        %v2030 = vrot.slane %v2019, 2
        %v2031 = vrot.slane %v2019, 3
        %v2032 = vrot.slane %v2019, 4
        %v2033 = vrot.slane %v2019, 5
        %v2034 = vrot.slane %v2019, 6
        %v2035 = vrot.slane %v2019, 7
        %v2036 = vperm.slane %v2018, 0
        %v2037 = vperm.slane %v2022, 0
        %v2038 = vperm.slane %v2023, 0
        %v2039 = vperm.slane %v2024, 0
        %v2040 = vperm.slane %v2025, 0
        %v2041 = vperm.slane %v2026, 0
        %v2042 = vperm.slane %v2027, 0
        %v2043 = vperm.slane %v2028, 0
        %v2044 = vperm.slane %v2019, 0
        %v2045 = vperm.slane %v2029, 0
        %v2046 = vperm.slane %v2030, 0
        %v2047 = vperm.slane %v2031, 0
        %v2048 = vperm.slane %v2032, 0
        %v2049 = vperm.slane %v2033, 0
        %v2050 = vperm.slane %v2034, 0
        %v2051 = vperm.slane %v2035, 0
        %v2068 = vrot.slane %v2036, 2
        %v2069 = vrot.slane %v2036, 4
        %v2070 = vrot.slane %v2037, 2
        %v2071 = vrot.slane %v2037, 4
        %v2072 = vrot.slane %v2038, 2
        %v2073 = vrot.slane %v2038, 4
        %v2074 = vrot.slane %v2039, 2
        %v2075 = vrot.slane %v2039, 4
        %v2076 = vrot.slane %v2040, 2
        %v2077 = vrot.slane %v2040, 4
        %v2078 = vrot.slane %v2041, 2
        %v2079 = vrot.slane %v2041, 4
        %v2080 = vrot.slane %v2042, 2
        %v2081 = vrot.slane %v2042, 4
        %v2082 = vrot.slane %v2043, 2
        %v2083 = vrot.slane %v2043, 4
        %v2084 = vrot.slane %v2044, 2
        %v2085 = vrot.slane %v2044, 4
        %v2086 = vrot.slane %v2045, 2
        %v2087 = vrot.slane %v2045, 4
        %v2088 = vrot.slane %v2046, 2
        %v2089 = vrot.slane %v2046, 4
        %v2090 = vrot.slane %v2047, 2
        %v2091 = vrot.slane %v2047, 4
        %v2092 = vrot.slane %v2048, 2
        %v2093 = vrot.slane %v2048, 4
        %v2094 = vrot.slane %v2049, 2
        %v2095 = vrot.slane %v2049, 4
        %v2096 = vrot.slane %v2050, 2
        %v2097 = vrot.slane %v2050, 4
        %v2098 = vrot.slane %v2051, 2
        %v2099 = vrot.slane %v2051, 4
        %v2132 = vadd.f32 %v1905, %v2036
        %v2133 = vadd.f32 %v1946, %v2068
        %v2134 = vadd.f32 %v1947, %v2069
        %v2135 = vadd.f32 %v1948, %v2037
        %v2136 = vadd.f32 %v1907, %v2070
        %v2137 = vadd.f32 %v1949, %v2071
        %v2138 = vadd.f32 %v1950, %v2038
        %v2139 = vadd.f32 %v1951, %v2072
        %v2140 = vadd.f32 %v1910, %v2073
        %v2141 = vadd.f32 %v1952, %v2039
        %v2142 = vadd.f32 %v1953, %v2074
        %v2143 = vadd.f32 %v1954, %v2075
        %v2144 = vadd.f32 %v1912, %v2040
        %v2145 = vadd.f32 %v1955, %v2076
        %v2146 = vadd.f32 %v1956, %v2077
        %v2147 = vadd.f32 %v1957, %v2041
        %v2148 = vadd.f32 %v1915, %v2078
        %v2149 = vadd.f32 %v1958, %v2079
        %v2150 = vadd.f32 %v1959, %v2042
        %v2151 = vadd.f32 %v1960, %v2080
        %v2152 = vadd.f32 %v1917, %v2081
        %v2153 = vadd.f32 %v1961, %v2043
        %v2154 = vadd.f32 %v1962, %v2082
        %v2155 = vadd.f32 %v1963, %v2083
        %v2156 = vadd.f32 %v1920, %v2044
        %v2157 = vadd.f32 %v1964, %v2084
        %v2158 = vadd.f32 %v1965, %v2085
        %v2159 = vadd.f32 %v1966, %v2045
        %v2160 = vadd.f32 %v1922, %v2086
        %v2161 = vadd.f32 %v1967, %v2087
        %v2162 = vadd.f32 %v1968, %v2046
        %v2163 = vadd.f32 %v1969, %v2088
        %v2164 = vadd.f32 %v1925, %v2089
        %v2165 = vadd.f32 %v1970, %v2047
        %v2166 = vadd.f32 %v1971, %v2090
        %v2167 = vadd.f32 %v1972, %v2091
        %v2168 = vadd.f32 %v1927, %v2048
        %v2169 = vadd.f32 %v1973, %v2092
        %v2170 = vadd.f32 %v1974, %v2093
        %v2171 = vadd.f32 %v1975, %v2049
        %v2172 = vadd.f32 %v1930, %v2094
        %v2173 = vadd.f32 %v1976, %v2095
        %v2174 = vadd.f32 %v1977, %v2050
        %v2175 = vadd.f32 %v1978, %v2096
        %v2176 = vadd.f32 %v1932, %v2097
        %v2177 = vadd.f32 %v1979, %v2051
        %v2178 = vadd.f32 %v1980, %v2098
        %v2179 = vadd.f32 %v1981, %v2099
        %v2180 = vmul.f32 %v2132, 0.25
        %v2181 = vmul.f32 %v2133, 0.25
        %v2182 = vmul.f32 %v2134, 0.25
        %v2183 = vmul.f32 %v2135, 0.25
        %v2184 = vmul.f32 %v2136, 0.25
        %v2185 = vmul.f32 %v2137, 0.25
        %v2186 = vmul.f32 %v2138, 0.25
        %v2187 = vmul.f32 %v2139, 0.25
        %v2188 = vmul.f32 %v2140, 0.25
        %v2189 = vmul.f32 %v2141, 0.25
        %v2190 = vmul.f32 %v2142, 0.25
        %v2191 = vmul.f32 %v2143, 0.25
        %v2192 = vmul.f32 %v2144, 0.25
        %v2193 = vmul.f32 %v2145, 0.25
        %v2194 = vmul.f32 %v2146, 0.25
        %v2195 = vmul.f32 %v2147, 0.25
        %v2196 = vmul.f32 %v2148, 0.25
        %v2197 = vmul.f32 %v2149, 0.25
        %v2198 = vmul.f32 %v2150, 0.25
        %v2199 = vmul.f32 %v2151, 0.25
        %v2200 = vmul.f32 %v2152, 0.25
        %v2201 = vmul.f32 %v2153, 0.25
        %v2202 = vmul.f32 %v2154, 0.25
        %v2203 = vmul.f32 %v2155, 0.25
        %v2204 = vmul.f32 %v2156, 0.25
        %v2205 = vmul.f32 %v2157, 0.25
        %v2206 = vmul.f32 %v2158, 0.25
        %v2207 = vmul.f32 %v2159, 0.25
        %v2208 = vmul.f32 %v2160, 0.25
        %v2209 = vmul.f32 %v2161, 0.25
        %v2210 = vmul.f32 %v2162, 0.25
        %v2211 = vmul.f32 %v2163, 0.25
        %v2212 = vmul.f32 %v2164, 0.25
        %v2213 = vmul.f32 %v2165, 0.25
        %v2214 = vmul.f32 %v2166, 0.25
        %v2215 = vmul.f32 %v2167, 0.25
        %v2216 = vmul.f32 %v2168, 0.25
        %v2217 = vmul.f32 %v2169, 0.25
        %v2218 = vmul.f32 %v2170, 0.25
        %v2219 = vmul.f32 %v2171, 0.25
        %v2220 = vmul.f32 %v2172, 0.25
        %v2221 = vmul.f32 %v2173, 0.25
        %v2222 = vmul.f32 %v2174, 0.25
        %v2223 = vmul.f32 %v2175, 0.25
        %v2224 = vmul.f32 %v2176, 0.25
        %v2225 = vmul.f32 %v2177, 0.25
        %v2226 = vmul.f32 %v2178, 0.25
        %v2227 = vmul.f32 %v2179, 0.25
        %2276 = vrot.lane.b32.xlu0 %v2180, 112
        %v2277 = vpop.permute.xlu0 %2276
        %2278 = vrot.lane.b32.xlu0 %v2181, 112
        %v2279 = vpop.permute.xlu0 %2278
        %2280 = vrot.lane.b32.xlu0 %v2182, 112
        %v2281 = vpop.permute.xlu0 %2280
        %2282 = vrot.lane.b32.xlu0 %v2183, 112
        %v2283 = vpop.permute.xlu0 %2282
        %2284 = vrot.lane.b32.xlu0 %v2184, 112
        %v2285 = vpop.permute.xlu0 %2284
        %2286 = vrot.lane.b32.xlu0 %v2185, 112
        %v2287 = vpop.permute.xlu0 %2286
        %2288 = vrot.lane.b32.xlu0 %v2186, 112
        %v2289 = vpop.permute.xlu0 %2288
        %2290 = vrot.lane.b32.xlu0 %v2187, 112
        %v2291 = vpop.permute.xlu0 %2290
        %2292 = vrot.lane.b32.xlu0 %v2188, 112
        %v2293 = vpop.permute.xlu0 %2292
        %2294 = vrot.lane.b32.xlu0 %v2189, 112
        %v2295 = vpop.permute.xlu0 %2294
        %2296 = vrot.lane.b32.xlu0 %v2190, 112
        %v2297 = vpop.permute.xlu0 %2296
        %2298 = vrot.lane.b32.xlu0 %v2191, 112
        %v2299 = vpop.permute.xlu0 %2298
        %2300 = vrot.lane.b32.xlu0 %v2192, 112
        %v2301 = vpop.permute.xlu0 %2300
        %2302 = vrot.lane.b32.xlu0 %v2193, 112
        %v2303 = vpop.permute.xlu0 %2302
        %2304 = vrot.lane.b32.xlu0 %v2194, 112
        %v2305 = vpop.permute.xlu0 %2304
        %2306 = vrot.lane.b32.xlu0 %v2195, 112
        %v2307 = vpop.permute.xlu0 %2306
        %2308 = vrot.lane.b32.xlu0 %v2196, 112
        %v2309 = vpop.permute.xlu0 %2308
        %2310 = vrot.lane.b32.xlu0 %v2197, 112
        %v2311 = vpop.permute.xlu0 %2310
        %2312 = vrot.lane.b32.xlu0 %v2198, 112
        %v2313 = vpop.permute.xlu0 %2312
        %2314 = vrot.lane.b32.xlu0 %v2199, 112
        %v2315 = vpop.permute.xlu0 %2314
        %2316 = vrot.lane.b32.xlu0 %v2200, 112
        %v2317 = vpop.permute.xlu0 %2316
        %2318 = vrot.lane.b32.xlu0 %v2201, 112
        %v2319 = vpop.permute.xlu0 %2318
        %2320 = vrot.lane.b32.xlu0 %v2202, 112
        %v2321 = vpop.permute.xlu0 %2320
        %2322 = vrot.lane.b32.xlu0 %v2203, 112
        %v2323 = vpop.permute.xlu0 %2322
        %2324 = vrot.lane.b32.xlu0 %v2204, 112
        %v2325 = vpop.permute.xlu0 %2324
        %2326 = vrot.lane.b32.xlu0 %v2205, 112
        %v2327 = vpop.permute.xlu0 %2326
        %2328 = vrot.lane.b32.xlu0 %v2206, 112
        %v2329 = vpop.permute.xlu0 %2328
        %2330 = vrot.lane.b32.xlu0 %v2207, 112
        %v2331 = vpop.permute.xlu0 %2330
        %2332 = vrot.lane.b32.xlu0 %v2208, 112
        %v2333 = vpop.permute.xlu0 %2332
        %2334 = vrot.lane.b32.xlu0 %v2209, 112
        %v2335 = vpop.permute.xlu0 %2334
        %2336 = vrot.lane.b32.xlu0 %v2210, 112
        %v2337 = vpop.permute.xlu0 %2336
        %2338 = vrot.lane.b32.xlu0 %v2211, 112
        %v2339 = vpop.permute.xlu0 %2338
        %2340 = vrot.lane.b32.xlu0 %v2212, 112
        %v2341 = vpop.permute.xlu0 %2340
        %2342 = vrot.lane.b32.xlu0 %v2213, 112
        %v2343 = vpop.permute.xlu0 %2342
        %2344 = vrot.lane.b32.xlu0 %v2214, 112
        %v2345 = vpop.permute.xlu0 %2344
        %2346 = vrot.lane.b32.xlu0 %v2215, 112
        %v2347 = vpop.permute.xlu0 %2346
        %2348 = vrot.lane.b32.xlu0 %v2216, 112
        %v2349 = vpop.permute.xlu0 %2348
        %2350 = vrot.lane.b32.xlu0 %v2217, 112
        %v2351 = vpop.permute.xlu0 %2350
        %2352 = vrot.lane.b32.xlu0 %v2218, 112
        %v2353 = vpop.permute.xlu0 %2352
        %2354 = vrot.lane.b32.xlu0 %v2219, 112
        %v2355 = vpop.permute.xlu0 %2354
        %2356 = vrot.lane.b32.xlu0 %v2220, 112
        %v2357 = vpop.permute.xlu0 %2356
        %2358 = vrot.lane.b32.xlu0 %v2221, 112
        %v2359 = vpop.permute.xlu0 %2358
        %2360 = vrot.lane.b32.xlu0 %v2222, 112
        %v2361 = vpop.permute.xlu0 %2360
        %2362 = vrot.lane.b32.xlu0 %v2223, 112
        %v2363 = vpop.permute.xlu0 %2362
        %2364 = vrot.lane.b32.xlu0 %v2224, 112
        %v2365 = vpop.permute.xlu0 %2364
        %2366 = vrot.lane.b32.xlu0 %v2225, 112
        %v2367 = vpop.permute.xlu0 %2366
        %2368 = vrot.lane.b32.xlu0 %v2226, 112
        %v2369 = vpop.permute.xlu0 %2368
        %2370 = vrot.lane.b32.xlu0 %v2227, 112
        %v2371 = vpop.permute.xlu0 %2370
        %2372 = vst [vmem:[#allocation1] ss:$4 sm:$0xff] %v2180
        %s2373 = scalar_lea.vmem [#allocation1], 1
        %2374 = vst [vmem:[%s2373] ss:$4 sm:$0xff] %v2181
        %s2375 = scalar_lea.vmem [#allocation1], 2
        %2376 = vst [vmem:[%s2375] ss:$4 sm:$0xff] %v2182
        %v2377 = vld.sshfl [vmem:[#allocation1] sm:$0xff pattern:$0x73625140]
        %s2378 = scalar_lea.vmem [#allocation1], 32
        %2379 = vst [vmem:[%s2378] ss:$4 sm:$0xff] %v2183
        %s2380 = scalar_lea.vmem [#allocation1], 33
        %2381 = vst [vmem:[%s2380] ss:$4 sm:$0xff] %v2184
        %s2382 = scalar_lea.vmem [#allocation1], 34
        %2383 = vst [vmem:[%s2382] ss:$4 sm:$0xff] %v2185
        %v2384 = vld.sshfl [vmem:[#allocation1 + $0x20] sm:$0xff pattern:$0x73625140]
        %2385 = vst [vmem:[#allocation1] ss:$4 sm:$0xff] %v2186
        %2386 = vst [vmem:[%s2373] ss:$4 sm:$0xff] %v2187
        %2387 = vst [vmem:[%s2375] ss:$4 sm:$0xff] %v2188
        %v2388 = vld.sshfl [vmem:[#allocation1] sm:$0xff pattern:$0x73625140]
        %2389 = vst [vmem:[%s2378] ss:$4 sm:$0xff] %v2189
        %2390 = vst [vmem:[%s2380] ss:$4 sm:$0xff] %v2190
        %2391 = vst [vmem:[%s2382] ss:$4 sm:$0xff] %v2191
        %v2392 = vld.sshfl [vmem:[#allocation1 + $0x20] sm:$0xff pattern:$0x73625140]
        %2393 = vst [vmem:[#allocation1] ss:$4 sm:$0xff] %v2192
        %2394 = vst [vmem:[%s2373] ss:$4 sm:$0xff] %v2193
        %2395 = vst [vmem:[%s2375] ss:$4 sm:$0xff] %v2194
        %v2396 = vld.sshfl [vmem:[#allocation1] sm:$0xff pattern:$0x73625140]
        %2397 = vst [vmem:[%s2378] ss:$4 sm:$0xff] %v2195
        %2398 = vst [vmem:[%s2380] ss:$4 sm:$0xff] %v2196
        %2399 = vst [vmem:[%s2382] ss:$4 sm:$0xff] %v2197
        %v2400 = vld.sshfl [vmem:[#allocation1 + $0x20] sm:$0xff pattern:$0x73625140]
        %2401 = vst [vmem:[#allocation1] ss:$4 sm:$0xff] %v2198
        %2402 = vst [vmem:[%s2373] ss:$4 sm:$0xff] %v2199
        %2403 = vst [vmem:[%s2375] ss:$4 sm:$0xff] %v2200
        %v2404 = vld.sshfl [vmem:[#allocation1] sm:$0xff pattern:$0x73625140]
        %2405 = vst [vmem:[%s2378] ss:$4 sm:$0xff] %v2201
        %2406 = vst [vmem:[%s2380] ss:$4 sm:$0xff] %v2202
        %2407 = vst [vmem:[%s2382] ss:$4 sm:$0xff] %v2203
        %v2408 = vld.sshfl [vmem:[#allocation1 + $0x20] sm:$0xff pattern:$0x73625140]
        %2409 = vst [vmem:[#allocation1] ss:$4 sm:$0xff] %v2204
        %2410 = vst [vmem:[%s2373] ss:$4 sm:$0xff] %v2205
        %2411 = vst [vmem:[%s2375] ss:$4 sm:$0xff] %v2206
        %v2412 = vld.sshfl [vmem:[#allocation1] sm:$0xff pattern:$0x73625140]
        %2413 = vst [vmem:[%s2378] ss:$4 sm:$0xff] %v2207
        %2414 = vst [vmem:[%s2380] ss:$4 sm:$0xff] %v2208
        %2415 = vst [vmem:[%s2382] ss:$4 sm:$0xff] %v2209
        %v2416 = vld.sshfl [vmem:[#allocation1 + $0x20] sm:$0xff pattern:$0x73625140]
        %2417 = vst [vmem:[#allocation1] ss:$4 sm:$0xff] %v2210
        %2418 = vst [vmem:[%s2373] ss:$4 sm:$0xff] %v2211
        %2419 = vst [vmem:[%s2375] ss:$4 sm:$0xff] %v2212
        %v2420 = vld.sshfl [vmem:[#allocation1] sm:$0xff pattern:$0x73625140]
        %2421 = vst [vmem:[%s2378] ss:$4 sm:$0xff] %v2213
        %2422 = vst [vmem:[%s2380] ss:$4 sm:$0xff] %v2214
        %2423 = vst [vmem:[%s2382] ss:$4 sm:$0xff] %v2215
        %v2424 = vld.sshfl [vmem:[#allocation1 + $0x20] sm:$0xff pattern:$0x73625140]
        %2425 = vst [vmem:[#allocation1] ss:$4 sm:$0xff] %v2216
        %2426 = vst [vmem:[%s2373] ss:$4 sm:$0xff] %v2217
        %2427 = vst [vmem:[%s2375] ss:$4 sm:$0xff] %v2218
        %v2428 = vld.sshfl [vmem:[#allocation1] sm:$0xff pattern:$0x73625140]
        %2429 = vst [vmem:[%s2378] ss:$4 sm:$0xff] %v2219
        %2430 = vst [vmem:[%s2380] ss:$4 sm:$0xff] %v2220
        %2431 = vst [vmem:[%s2382] ss:$4 sm:$0xff] %v2221
        %v2432 = vld.sshfl [vmem:[#allocation1 + $0x20] sm:$0xff pattern:$0x73625140]
        %2433 = vst [vmem:[#allocation1] ss:$4 sm:$0xff] %v2222
        %2434 = vst [vmem:[%s2373] ss:$4 sm:$0xff] %v2223
        %2435 = vst [vmem:[%s2375] ss:$4 sm:$0xff] %v2224
        %v2436 = vld.sshfl [vmem:[#allocation1] sm:$0xff pattern:$0x73625140]
        %2437 = vst [vmem:[%s2378] ss:$4 sm:$0xff] %v2225
        %2438 = vst [vmem:[%s2380] ss:$4 sm:$0xff] %v2226
        %2439 = vst [vmem:[%s2382] ss:$4 sm:$0xff] %v2227
        %v2440 = vld.sshfl [vmem:[#allocation1 + $0x20] sm:$0xff pattern:$0x73625140]
        %2441 = vst [vmem:[#allocation1] ss:$4 sm:$0xff] %v2277
        %2442 = vst [vmem:[%s2373] ss:$4 sm:$0xff] %v2279
        %2443 = vst [vmem:[%s2375] ss:$4 sm:$0xff] %v2281
        %v2444 = vld.sshfl [vmem:[#allocation1] sm:$0xff pattern:$0x73625140]
        %2445 = vst [vmem:[%s2378] ss:$4 sm:$0xff] %v2283
        %2446 = vst [vmem:[%s2380] ss:$4 sm:$0xff] %v2285
        %2447 = vst [vmem:[%s2382] ss:$4 sm:$0xff] %v2287
        %v2448 = vld.sshfl [vmem:[#allocation1 + $0x20] sm:$0xff pattern:$0x73625140]
        %2449 = vst [vmem:[#allocation1] ss:$4 sm:$0xff] %v2289
        %2450 = vst [vmem:[%s2373] ss:$4 sm:$0xff] %v2291
        %2451 = vst [vmem:[%s2375] ss:$4 sm:$0xff] %v2293
        %v2452 = vld.sshfl [vmem:[#allocation1] sm:$0xff pattern:$0x73625140]
        %2453 = vst [vmem:[%s2378] ss:$4 sm:$0xff] %v2295
        %2454 = vst [vmem:[%s2380] ss:$4 sm:$0xff] %v2297
        %2455 = vst [vmem:[%s2382] ss:$4 sm:$0xff] %v2299
        %v2456 = vld.sshfl [vmem:[#allocation1 + $0x20] sm:$0xff pattern:$0x73625140]
        %2457 = vst [vmem:[#allocation1] ss:$4 sm:$0xff] %v2301
        %2458 = vst [vmem:[%s2373] ss:$4 sm:$0xff] %v2303
        %2459 = vst [vmem:[%s2375] ss:$4 sm:$0xff] %v2305
        %v2460 = vld.sshfl [vmem:[#allocation1] sm:$0xff pattern:$0x73625140]
        %2461 = vst [vmem:[%s2378] ss:$4 sm:$0xff] %v2307
        %2462 = vst [vmem:[%s2380] ss:$4 sm:$0xff] %v2309
        %2463 = vst [vmem:[%s2382] ss:$4 sm:$0xff] %v2311
        %v2464 = vld.sshfl [vmem:[#allocation1 + $0x20] sm:$0xff pattern:$0x73625140]
        %2465 = vst [vmem:[#allocation1] ss:$4 sm:$0xff] %v2313
        %2466 = vst [vmem:[%s2373] ss:$4 sm:$0xff] %v2315
        %2467 = vst [vmem:[%s2375] ss:$4 sm:$0xff] %v2317
        %v2468 = vld.sshfl [vmem:[#allocation1] sm:$0xff pattern:$0x73625140]
        %2469 = vst [vmem:[%s2378] ss:$4 sm:$0xff] %v2319
        %2470 = vst [vmem:[%s2380] ss:$4 sm:$0xff] %v2321
        %2471 = vst [vmem:[%s2382] ss:$4 sm:$0xff] %v2323
        %v2472 = vld.sshfl [vmem:[#allocation1 + $0x20] sm:$0xff pattern:$0x73625140]
        %2473 = vst [vmem:[#allocation1] ss:$4 sm:$0xff] %v2325
        %2474 = vst [vmem:[%s2373] ss:$4 sm:$0xff] %v2327
        %2475 = vst [vmem:[%s2375] ss:$4 sm:$0xff] %v2329
        %v2476 = vld.sshfl [vmem:[#allocation1] sm:$0xff pattern:$0x73625140]
        %2477 = vst [vmem:[%s2378] ss:$4 sm:$0xff] %v2331
        %2478 = vst [vmem:[%s2380] ss:$4 sm:$0xff] %v2333
        %2479 = vst [vmem:[%s2382] ss:$4 sm:$0xff] %v2335
        %v2480 = vld.sshfl [vmem:[#allocation1 + $0x20] sm:$0xff pattern:$0x73625140]
        %2481 = vst [vmem:[#allocation1] ss:$4 sm:$0xff] %v2337
        %2482 = vst [vmem:[%s2373] ss:$4 sm:$0xff] %v2339
        %2483 = vst [vmem:[%s2375] ss:$4 sm:$0xff] %v2341
        %v2484 = vld.sshfl [vmem:[#allocation1] sm:$0xff pattern:$0x73625140]
        %2485 = vst [vmem:[%s2378] ss:$4 sm:$0xff] %v2343
        %2486 = vst [vmem:[%s2380] ss:$4 sm:$0xff] %v2345
        %2487 = vst [vmem:[%s2382] ss:$4 sm:$0xff] %v2347
        %v2488 = vld.sshfl [vmem:[#allocation1 + $0x20] sm:$0xff pattern:$0x73625140]
        %2489 = vst [vmem:[#allocation1] ss:$4 sm:$0xff] %v2349
        %2490 = vst [vmem:[%s2373] ss:$4 sm:$0xff] %v2351
        %2491 = vst [vmem:[%s2375] ss:$4 sm:$0xff] %v2353
        %v2492 = vld.sshfl [vmem:[#allocation1] sm:$0xff pattern:$0x73625140]
        %2493 = vst [vmem:[%s2378] ss:$4 sm:$0xff] %v2355
        %2494 = vst [vmem:[%s2380] ss:$4 sm:$0xff] %v2357
        %2495 = vst [vmem:[%s2382] ss:$4 sm:$0xff] %v2359
        %v2496 = vld.sshfl [vmem:[#allocation1 + $0x20] sm:$0xff pattern:$0x73625140]
        %2497 = vst [vmem:[#allocation1] ss:$4 sm:$0xff] %v2361
        %2498 = vst [vmem:[%s2373] ss:$4 sm:$0xff] %v2363
        %2499 = vst [vmem:[%s2375] ss:$4 sm:$0xff] %v2365
        %v2500 = vld.sshfl [vmem:[#allocation1] sm:$0xff pattern:$0x73625140]
        %2501 = vst [vmem:[%s2378] ss:$4 sm:$0xff] %v2367
        %2502 = vst [vmem:[%s2380] ss:$4 sm:$0xff] %v2369
        %2503 = vst [vmem:[%s2382] ss:$4 sm:$0xff] %v2371
        %v2504 = vld.sshfl [vmem:[#allocation1 + $0x20] sm:$0xff pattern:$0x73625140]
        %v2537 = vpack.c.bf16 %v2377, %v2377
        %v2538 = vpack.c.bf16 %v2384, %v2384
        %v2539 = vpack.c.bf16 %v2388, %v2388
        %v2540 = vpack.c.bf16 %v2392, %v2392
        %v2541 = vpack.c.bf16 %v2396, %v2396
        %v2542 = vpack.c.bf16 %v2400, %v2400
        %v2543 = vpack.c.bf16 %v2404, %v2404
        %v2544 = vpack.c.bf16 %v2408, %v2408
        %v2545 = vpack.c.bf16 %v2412, %v2412
        %v2546 = vpack.c.bf16 %v2416, %v2416
        %v2547 = vpack.c.bf16 %v2420, %v2420
        %v2548 = vpack.c.bf16 %v2424, %v2424
        %v2549 = vpack.c.bf16 %v2428, %v2428
        %v2550 = vpack.c.bf16 %v2432, %v2432
        %v2551 = vpack.c.bf16 %v2436, %v2436
        %v2552 = vpack.c.bf16 %v2440, %v2440
        %v2553 = vpack.c.bf16 %v2444, %v2444
        %v2554 = vpack.c.bf16 %v2448, %v2448
        %v2555 = vpack.c.bf16 %v2452, %v2452
        %v2556 = vpack.c.bf16 %v2456, %v2456
        %v2557 = vpack.c.bf16 %v2460, %v2460
        %v2558 = vpack.c.bf16 %v2464, %v2464
        %v2559 = vpack.c.bf16 %v2468, %v2468
        %v2560 = vpack.c.bf16 %v2472, %v2472
        %v2561 = vpack.c.bf16 %v2476, %v2476
        %v2562 = vpack.c.bf16 %v2480, %v2480
        %v2563 = vpack.c.bf16 %v2484, %v2484
        %v2564 = vpack.c.bf16 %v2488, %v2488
        %v2565 = vpack.c.bf16 %v2492, %v2492
        %v2566 = vpack.c.bf16 %v2496, %v2496
        %v2567 = vpack.c.bf16 %v2500, %v2500
        %v2568 = vpack.c.bf16 %v2504, %v2504
        %2617 = vrot.lane.b32.xlu0 %v2132, 112
        %v2618 = vpop.permute.xlu0 %2617
        %2619 = vrot.lane.b32.xlu0 %v2133, 112
        %v2620 = vpop.permute.xlu0 %2619
        %2621 = vrot.lane.b32.xlu0 %v2134, 112
        %v2622 = vpop.permute.xlu0 %2621
        %2623 = vrot.lane.b32.xlu0 %v2135, 112
        %v2624 = vpop.permute.xlu0 %2623
        %2625 = vrot.lane.b32.xlu0 %v2136, 112
        %v2626 = vpop.permute.xlu0 %2625
        %2627 = vrot.lane.b32.xlu0 %v2137, 112
        %v2628 = vpop.permute.xlu0 %2627
        %2629 = vrot.lane.b32.xlu0 %v2138, 112
        %v2630 = vpop.permute.xlu0 %2629
        %2631 = vrot.lane.b32.xlu0 %v2139, 112
        %v2632 = vpop.permute.xlu0 %2631
        %2633 = vrot.lane.b32.xlu0 %v2140, 112
        %v2634 = vpop.permute.xlu0 %2633
        %2635 = vrot.lane.b32.xlu0 %v2141, 112
        %v2636 = vpop.permute.xlu0 %2635
        %2637 = vrot.lane.b32.xlu0 %v2142, 112
        %v2638 = vpop.permute.xlu0 %2637
        %2639 = vrot.lane.b32.xlu0 %v2143, 112
        %v2640 = vpop.permute.xlu0 %2639
        %2641 = vrot.lane.b32.xlu0 %v2144, 112
        %v2642 = vpop.permute.xlu0 %2641
        %2643 = vrot.lane.b32.xlu0 %v2145, 112
        %v2644 = vpop.permute.xlu0 %2643
        %2645 = vrot.lane.b32.xlu0 %v2146, 112
        %v2646 = vpop.permute.xlu0 %2645
        %2647 = vrot.lane.b32.xlu0 %v2147, 112
        %v2648 = vpop.permute.xlu0 %2647
        %2649 = vrot.lane.b32.xlu0 %v2148, 112
        %v2650 = vpop.permute.xlu0 %2649
        %2651 = vrot.lane.b32.xlu0 %v2149, 112
        %v2652 = vpop.permute.xlu0 %2651
        %2653 = vrot.lane.b32.xlu0 %v2150, 112
        %v2654 = vpop.permute.xlu0 %2653
        %2655 = vrot.lane.b32.xlu0 %v2151, 112
        %v2656 = vpop.permute.xlu0 %2655
        %2657 = vrot.lane.b32.xlu0 %v2152, 112
        %v2658 = vpop.permute.xlu0 %2657
        %2659 = vrot.lane.b32.xlu0 %v2153, 112
        %v2660 = vpop.permute.xlu0 %2659
        %2661 = vrot.lane.b32.xlu0 %v2154, 112
        %v2662 = vpop.permute.xlu0 %2661
        %2663 = vrot.lane.b32.xlu0 %v2155, 112
        %v2664 = vpop.permute.xlu0 %2663
        %2665 = vrot.lane.b32.xlu0 %v2156, 112
        %v2666 = vpop.permute.xlu0 %2665
        %2667 = vrot.lane.b32.xlu0 %v2157, 112
        %v2668 = vpop.permute.xlu0 %2667
        %2669 = vrot.lane.b32.xlu0 %v2158, 112
        %v2670 = vpop.permute.xlu0 %2669
        %2671 = vrot.lane.b32.xlu0 %v2159, 112
        %v2672 = vpop.permute.xlu0 %2671
        %2673 = vrot.lane.b32.xlu0 %v2160, 112
        %v2674 = vpop.permute.xlu0 %2673
        %2675 = vrot.lane.b32.xlu0 %v2161, 112
        %v2676 = vpop.permute.xlu0 %2675
        %2677 = vrot.lane.b32.xlu0 %v2162, 112
        %v2678 = vpop.permute.xlu0 %2677
        %2679 = vrot.lane.b32.xlu0 %v2163, 112
        %v2680 = vpop.permute.xlu0 %2679
        %2681 = vrot.lane.b32.xlu0 %v2164, 112
        %v2682 = vpop.permute.xlu0 %2681
        %2683 = vrot.lane.b32.xlu0 %v2165, 112
        %v2684 = vpop.permute.xlu0 %2683
        %2685 = vrot.lane.b32.xlu0 %v2166, 112
        %v2686 = vpop.permute.xlu0 %2685
        %2687 = vrot.lane.b32.xlu0 %v2167, 112
        %v2688 = vpop.permute.xlu0 %2687
        %2689 = vrot.lane.b32.xlu0 %v2168, 112
        %v2690 = vpop.permute.xlu0 %2689
        %2691 = vrot.lane.b32.xlu0 %v2169, 112
        %v2692 = vpop.permute.xlu0 %2691
        %2693 = vrot.lane.b32.xlu0 %v2170, 112
        %v2694 = vpop.permute.xlu0 %2693
        %2695 = vrot.lane.b32.xlu0 %v2171, 112
        %v2696 = vpop.permute.xlu0 %2695
        %2697 = vrot.lane.b32.xlu0 %v2172, 112
        %v2698 = vpop.permute.xlu0 %2697
        %2699 = vrot.lane.b32.xlu0 %v2173, 112
        %v2700 = vpop.permute.xlu0 %2699
        %2701 = vrot.lane.b32.xlu0 %v2174, 112
        %v2702 = vpop.permute.xlu0 %2701
        %2703 = vrot.lane.b32.xlu0 %v2175, 112
        %v2704 = vpop.permute.xlu0 %2703
        %2705 = vrot.lane.b32.xlu0 %v2176, 112
        %v2706 = vpop.permute.xlu0 %2705
        %2707 = vrot.lane.b32.xlu0 %v2177, 112
        %v2708 = vpop.permute.xlu0 %2707
        %2709 = vrot.lane.b32.xlu0 %v2178, 112
        %v2710 = vpop.permute.xlu0 %2709
        %2711 = vrot.lane.b32.xlu0 %v2179, 112
        %v2712 = vpop.permute.xlu0 %2711
        %2713 = vst [vmem:[#allocation1] ss:$4 sm:$0xff] %v2132
        %s2714 = scalar_lea.vmem [#allocation1], 1
        %2715 = vst [vmem:[%s2714] ss:$4 sm:$0xff] %v2133
        %s2716 = scalar_lea.vmem [#allocation1], 2
        %2717 = vst [vmem:[%s2716] ss:$4 sm:$0xff] %v2134
        %v2718 = vld.sshfl [vmem:[#allocation1] sm:$0xff pattern:$0x73625140]
        %s2719 = scalar_lea.vmem [#allocation1], 32
        %2720 = vst [vmem:[%s2719] ss:$4 sm:$0xff] %v2135
        %s2721 = scalar_lea.vmem [#allocation1], 33
        %2722 = vst [vmem:[%s2721] ss:$4 sm:$0xff] %v2136
        %s2723 = scalar_lea.vmem [#allocation1], 34
        %2724 = vst [vmem:[%s2723] ss:$4 sm:$0xff] %v2137
        %v2725 = vld.sshfl [vmem:[#allocation1 + $0x20] sm:$0xff pattern:$0x73625140]
        %2726 = vst [vmem:[#allocation1] ss:$4 sm:$0xff] %v2138
        %2727 = vst [vmem:[%s2714] ss:$4 sm:$0xff] %v2139
        %2728 = vst [vmem:[%s2716] ss:$4 sm:$0xff] %v2140
        %v2729 = vld.sshfl [vmem:[#allocation1] sm:$0xff pattern:$0x73625140]
        %2730 = vst [vmem:[%s2719] ss:$4 sm:$0xff] %v2141
        %2731 = vst [vmem:[%s2721] ss:$4 sm:$0xff] %v2142
        %2732 = vst [vmem:[%s2723] ss:$4 sm:$0xff] %v2143
        %v2733 = vld.sshfl [vmem:[#allocation1 + $0x20] sm:$0xff pattern:$0x73625140]
        %2734 = vst [vmem:[#allocation1] ss:$4 sm:$0xff] %v2144
        %2735 = vst [vmem:[%s2714] ss:$4 sm:$0xff] %v2145
        %2736 = vst [vmem:[%s2716] ss:$4 sm:$0xff] %v2146
        %v2737 = vld.sshfl [vmem:[#allocation1] sm:$0xff pattern:$0x73625140]
        %2738 = vst [vmem:[%s2719] ss:$4 sm:$0xff] %v2147
        %2739 = vst [vmem:[%s2721] ss:$4 sm:$0xff] %v2148
        %2740 = vst [vmem:[%s2723] ss:$4 sm:$0xff] %v2149
        %v2741 = vld.sshfl [vmem:[#allocation1 + $0x20] sm:$0xff pattern:$0x73625140]
        %2742 = vst [vmem:[#allocation1] ss:$4 sm:$0xff] %v2150
        %2743 = vst [vmem:[%s2714] ss:$4 sm:$0xff] %v2151
        %2744 = vst [vmem:[%s2716] ss:$4 sm:$0xff] %v2152
        %v2745 = vld.sshfl [vmem:[#allocation1] sm:$0xff pattern:$0x73625140]
        %2746 = vst [vmem:[%s2719] ss:$4 sm:$0xff] %v2153
        %2747 = vst [vmem:[%s2721] ss:$4 sm:$0xff] %v2154
        %2748 = vst [vmem:[%s2723] ss:$4 sm:$0xff] %v2155
        %v2749 = vld.sshfl [vmem:[#allocation1 + $0x20] sm:$0xff pattern:$0x73625140]
        %2750 = vst [vmem:[#allocation1] ss:$4 sm:$0xff] %v2156
        %2751 = vst [vmem:[%s2714] ss:$4 sm:$0xff] %v2157
        %2752 = vst [vmem:[%s2716] ss:$4 sm:$0xff] %v2158
        %v2753 = vld.sshfl [vmem:[#allocation1] sm:$0xff pattern:$0x73625140]
        %2754 = vst [vmem:[%s2719] ss:$4 sm:$0xff] %v2159
        %2755 = vst [vmem:[%s2721] ss:$4 sm:$0xff] %v2160
        %2756 = vst [vmem:[%s2723] ss:$4 sm:$0xff] %v2161
        %v2757 = vld.sshfl [vmem:[#allocation1 + $0x20] sm:$0xff pattern:$0x73625140]
        %2758 = vst [vmem:[#allocation1] ss:$4 sm:$0xff] %v2162
        %2759 = vst [vmem:[%s2714] ss:$4 sm:$0xff] %v2163
        %2760 = vst [vmem:[%s2716] ss:$4 sm:$0xff] %v2164
        %v2761 = vld.sshfl [vmem:[#allocation1] sm:$0xff pattern:$0x73625140]
        %2762 = vst [vmem:[%s2719] ss:$4 sm:$0xff] %v2165
        %2763 = vst [vmem:[%s2721] ss:$4 sm:$0xff] %v2166
        %2764 = vst [vmem:[%s2723] ss:$4 sm:$0xff] %v2167
        %v2765 = vld.sshfl [vmem:[#allocation1 + $0x20] sm:$0xff pattern:$0x73625140]
        %2766 = vst [vmem:[#allocation1] ss:$4 sm:$0xff] %v2168
        %2767 = vst [vmem:[%s2714] ss:$4 sm:$0xff] %v2169
        %2768 = vst [vmem:[%s2716] ss:$4 sm:$0xff] %v2170
        %v2769 = vld.sshfl [vmem:[#allocation1] sm:$0xff pattern:$0x73625140]
        %2770 = vst [vmem:[%s2719] ss:$4 sm:$0xff] %v2171
        %2771 = vst [vmem:[%s2721] ss:$4 sm:$0xff] %v2172
        %2772 = vst [vmem:[%s2723] ss:$4 sm:$0xff] %v2173
        %v2773 = vld.sshfl [vmem:[#allocation1 + $0x20] sm:$0xff pattern:$0x73625140]
        %2774 = vst [vmem:[#allocation1] ss:$4 sm:$0xff] %v2174
        %2775 = vst [vmem:[%s2714] ss:$4 sm:$0xff] %v2175
        %2776 = vst [vmem:[%s2716] ss:$4 sm:$0xff] %v2176
        %v2777 = vld.sshfl [vmem:[#allocation1] sm:$0xff pattern:$0x73625140]
        %2778 = vst [vmem:[%s2719] ss:$4 sm:$0xff] %v2177
        %2779 = vst [vmem:[%s2721] ss:$4 sm:$0xff] %v2178
        %2780 = vst [vmem:[%s2723] ss:$4 sm:$0xff] %v2179
        %v2781 = vld.sshfl [vmem:[#allocation1 + $0x20] sm:$0xff pattern:$0x73625140]
        %2782 = vst [vmem:[#allocation1] ss:$4 sm:$0xff] %v2618
        %2783 = vst [vmem:[%s2714] ss:$4 sm:$0xff] %v2620
        %2784 = vst [vmem:[%s2716] ss:$4 sm:$0xff] %v2622
        %v2785 = vld.sshfl [vmem:[#allocation1] sm:$0xff pattern:$0x73625140]
        %2786 = vst [vmem:[%s2719] ss:$4 sm:$0xff] %v2624
        %2787 = vst [vmem:[%s2721] ss:$4 sm:$0xff] %v2626
        %2788 = vst [vmem:[%s2723] ss:$4 sm:$0xff] %v2628
        %v2789 = vld.sshfl [vmem:[#allocation1 + $0x20] sm:$0xff pattern:$0x73625140]
        %2790 = vst [vmem:[#allocation1] ss:$4 sm:$0xff] %v2630
        %2791 = vst [vmem:[%s2714] ss:$4 sm:$0xff] %v2632
        %2792 = vst [vmem:[%s2716] ss:$4 sm:$0xff] %v2634
        %v2793 = vld.sshfl [vmem:[#allocation1] sm:$0xff pattern:$0x73625140]
        %2794 = vst [vmem:[%s2719] ss:$4 sm:$0xff] %v2636
        %2795 = vst [vmem:[%s2721] ss:$4 sm:$0xff] %v2638
        %2796 = vst [vmem:[%s2723] ss:$4 sm:$0xff] %v2640
        %v2797 = vld.sshfl [vmem:[#allocation1 + $0x20] sm:$0xff pattern:$0x73625140]
        %2798 = vst [vmem:[#allocation1] ss:$4 sm:$0xff] %v2642
        %2799 = vst [vmem:[%s2714] ss:$4 sm:$0xff] %v2644
        %2800 = vst [vmem:[%s2716] ss:$4 sm:$0xff] %v2646
        %v2801 = vld.sshfl [vmem:[#allocation1] sm:$0xff pattern:$0x73625140]
        %2802 = vst [vmem:[%s2719] ss:$4 sm:$0xff] %v2648
        %2803 = vst [vmem:[%s2721] ss:$4 sm:$0xff] %v2650
        %2804 = vst [vmem:[%s2723] ss:$4 sm:$0xff] %v2652
        %v2805 = vld.sshfl [vmem:[#allocation1 + $0x20] sm:$0xff pattern:$0x73625140]
        %2806 = vst [vmem:[#allocation1] ss:$4 sm:$0xff] %v2654
        %2807 = vst [vmem:[%s2714] ss:$4 sm:$0xff] %v2656
        %2808 = vst [vmem:[%s2716] ss:$4 sm:$0xff] %v2658
        %v2809 = vld.sshfl [vmem:[#allocation1] sm:$0xff pattern:$0x73625140]
        %2810 = vst [vmem:[%s2719] ss:$4 sm:$0xff] %v2660
        %2811 = vst [vmem:[%s2721] ss:$4 sm:$0xff] %v2662
        %2812 = vst [vmem:[%s2723] ss:$4 sm:$0xff] %v2664
        %v2813 = vld.sshfl [vmem:[#allocation1 + $0x20] sm:$0xff pattern:$0x73625140]
        %2814 = vst [vmem:[#allocation1] ss:$4 sm:$0xff] %v2666
        %2815 = vst [vmem:[%s2714] ss:$4 sm:$0xff] %v2668
        %2816 = vst [vmem:[%s2716] ss:$4 sm:$0xff] %v2670
        %v2817 = vld.sshfl [vmem:[#allocation1] sm:$0xff pattern:$0x73625140]
        %2818 = vst [vmem:[%s2719] ss:$4 sm:$0xff] %v2672
        %2819 = vst [vmem:[%s2721] ss:$4 sm:$0xff] %v2674
        %2820 = vst [vmem:[%s2723] ss:$4 sm:$0xff] %v2676
        %v2821 = vld.sshfl [vmem:[#allocation1 + $0x20] sm:$0xff pattern:$0x73625140]
        %2822 = vst [vmem:[#allocation1] ss:$4 sm:$0xff] %v2678
        %2823 = vst [vmem:[%s2714] ss:$4 sm:$0xff] %v2680
        %2824 = vst [vmem:[%s2716] ss:$4 sm:$0xff] %v2682
        %v2825 = vld.sshfl [vmem:[#allocation1] sm:$0xff pattern:$0x73625140]
        %2826 = vst [vmem:[%s2719] ss:$4 sm:$0xff] %v2684
        %2827 = vst [vmem:[%s2721] ss:$4 sm:$0xff] %v2686
        %2828 = vst [vmem:[%s2723] ss:$4 sm:$0xff] %v2688
        %v2829 = vld.sshfl [vmem:[#allocation1 + $0x20] sm:$0xff pattern:$0x73625140]
        %2830 = vst [vmem:[#allocation1] ss:$4 sm:$0xff] %v2690
        %2831 = vst [vmem:[%s2714] ss:$4 sm:$0xff] %v2692
        %2832 = vst [vmem:[%s2716] ss:$4 sm:$0xff] %v2694
        %v2833 = vld.sshfl [vmem:[#allocation1] sm:$0xff pattern:$0x73625140]
        %2834 = vst [vmem:[%s2719] ss:$4 sm:$0xff] %v2696
        %2835 = vst [vmem:[%s2721] ss:$4 sm:$0xff] %v2698
        %2836 = vst [vmem:[%s2723] ss:$4 sm:$0xff] %v2700
        %v2837 = vld.sshfl [vmem:[#allocation1 + $0x20] sm:$0xff pattern:$0x73625140]
        %2838 = vst [vmem:[#allocation1] ss:$4 sm:$0xff] %v2702
        %2839 = vst [vmem:[%s2714] ss:$4 sm:$0xff] %v2704
        %2840 = vst [vmem:[%s2716] ss:$4 sm:$0xff] %v2706
        %v2841 = vld.sshfl [vmem:[#allocation1] sm:$0xff pattern:$0x73625140]
        %2842 = vst [vmem:[%s2719] ss:$4 sm:$0xff] %v2708
        %2843 = vst [vmem:[%s2721] ss:$4 sm:$0xff] %v2710
        %2844 = vst [vmem:[%s2723] ss:$4 sm:$0xff] %v2712
        %v2845 = vld.sshfl [vmem:[#allocation1 + $0x20] sm:$0xff pattern:$0x73625140]
        %v2878 = vpack.c.bf16 %v2718, %v2718
        %v2879 = vpack.c.bf16 %v2725, %v2725
        %v2880 = vpack.c.bf16 %v2729, %v2729
        %v2881 = vpack.c.bf16 %v2733, %v2733
        %v2882 = vpack.c.bf16 %v2737, %v2737
        %v2883 = vpack.c.bf16 %v2741, %v2741
        %v2884 = vpack.c.bf16 %v2745, %v2745
        %v2885 = vpack.c.bf16 %v2749, %v2749
        %v2886 = vpack.c.bf16 %v2753, %v2753
        %v2887 = vpack.c.bf16 %v2757, %v2757
        %v2888 = vpack.c.bf16 %v2761, %v2761
        %v2889 = vpack.c.bf16 %v2765, %v2765
        %v2890 = vpack.c.bf16 %v2769, %v2769
        %v2891 = vpack.c.bf16 %v2773, %v2773
        %v2892 = vpack.c.bf16 %v2777, %v2777
        %v2893 = vpack.c.bf16 %v2781, %v2781
        %v2894 = vpack.c.bf16 %v2785, %v2785
        %v2895 = vpack.c.bf16 %v2789, %v2789
        %v2896 = vpack.c.bf16 %v2793, %v2793
        %v2897 = vpack.c.bf16 %v2797, %v2797
        %v2898 = vpack.c.bf16 %v2801, %v2801
        %v2899 = vpack.c.bf16 %v2805, %v2805
        %v2900 = vpack.c.bf16 %v2809, %v2809
        %v2901 = vpack.c.bf16 %v2813, %v2813
        %v2902 = vpack.c.bf16 %v2817, %v2817
        %v2903 = vpack.c.bf16 %v2821, %v2821
        %v2904 = vpack.c.bf16 %v2825, %v2825
        %v2905 = vpack.c.bf16 %v2829, %v2829
        %v2906 = vpack.c.bf16 %v2833, %v2833
        %v2907 = vpack.c.bf16 %v2837, %v2837
        %v2908 = vpack.c.bf16 %v2841, %v2841
        %v2909 = vpack.c.bf16 %v2845, %v2845
        %2910 = vst [vmem:[#allocation1] ss:$4 sm:$0xff] %v2132
        %s2911 = scalar_lea.vmem [#allocation1], 1
        %2912 = vst [vmem:[%s2911] ss:$4 sm:$0xff] %v2133
        %s2913 = scalar_lea.vmem [#allocation1], 2
        %2914 = vst [vmem:[%s2913] ss:$4 sm:$0xff] %v2134
        %v2915 = vld.sshfl [vmem:[#allocation1] sm:$0xff pattern:$0x73625140]
        %s2916 = scalar_lea.vmem [#allocation1], 32
        %2917 = vst [vmem:[%s2916] ss:$4 sm:$0xff] %v2135
        %s2918 = scalar_lea.vmem [#allocation1], 33
        %2919 = vst [vmem:[%s2918] ss:$4 sm:$0xff] %v2136
        %s2920 = scalar_lea.vmem [#allocation1], 34
        %2921 = vst [vmem:[%s2920] ss:$4 sm:$0xff] %v2137
        %v2922 = vld.sshfl [vmem:[#allocation1 + $0x20] sm:$0xff pattern:$0x73625140]
        %2923 = vst [vmem:[#allocation1] ss:$4 sm:$0xff] %v2138
        %2924 = vst [vmem:[%s2911] ss:$4 sm:$0xff] %v2139
        %2925 = vst [vmem:[%s2913] ss:$4 sm:$0xff] %v2140
        %v2926 = vld.sshfl [vmem:[#allocation1] sm:$0xff pattern:$0x73625140]
        %2927 = vst [vmem:[%s2916] ss:$4 sm:$0xff] %v2141
        %2928 = vst [vmem:[%s2918] ss:$4 sm:$0xff] %v2142
        %2929 = vst [vmem:[%s2920] ss:$4 sm:$0xff] %v2143
        %v2930 = vld.sshfl [vmem:[#allocation1 + $0x20] sm:$0xff pattern:$0x73625140]
        %2931 = vst [vmem:[#allocation1] ss:$4 sm:$0xff] %v2144
        %2932 = vst [vmem:[%s2911] ss:$4 sm:$0xff] %v2145
        %2933 = vst [vmem:[%s2913] ss:$4 sm:$0xff] %v2146
        %v2934 = vld.sshfl [vmem:[#allocation1] sm:$0xff pattern:$0x73625140]
        %2935 = vst [vmem:[%s2916] ss:$4 sm:$0xff] %v2147
        %2936 = vst [vmem:[%s2918] ss:$4 sm:$0xff] %v2148
        %2937 = vst [vmem:[%s2920] ss:$4 sm:$0xff] %v2149
        %v2938 = vld.sshfl [vmem:[#allocation1 + $0x20] sm:$0xff pattern:$0x73625140]
        %2939 = vst [vmem:[#allocation1] ss:$4 sm:$0xff] %v2150
        %2940 = vst [vmem:[%s2911] ss:$4 sm:$0xff] %v2151
        %2941 = vst [vmem:[%s2913] ss:$4 sm:$0xff] %v2152
        %v2942 = vld.sshfl [vmem:[#allocation1] sm:$0xff pattern:$0x73625140]
        %2943 = vst [vmem:[%s2916] ss:$4 sm:$0xff] %v2153
        %2944 = vst [vmem:[%s2918] ss:$4 sm:$0xff] %v2154
        %2945 = vst [vmem:[%s2920] ss:$4 sm:$0xff] %v2155
        %v2946 = vld.sshfl [vmem:[#allocation1 + $0x20] sm:$0xff pattern:$0x73625140]
        %2947 = vst [vmem:[#allocation1] ss:$4 sm:$0xff] %v2156
        %2948 = vst [vmem:[%s2911] ss:$4 sm:$0xff] %v2157
        %2949 = vst [vmem:[%s2913] ss:$4 sm:$0xff] %v2158
        %v2950 = vld.sshfl [vmem:[#allocation1] sm:$0xff pattern:$0x73625140]
        %2951 = vst [vmem:[%s2916] ss:$4 sm:$0xff] %v2159
        %2952 = vst [vmem:[%s2918] ss:$4 sm:$0xff] %v2160
        %2953 = vst [vmem:[%s2920] ss:$4 sm:$0xff] %v2161
        %v2954 = vld.sshfl [vmem:[#allocation1 + $0x20] sm:$0xff pattern:$0x73625140]
        %2955 = vst [vmem:[#allocation1] ss:$4 sm:$0xff] %v2162
        %2956 = vst [vmem:[%s2911] ss:$4 sm:$0xff] %v2163
        %2957 = vst [vmem:[%s2913] ss:$4 sm:$0xff] %v2164
        %v2958 = vld.sshfl [vmem:[#allocation1] sm:$0xff pattern:$0x73625140]
        %2959 = vst [vmem:[%s2916] ss:$4 sm:$0xff] %v2165
        %2960 = vst [vmem:[%s2918] ss:$4 sm:$0xff] %v2166
        %2961 = vst [vmem:[%s2920] ss:$4 sm:$0xff] %v2167
        %v2962 = vld.sshfl [vmem:[#allocation1 + $0x20] sm:$0xff pattern:$0x73625140]
        %2963 = vst [vmem:[#allocation1] ss:$4 sm:$0xff] %v2168
        %2964 = vst [vmem:[%s2911] ss:$4 sm:$0xff] %v2169
        %2965 = vst [vmem:[%s2913] ss:$4 sm:$0xff] %v2170
        %v2966 = vld.sshfl [vmem:[#allocation1] sm:$0xff pattern:$0x73625140]
        %2967 = vst [vmem:[%s2916] ss:$4 sm:$0xff] %v2171
        %2968 = vst [vmem:[%s2918] ss:$4 sm:$0xff] %v2172
        %2969 = vst [vmem:[%s2920] ss:$4 sm:$0xff] %v2173
        %v2970 = vld.sshfl [vmem:[#allocation1 + $0x20] sm:$0xff pattern:$0x73625140]
        %2971 = vst [vmem:[#allocation1] ss:$4 sm:$0xff] %v2174
        %2972 = vst [vmem:[%s2911] ss:$4 sm:$0xff] %v2175
        %2973 = vst [vmem:[%s2913] ss:$4 sm:$0xff] %v2176
        %v2974 = vld.sshfl [vmem:[#allocation1] sm:$0xff pattern:$0x73625140]
        %2975 = vst [vmem:[%s2916] ss:$4 sm:$0xff] %v2177
        %2976 = vst [vmem:[%s2918] ss:$4 sm:$0xff] %v2178
        %2977 = vst [vmem:[%s2920] ss:$4 sm:$0xff] %v2179
        %v2978 = vld.sshfl [vmem:[#allocation1 + $0x20] sm:$0xff pattern:$0x73625140]
        %2979 = vst [vmem:[#allocation1] ss:$4 sm:$0xff] %v2618
        %2980 = vst [vmem:[%s2911] ss:$4 sm:$0xff] %v2620
        %2981 = vst [vmem:[%s2913] ss:$4 sm:$0xff] %v2622
        %v2982 = vld.sshfl [vmem:[#allocation1] sm:$0xff pattern:$0x73625140]
        %2983 = vst [vmem:[%s2916] ss:$4 sm:$0xff] %v2624
        %2984 = vst [vmem:[%s2918] ss:$4 sm:$0xff] %v2626
        %2985 = vst [vmem:[%s2920] ss:$4 sm:$0xff] %v2628
        %v2986 = vld.sshfl [vmem:[#allocation1 + $0x20] sm:$0xff pattern:$0x73625140]
        %2987 = vst [vmem:[#allocation1] ss:$4 sm:$0xff] %v2630
        %2988 = vst [vmem:[%s2911] ss:$4 sm:$0xff] %v2632
        %2989 = vst [vmem:[%s2913] ss:$4 sm:$0xff] %v2634
        %v2990 = vld.sshfl [vmem:[#allocation1] sm:$0xff pattern:$0x73625140]
        %2991 = vst [vmem:[%s2916] ss:$4 sm:$0xff] %v2636
        %2992 = vst [vmem:[%s2918] ss:$4 sm:$0xff] %v2638
        %2993 = vst [vmem:[%s2920] ss:$4 sm:$0xff] %v2640
        %v2994 = vld.sshfl [vmem:[#allocation1 + $0x20] sm:$0xff pattern:$0x73625140]
        %2995 = vst [vmem:[#allocation1] ss:$4 sm:$0xff] %v2642
        %2996 = vst [vmem:[%s2911] ss:$4 sm:$0xff] %v2644
        %2997 = vst [vmem:[%s2913] ss:$4 sm:$0xff] %v2646
        %v2998 = vld.sshfl [vmem:[#allocation1] sm:$0xff pattern:$0x73625140]
        %2999 = vst [vmem:[%s2916] ss:$4 sm:$0xff] %v2648
        %3000 = vst [vmem:[%s2918] ss:$4 sm:$0xff] %v2650
        %3001 = vst [vmem:[%s2920] ss:$4 sm:$0xff] %v2652
        %v3002 = vld.sshfl [vmem:[#allocation1 + $0x20] sm:$0xff pattern:$0x73625140]
        %3003 = vst [vmem:[#allocation1] ss:$4 sm:$0xff] %v2654
        %3004 = vst [vmem:[%s2911] ss:$4 sm:$0xff] %v2656
        %3005 = vst [vmem:[%s2913] ss:$4 sm:$0xff] %v2658
        %v3006 = vld.sshfl [vmem:[#allocation1] sm:$0xff pattern:$0x73625140]
        %3007 = vst [vmem:[%s2916] ss:$4 sm:$0xff] %v2660
        %3008 = vst [vmem:[%s2918] ss:$4 sm:$0xff] %v2662
        %3009 = vst [vmem:[%s2920] ss:$4 sm:$0xff] %v2664
        %v3010 = vld.sshfl [vmem:[#allocation1 + $0x20] sm:$0xff pattern:$0x73625140]
        %3011 = vst [vmem:[#allocation1] ss:$4 sm:$0xff] %v2666
        %3012 = vst [vmem:[%s2911] ss:$4 sm:$0xff] %v2668
        %3013 = vst [vmem:[%s2913] ss:$4 sm:$0xff] %v2670
        %v3014 = vld.sshfl [vmem:[#allocation1] sm:$0xff pattern:$0x73625140]
        %3015 = vst [vmem:[%s2916] ss:$4 sm:$0xff] %v2672
        %3016 = vst [vmem:[%s2918] ss:$4 sm:$0xff] %v2674
        %3017 = vst [vmem:[%s2920] ss:$4 sm:$0xff] %v2676
        %v3018 = vld.sshfl [vmem:[#allocation1 + $0x20] sm:$0xff pattern:$0x73625140]
        %3019 = vst [vmem:[#allocation1] ss:$4 sm:$0xff] %v2678
        %3020 = vst [vmem:[%s2911] ss:$4 sm:$0xff] %v2680
        %3021 = vst [vmem:[%s2913] ss:$4 sm:$0xff] %v2682
        %v3022 = vld.sshfl [vmem:[#allocation1] sm:$0xff pattern:$0x73625140]
        %3023 = vst [vmem:[%s2916] ss:$4 sm:$0xff] %v2684
        %3024 = vst [vmem:[%s2918] ss:$4 sm:$0xff] %v2686
        %3025 = vst [vmem:[%s2920] ss:$4 sm:$0xff] %v2688
        %v3026 = vld.sshfl [vmem:[#allocation1 + $0x20] sm:$0xff pattern:$0x73625140]
        %3027 = vst [vmem:[#allocation1] ss:$4 sm:$0xff] %v2690
        %3028 = vst [vmem:[%s2911] ss:$4 sm:$0xff] %v2692
        %3029 = vst [vmem:[%s2913] ss:$4 sm:$0xff] %v2694
        %v3030 = vld.sshfl [vmem:[#allocation1] sm:$0xff pattern:$0x73625140]
        %3031 = vst [vmem:[%s2916] ss:$4 sm:$0xff] %v2696
        %3032 = vst [vmem:[%s2918] ss:$4 sm:$0xff] %v2698
        %3033 = vst [vmem:[%s2920] ss:$4 sm:$0xff] %v2700
        %v3034 = vld.sshfl [vmem:[#allocation1 + $0x20] sm:$0xff pattern:$0x73625140]
        %3035 = vst [vmem:[#allocation1] ss:$4 sm:$0xff] %v2702
        %3036 = vst [vmem:[%s2911] ss:$4 sm:$0xff] %v2704
        %3037 = vst [vmem:[%s2913] ss:$4 sm:$0xff] %v2706
        %v3038 = vld.sshfl [vmem:[#allocation1] sm:$0xff pattern:$0x73625140]
        %3039 = vst [vmem:[%s2916] ss:$4 sm:$0xff] %v2708
        %3040 = vst [vmem:[%s2918] ss:$4 sm:$0xff] %v2710
        %3041 = vst [vmem:[%s2920] ss:$4 sm:$0xff] %v2712
        %v3042 = vld.sshfl [vmem:[#allocation1 + $0x20] sm:$0xff pattern:$0x73625140]
        %v3075 = vpack.c.bf16 %v2915, %v2915
        %v3076 = vpack.c.bf16 %v2922, %v2922
        %v3077 = vpack.c.bf16 %v2926, %v2926
        %v3078 = vpack.c.bf16 %v2930, %v2930
        %v3079 = vpack.c.bf16 %v2934, %v2934
        %v3080 = vpack.c.bf16 %v2938, %v2938
        %v3081 = vpack.c.bf16 %v2942, %v2942
        %v3082 = vpack.c.bf16 %v2946, %v2946
        %v3083 = vpack.c.bf16 %v2950, %v2950
        %v3084 = vpack.c.bf16 %v2954, %v2954
        %v3085 = vpack.c.bf16 %v2958, %v2958
        %v3086 = vpack.c.bf16 %v2962, %v2962
        %v3087 = vpack.c.bf16 %v2966, %v2966
        %v3088 = vpack.c.bf16 %v2970, %v2970
        %v3089 = vpack.c.bf16 %v2974, %v2974
        %v3090 = vpack.c.bf16 %v2978, %v2978
        %v3091 = vpack.c.bf16 %v2982, %v2982
        %v3092 = vpack.c.bf16 %v2986, %v2986
        %v3093 = vpack.c.bf16 %v2990, %v2990
        %v3094 = vpack.c.bf16 %v2994, %v2994
        %v3095 = vpack.c.bf16 %v2998, %v2998
        %v3096 = vpack.c.bf16 %v3002, %v3002
        %v3097 = vpack.c.bf16 %v3006, %v3006
        %v3098 = vpack.c.bf16 %v3010, %v3010
        %v3099 = vpack.c.bf16 %v3014, %v3014
        %v3100 = vpack.c.bf16 %v3018, %v3018
        %v3101 = vpack.c.bf16 %v3022, %v3022
        %v3102 = vpack.c.bf16 %v3026, %v3026
        %v3103 = vpack.c.bf16 %v3030, %v3030
        %v3104 = vpack.c.bf16 %v3034, %v3034
        %v3105 = vpack.c.bf16 %v3038, %v3038
        %v3106 = vpack.c.bf16 %v3042, %v3042
        %v3108 = vunpack.c.l.b16 %v2878
        %v3109 = vpack.c.b16 %v3108, %v3108
        %3110 = vrot.lane.b32.xlu0 %v3109, 96
        %v3111 = vpop.permute.xlu0 %3110
        %vm3112 = vcmask 130048
        %v3114 = vsel %vm3112, %v2537, 0
        %v3117 = vsel %vm3112, %v3111, 0
        %3119 = vmatpush.bf16.xpose.msra.mxu0 0
        %3120 = vmatpush.bf16.xpose.msra.mxu0 0
        %3121 = vmatpush.bf16.xpose.msra.mxu0 0
        %3122 = vmatpush.bf16.xpose.msra.mxu0 0
        %3123 = vmatpush.bf16.xpose.msra.mxu0 0
        %3124 = vmatpush.bf16.xpose.msra.mxu0 0
        %3125 = vmatpush.bf16.xpose.msra.mxu0 0
        %3126 = vmatpush.bf16.xpose.msra.mxu0 %v3117
        %3127 = vmatmul.bf16.gmra.mxu0 %v3114
        %v3128 = vpop.f32.mrf.mxu0
        %v3129 = vadd.f32 0.0, %v3128
        %v3130 = vpop.f32.mrf.mxu0
        %3131 = vdwg.mxu0
        %v3133 = vunpack.c.l.b16 %v2879
        %v3134 = vpack.c.b16 %v3133, %v3133
        %3135 = vrot.lane.b32.xlu0 %v3134, 96
        %v3136 = vpop.permute.xlu0 %3135
        %v3138 = vsel %vm3112, %v2538, 0
        %v3141 = vsel %vm3112, %v3136, 0
        %3143 = vmatpush.bf16.xpose.msra.mxu0 0
        %3144 = vmatpush.bf16.xpose.msra.mxu0 0
        %3145 = vmatpush.bf16.xpose.msra.mxu0 0
        %3146 = vmatpush.bf16.xpose.msra.mxu0 0
        %3147 = vmatpush.bf16.xpose.msra.mxu0 0
        %3148 = vmatpush.bf16.xpose.msra.mxu0 0
        %3149 = vmatpush.bf16.xpose.msra.mxu0 0
        %3150 = vmatpush.bf16.xpose.msra.mxu0 %v3141
        %3151 = vmatmul.bf16.gmra.mxu0 %v3138
        %v3152 = vpop.f32.mrf.mxu0
        %v3153 = vadd.f32 0.0, %v3152
        %v3154 = vpop.f32.mrf.mxu0
        %3155 = vdwg.mxu0
        %v3157 = vunpack.c.l.b16 %v2880
        %v3158 = vpack.c.b16 %v3157, %v3157
        %3159 = vrot.lane.b32.xlu0 %v3158, 96
        %v3160 = vpop.permute.xlu0 %3159
        %v3162 = vsel %vm3112, %v2539, 0
        %v3165 = vsel %vm3112, %v3160, 0
        %3167 = vmatpush.bf16.xpose.msra.mxu0 0
        %3168 = vmatpush.bf16.xpose.msra.mxu0 0
        %3169 = vmatpush.bf16.xpose.msra.mxu0 0
        %3170 = vmatpush.bf16.xpose.msra.mxu0 0
        %3171 = vmatpush.bf16.xpose.msra.mxu0 0
        %3172 = vmatpush.bf16.xpose.msra.mxu0 0
        %3173 = vmatpush.bf16.xpose.msra.mxu0 0
        %3174 = vmatpush.bf16.xpose.msra.mxu0 %v3165
        %3175 = vmatmul.bf16.gmra.mxu0 %v3162
        %v3176 = vpop.f32.mrf.mxu0
        %v3177 = vadd.f32 0.0, %v3176
        %v3178 = vpop.f32.mrf.mxu0
        %3179 = vdwg.mxu0
        %v3181 = vunpack.c.l.b16 %v2881
        %v3182 = vpack.c.b16 %v3181, %v3181
        %3183 = vrot.lane.b32.xlu0 %v3182, 96
        %v3184 = vpop.permute.xlu0 %3183
        %v3186 = vsel %vm3112, %v2540, 0
        %v3189 = vsel %vm3112, %v3184, 0
        %3191 = vmatpush.bf16.xpose.msra.mxu0 0
        %3192 = vmatpush.bf16.xpose.msra.mxu0 0
        %3193 = vmatpush.bf16.xpose.msra.mxu0 0
        %3194 = vmatpush.bf16.xpose.msra.mxu0 0
        %3195 = vmatpush.bf16.xpose.msra.mxu0 0
        %3196 = vmatpush.bf16.xpose.msra.mxu0 0
        %3197 = vmatpush.bf16.xpose.msra.mxu0 0
        %3198 = vmatpush.bf16.xpose.msra.mxu0 %v3189
        %3199 = vmatmul.bf16.gmra.mxu0 %v3186
        %v3200 = vpop.f32.mrf.mxu0
        %v3201 = vadd.f32 0.0, %v3200
        %v3202 = vpop.f32.mrf.mxu0
        %3203 = vdwg.mxu0
        %v3205 = vunpack.c.l.b16 %v2882
        %v3206 = vpack.c.b16 %v3205, %v3205
        %3207 = vrot.lane.b32.xlu0 %v3206, 96
        %v3208 = vpop.permute.xlu0 %3207
        %v3210 = vsel %vm3112, %v2541, 0
        %v3213 = vsel %vm3112, %v3208, 0
        %3215 = vmatpush.bf16.xpose.msra.mxu0 0
        %3216 = vmatpush.bf16.xpose.msra.mxu0 0
        %3217 = vmatpush.bf16.xpose.msra.mxu0 0
        %3218 = vmatpush.bf16.xpose.msra.mxu0 0
        %3219 = vmatpush.bf16.xpose.msra.mxu0 0
        %3220 = vmatpush.bf16.xpose.msra.mxu0 0
        %3221 = vmatpush.bf16.xpose.msra.mxu0 0
        %3222 = vmatpush.bf16.xpose.msra.mxu0 %v3213
        %3223 = vmatmul.bf16.gmra.mxu0 %v3210
        %v3224 = vpop.f32.mrf.mxu0
        %v3225 = vadd.f32 0.0, %v3224
        %v3226 = vpop.f32.mrf.mxu0
        %3227 = vdwg.mxu0
        %v3229 = vunpack.c.l.b16 %v2883
        %v3230 = vpack.c.b16 %v3229, %v3229
        %3231 = vrot.lane.b32.xlu0 %v3230, 96
        %v3232 = vpop.permute.xlu0 %3231
        %v3234 = vsel %vm3112, %v2542, 0
        %v3237 = vsel %vm3112, %v3232, 0
        %3239 = vmatpush.bf16.xpose.msra.mxu0 0
        %3240 = vmatpush.bf16.xpose.msra.mxu0 0
        %3241 = vmatpush.bf16.xpose.msra.mxu0 0
        %3242 = vmatpush.bf16.xpose.msra.mxu0 0
        %3243 = vmatpush.bf16.xpose.msra.mxu0 0
        %3244 = vmatpush.bf16.xpose.msra.mxu0 0
        %3245 = vmatpush.bf16.xpose.msra.mxu0 0
        %3246 = vmatpush.bf16.xpose.msra.mxu0 %v3237
        %3247 = vmatmul.bf16.gmra.mxu0 %v3234
        %v3248 = vpop.f32.mrf.mxu0
        %v3249 = vadd.f32 0.0, %v3248
        %v3250 = vpop.f32.mrf.mxu0
        %3251 = vdwg.mxu0
        %v3253 = vunpack.c.l.b16 %v2884
        %v3254 = vpack.c.b16 %v3253, %v3253
        %3255 = vrot.lane.b32.xlu0 %v3254, 96
        %v3256 = vpop.permute.xlu0 %3255
        %v3258 = vsel %vm3112, %v2543, 0
        %v3261 = vsel %vm3112, %v3256, 0
        %3263 = vmatpush.bf16.xpose.msra.mxu0 0
        %3264 = vmatpush.bf16.xpose.msra.mxu0 0
        %3265 = vmatpush.bf16.xpose.msra.mxu0 0
        %3266 = vmatpush.bf16.xpose.msra.mxu0 0
        %3267 = vmatpush.bf16.xpose.msra.mxu0 0
        %3268 = vmatpush.bf16.xpose.msra.mxu0 0
        %3269 = vmatpush.bf16.xpose.msra.mxu0 0
        %3270 = vmatpush.bf16.xpose.msra.mxu0 %v3261
        %3271 = vmatmul.bf16.gmra.mxu0 %v3258
        %v3272 = vpop.f32.mrf.mxu0
        %v3273 = vadd.f32 0.0, %v3272
        %v3274 = vpop.f32.mrf.mxu0
        %3275 = vdwg.mxu0
        %v3277 = vunpack.c.l.b16 %v2885
        %v3278 = vpack.c.b16 %v3277, %v3277
        %3279 = vrot.lane.b32.xlu0 %v3278, 96
        %v3280 = vpop.permute.xlu0 %3279
        %v3282 = vsel %vm3112, %v2544, 0
        %v3285 = vsel %vm3112, %v3280, 0
        %3287 = vmatpush.bf16.xpose.msra.mxu0 0
        %3288 = vmatpush.bf16.xpose.msra.mxu0 0
        %3289 = vmatpush.bf16.xpose.msra.mxu0 0
        %3290 = vmatpush.bf16.xpose.msra.mxu0 0
        %3291 = vmatpush.bf16.xpose.msra.mxu0 0
        %3292 = vmatpush.bf16.xpose.msra.mxu0 0
        %3293 = vmatpush.bf16.xpose.msra.mxu0 0
        %3294 = vmatpush.bf16.xpose.msra.mxu0 %v3285
        %3295 = vmatmul.bf16.gmra.mxu0 %v3282
        %v3296 = vpop.f32.mrf.mxu0
        %v3297 = vadd.f32 0.0, %v3296
        %v3298 = vpop.f32.mrf.mxu0
        %3299 = vdwg.mxu0
        %v3301 = vunpack.c.l.b16 %v2886
        %v3302 = vpack.c.b16 %v3301, %v3301
        %3303 = vrot.lane.b32.xlu0 %v3302, 96
        %v3304 = vpop.permute.xlu0 %3303
        %v3306 = vsel %vm3112, %v2545, 0
        %v3309 = vsel %vm3112, %v3304, 0
        %3311 = vmatpush.bf16.xpose.msra.mxu0 0
        %3312 = vmatpush.bf16.xpose.msra.mxu0 0
        %3313 = vmatpush.bf16.xpose.msra.mxu0 0
        %3314 = vmatpush.bf16.xpose.msra.mxu0 0
        %3315 = vmatpush.bf16.xpose.msra.mxu0 0
        %3316 = vmatpush.bf16.xpose.msra.mxu0 0
        %3317 = vmatpush.bf16.xpose.msra.mxu0 0
        %3318 = vmatpush.bf16.xpose.msra.mxu0 %v3309
        %3319 = vmatmul.bf16.gmra.mxu0 %v3306
        %v3320 = vpop.f32.mrf.mxu0
        %v3321 = vadd.f32 0.0, %v3320
        %v3322 = vpop.f32.mrf.mxu0
        %3323 = vdwg.mxu0
        %v3325 = vunpack.c.l.b16 %v2887
        %v3326 = vpack.c.b16 %v3325, %v3325
        %3327 = vrot.lane.b32.xlu0 %v3326, 96
        %v3328 = vpop.permute.xlu0 %3327
        %v3330 = vsel %vm3112, %v2546, 0
        %v3333 = vsel %vm3112, %v3328, 0
        %3335 = vmatpush.bf16.xpose.msra.mxu0 0
        %3336 = vmatpush.bf16.xpose.msra.mxu0 0
        %3337 = vmatpush.bf16.xpose.msra.mxu0 0
        %3338 = vmatpush.bf16.xpose.msra.mxu0 0
        %3339 = vmatpush.bf16.xpose.msra.mxu0 0
        %3340 = vmatpush.bf16.xpose.msra.mxu0 0
        %3341 = vmatpush.bf16.xpose.msra.mxu0 0
        %3342 = vmatpush.bf16.xpose.msra.mxu0 %v3333
        %3343 = vmatmul.bf16.gmra.mxu0 %v3330
        %v3344 = vpop.f32.mrf.mxu0
        %v3345 = vadd.f32 0.0, %v3344
        %v3346 = vpop.f32.mrf.mxu0
        %3347 = vdwg.mxu0
        %v3349 = vunpack.c.l.b16 %v2888
        %v3350 = vpack.c.b16 %v3349, %v3349
        %3351 = vrot.lane.b32.xlu0 %v3350, 96
        %v3352 = vpop.permute.xlu0 %3351
        %v3354 = vsel %vm3112, %v2547, 0
        %v3357 = vsel %vm3112, %v3352, 0
        %3359 = vmatpush.bf16.xpose.msra.mxu0 0
        %3360 = vmatpush.bf16.xpose.msra.mxu0 0
        %3361 = vmatpush.bf16.xpose.msra.mxu0 0
        %3362 = vmatpush.bf16.xpose.msra.mxu0 0
        %3363 = vmatpush.bf16.xpose.msra.mxu0 0
        %3364 = vmatpush.bf16.xpose.msra.mxu0 0
        %3365 = vmatpush.bf16.xpose.msra.mxu0 0
        %3366 = vmatpush.bf16.xpose.msra.mxu0 %v3357
        %3367 = vmatmul.bf16.gmra.mxu0 %v3354
        %v3368 = vpop.f32.mrf.mxu0
        %v3369 = vadd.f32 0.0, %v3368
        %v3370 = vpop.f32.mrf.mxu0
        %3371 = vdwg.mxu0
        %v3373 = vunpack.c.l.b16 %v2889
        %v3374 = vpack.c.b16 %v3373, %v3373
        %3375 = vrot.lane.b32.xlu0 %v3374, 96
        %v3376 = vpop.permute.xlu0 %3375
        %v3378 = vsel %vm3112, %v2548, 0
        %v3381 = vsel %vm3112, %v3376, 0
        %3383 = vmatpush.bf16.xpose.msra.mxu0 0
        %3384 = vmatpush.bf16.xpose.msra.mxu0 0
        %3385 = vmatpush.bf16.xpose.msra.mxu0 0
        %3386 = vmatpush.bf16.xpose.msra.mxu0 0
        %3387 = vmatpush.bf16.xpose.msra.mxu0 0
        %3388 = vmatpush.bf16.xpose.msra.mxu0 0
        %3389 = vmatpush.bf16.xpose.msra.mxu0 0
        %3390 = vmatpush.bf16.xpose.msra.mxu0 %v3381
        %3391 = vmatmul.bf16.gmra.mxu0 %v3378
        %v3392 = vpop.f32.mrf.mxu0
        %v3393 = vadd.f32 0.0, %v3392
        %v3394 = vpop.f32.mrf.mxu0
        %3395 = vdwg.mxu0
        %v3397 = vunpack.c.l.b16 %v2890
        %v3398 = vpack.c.b16 %v3397, %v3397
        %3399 = vrot.lane.b32.xlu0 %v3398, 96
        %v3400 = vpop.permute.xlu0 %3399
        %v3402 = vsel %vm3112, %v2549, 0
        %v3405 = vsel %vm3112, %v3400, 0
        %3407 = vmatpush.bf16.xpose.msra.mxu0 0
        %3408 = vmatpush.bf16.xpose.msra.mxu0 0
        %3409 = vmatpush.bf16.xpose.msra.mxu0 0
        %3410 = vmatpush.bf16.xpose.msra.mxu0 0
        %3411 = vmatpush.bf16.xpose.msra.mxu0 0
        %3412 = vmatpush.bf16.xpose.msra.mxu0 0
        %3413 = vmatpush.bf16.xpose.msra.mxu0 0
        %3414 = vmatpush.bf16.xpose.msra.mxu0 %v3405
        %3415 = vmatmul.bf16.gmra.mxu0 %v3402
        %v3416 = vpop.f32.mrf.mxu0
        %v3417 = vadd.f32 0.0, %v3416
        %v3418 = vpop.f32.mrf.mxu0
        %3419 = vdwg.mxu0
        %v3421 = vunpack.c.l.b16 %v2891
        %v3422 = vpack.c.b16 %v3421, %v3421
        %3423 = vrot.lane.b32.xlu0 %v3422, 96
        %v3424 = vpop.permute.xlu0 %3423
        %v3426 = vsel %vm3112, %v2550, 0
        %v3429 = vsel %vm3112, %v3424, 0
        %3431 = vmatpush.bf16.xpose.msra.mxu0 0
        %3432 = vmatpush.bf16.xpose.msra.mxu0 0
        %3433 = vmatpush.bf16.xpose.msra.mxu0 0
        %3434 = vmatpush.bf16.xpose.msra.mxu0 0
        %3435 = vmatpush.bf16.xpose.msra.mxu0 0
        %3436 = vmatpush.bf16.xpose.msra.mxu0 0
        %3437 = vmatpush.bf16.xpose.msra.mxu0 0
        %3438 = vmatpush.bf16.xpose.msra.mxu0 %v3429
        %3439 = vmatmul.bf16.gmra.mxu0 %v3426
        %v3440 = vpop.f32.mrf.mxu0
        %v3441 = vadd.f32 0.0, %v3440
        %v3442 = vpop.f32.mrf.mxu0
        %3443 = vdwg.mxu0
        %v3445 = vunpack.c.l.b16 %v2892
        %v3446 = vpack.c.b16 %v3445, %v3445
        %3447 = vrot.lane.b32.xlu0 %v3446, 96
        %v3448 = vpop.permute.xlu0 %3447
        %v3450 = vsel %vm3112, %v2551, 0
        %v3453 = vsel %vm3112, %v3448, 0
        %3455 = vmatpush.bf16.xpose.msra.mxu0 0
        %3456 = vmatpush.bf16.xpose.msra.mxu0 0
        %3457 = vmatpush.bf16.xpose.msra.mxu0 0
        %3458 = vmatpush.bf16.xpose.msra.mxu0 0
        %3459 = vmatpush.bf16.xpose.msra.mxu0 0
        %3460 = vmatpush.bf16.xpose.msra.mxu0 0
        %3461 = vmatpush.bf16.xpose.msra.mxu0 0
        %3462 = vmatpush.bf16.xpose.msra.mxu0 %v3453
        %3463 = vmatmul.bf16.gmra.mxu0 %v3450
        %v3464 = vpop.f32.mrf.mxu0
        %v3465 = vadd.f32 0.0, %v3464
        %v3466 = vpop.f32.mrf.mxu0
        %3467 = vdwg.mxu0
        %v3469 = vunpack.c.l.b16 %v2893
        %v3470 = vpack.c.b16 %v3469, %v3469
        %3471 = vrot.lane.b32.xlu0 %v3470, 96
        %v3472 = vpop.permute.xlu0 %3471
        %v3474 = vsel %vm3112, %v2552, 0
        %v3477 = vsel %vm3112, %v3472, 0
        %3479 = vmatpush.bf16.xpose.msra.mxu0 0
        %3480 = vmatpush.bf16.xpose.msra.mxu0 0
        %3481 = vmatpush.bf16.xpose.msra.mxu0 0
        %3482 = vmatpush.bf16.xpose.msra.mxu0 0
        %3483 = vmatpush.bf16.xpose.msra.mxu0 0
        %3484 = vmatpush.bf16.xpose.msra.mxu0 0
        %3485 = vmatpush.bf16.xpose.msra.mxu0 0
        %3486 = vmatpush.bf16.xpose.msra.mxu0 %v3477
        %3487 = vmatmul.bf16.gmra.mxu0 %v3474
        %v3488 = vpop.f32.mrf.mxu0
        %v3489 = vadd.f32 0.0, %v3488
        %v3490 = vpop.f32.mrf.mxu0
        %3491 = vdwg.mxu0
        %v3493 = vunpack.c.l.b16 %v2894
        %v3494 = vpack.c.b16 %v3493, %v3493
        %3495 = vrot.lane.b32.xlu0 %v3494, 96
        %v3496 = vpop.permute.xlu0 %3495
        %v3498 = vsel %vm3112, %v2553, 0
        %v3501 = vsel %vm3112, %v3496, 0
        %3503 = vmatpush.bf16.xpose.msra.mxu0 0
        %3504 = vmatpush.bf16.xpose.msra.mxu0 0
        %3505 = vmatpush.bf16.xpose.msra.mxu0 0
        %3506 = vmatpush.bf16.xpose.msra.mxu0 0
        %3507 = vmatpush.bf16.xpose.msra.mxu0 0
        %3508 = vmatpush.bf16.xpose.msra.mxu0 0
        %3509 = vmatpush.bf16.xpose.msra.mxu0 0
        %3510 = vmatpush.bf16.xpose.msra.mxu0 %v3501
        %3511 = vmatmul.bf16.gmra.mxu0 %v3498
        %v3512 = vpop.f32.mrf.mxu0
        %v3513 = vadd.f32 0.0, %v3512
        %v3514 = vpop.f32.mrf.mxu0
        %3515 = vdwg.mxu0
        %v3517 = vunpack.c.l.b16 %v2895
        %v3518 = vpack.c.b16 %v3517, %v3517
        %3519 = vrot.lane.b32.xlu0 %v3518, 96
        %v3520 = vpop.permute.xlu0 %3519
        %v3522 = vsel %vm3112, %v2554, 0
        %v3525 = vsel %vm3112, %v3520, 0
        %3527 = vmatpush.bf16.xpose.msra.mxu0 0
        %3528 = vmatpush.bf16.xpose.msra.mxu0 0
        %3529 = vmatpush.bf16.xpose.msra.mxu0 0
        %3530 = vmatpush.bf16.xpose.msra.mxu0 0
        %3531 = vmatpush.bf16.xpose.msra.mxu0 0
        %3532 = vmatpush.bf16.xpose.msra.mxu0 0
        %3533 = vmatpush.bf16.xpose.msra.mxu0 0
        %3534 = vmatpush.bf16.xpose.msra.mxu0 %v3525
        %3535 = vmatmul.bf16.gmra.mxu0 %v3522
        %v3536 = vpop.f32.mrf.mxu0
        %v3537 = vadd.f32 0.0, %v3536
        %v3538 = vpop.f32.mrf.mxu0
        %3539 = vdwg.mxu0
        %v3541 = vunpack.c.l.b16 %v2896
        %v3542 = vpack.c.b16 %v3541, %v3541
        %3543 = vrot.lane.b32.xlu0 %v3542, 96
        %v3544 = vpop.permute.xlu0 %3543
        %v3546 = vsel %vm3112, %v2555, 0
        %v3549 = vsel %vm3112, %v3544, 0
        %3551 = vmatpush.bf16.xpose.msra.mxu0 0
        %3552 = vmatpush.bf16.xpose.msra.mxu0 0
        %3553 = vmatpush.bf16.xpose.msra.mxu0 0
        %3554 = vmatpush.bf16.xpose.msra.mxu0 0
        %3555 = vmatpush.bf16.xpose.msra.mxu0 0
        %3556 = vmatpush.bf16.xpose.msra.mxu0 0
        %3557 = vmatpush.bf16.xpose.msra.mxu0 0
        %3558 = vmatpush.bf16.xpose.msra.mxu0 %v3549
        %3559 = vmatmul.bf16.gmra.mxu0 %v3546
        %v3560 = vpop.f32.mrf.mxu0
        %v3561 = vadd.f32 0.0, %v3560
        %v3562 = vpop.f32.mrf.mxu0
        %3563 = vdwg.mxu0
        %v3565 = vunpack.c.l.b16 %v2897
        %v3566 = vpack.c.b16 %v3565, %v3565
        %3567 = vrot.lane.b32.xlu0 %v3566, 96
        %v3568 = vpop.permute.xlu0 %3567
        %v3570 = vsel %vm3112, %v2556, 0
        %v3573 = vsel %vm3112, %v3568, 0
        %3575 = vmatpush.bf16.xpose.msra.mxu0 0
        %3576 = vmatpush.bf16.xpose.msra.mxu0 0
        %3577 = vmatpush.bf16.xpose.msra.mxu0 0
        %3578 = vmatpush.bf16.xpose.msra.mxu0 0
        %3579 = vmatpush.bf16.xpose.msra.mxu0 0
        %3580 = vmatpush.bf16.xpose.msra.mxu0 0
        %3581 = vmatpush.bf16.xpose.msra.mxu0 0
        %3582 = vmatpush.bf16.xpose.msra.mxu0 %v3573
        %3583 = vmatmul.bf16.gmra.mxu0 %v3570
        %v3584 = vpop.f32.mrf.mxu0
        %v3585 = vadd.f32 0.0, %v3584
        %v3586 = vpop.f32.mrf.mxu0
        %3587 = vdwg.mxu0
        %v3589 = vunpack.c.l.b16 %v2898
        %v3590 = vpack.c.b16 %v3589, %v3589
        %3591 = vrot.lane.b32.xlu0 %v3590, 96
        %v3592 = vpop.permute.xlu0 %3591
        %v3594 = vsel %vm3112, %v2557, 0
        %v3597 = vsel %vm3112, %v3592, 0
        %3599 = vmatpush.bf16.xpose.msra.mxu0 0
        %3600 = vmatpush.bf16.xpose.msra.mxu0 0
        %3601 = vmatpush.bf16.xpose.msra.mxu0 0
        %3602 = vmatpush.bf16.xpose.msra.mxu0 0
        %3603 = vmatpush.bf16.xpose.msra.mxu0 0
        %3604 = vmatpush.bf16.xpose.msra.mxu0 0
        %3605 = vmatpush.bf16.xpose.msra.mxu0 0
        %3606 = vmatpush.bf16.xpose.msra.mxu0 %v3597
        %3607 = vmatmul.bf16.gmra.mxu0 %v3594
        %v3608 = vpop.f32.mrf.mxu0
        %v3609 = vadd.f32 0.0, %v3608
        %v3610 = vpop.f32.mrf.mxu0
        %3611 = vdwg.mxu0
        %v3613 = vunpack.c.l.b16 %v2899
        %v3614 = vpack.c.b16 %v3613, %v3613
        %3615 = vrot.lane.b32.xlu0 %v3614, 96
        %v3616 = vpop.permute.xlu0 %3615
        %v3618 = vsel %vm3112, %v2558, 0
        %v3621 = vsel %vm3112, %v3616, 0
        %3623 = vmatpush.bf16.xpose.msra.mxu0 0
        %3624 = vmatpush.bf16.xpose.msra.mxu0 0
        %3625 = vmatpush.bf16.xpose.msra.mxu0 0
        %3626 = vmatpush.bf16.xpose.msra.mxu0 0
        %3627 = vmatpush.bf16.xpose.msra.mxu0 0
        %3628 = vmatpush.bf16.xpose.msra.mxu0 0
        %3629 = vmatpush.bf16.xpose.msra.mxu0 0
        %3630 = vmatpush.bf16.xpose.msra.mxu0 %v3621
        %3631 = vmatmul.bf16.gmra.mxu0 %v3618
        %v3632 = vpop.f32.mrf.mxu0
        %v3633 = vadd.f32 0.0, %v3632
        %v3634 = vpop.f32.mrf.mxu0
        %3635 = vdwg.mxu0
        %v3637 = vunpack.c.l.b16 %v2900
        %v3638 = vpack.c.b16 %v3637, %v3637
        %3639 = vrot.lane.b32.xlu0 %v3638, 96
        %v3640 = vpop.permute.xlu0 %3639
        %v3642 = vsel %vm3112, %v2559, 0
        %v3645 = vsel %vm3112, %v3640, 0
        %3647 = vmatpush.bf16.xpose.msra.mxu0 0
        %3648 = vmatpush.bf16.xpose.msra.mxu0 0
        %3649 = vmatpush.bf16.xpose.msra.mxu0 0
        %3650 = vmatpush.bf16.xpose.msra.mxu0 0
        %3651 = vmatpush.bf16.xpose.msra.mxu0 0
        %3652 = vmatpush.bf16.xpose.msra.mxu0 0
        %3653 = vmatpush.bf16.xpose.msra.mxu0 0
        %3654 = vmatpush.bf16.xpose.msra.mxu0 %v3645
        %3655 = vmatmul.bf16.gmra.mxu0 %v3642
        %v3656 = vpop.f32.mrf.mxu0
        %v3657 = vadd.f32 0.0, %v3656
        %v3658 = vpop.f32.mrf.mxu0
        %3659 = vdwg.mxu0
        %v3661 = vunpack.c.l.b16 %v2901
        %v3662 = vpack.c.b16 %v3661, %v3661
        %3663 = vrot.lane.b32.xlu0 %v3662, 96
        %v3664 = vpop.permute.xlu0 %3663
        %v3666 = vsel %vm3112, %v2560, 0
        %v3669 = vsel %vm3112, %v3664, 0
        %3671 = vmatpush.bf16.xpose.msra.mxu0 0
        %3672 = vmatpush.bf16.xpose.msra.mxu0 0
        %3673 = vmatpush.bf16.xpose.msra.mxu0 0
        %3674 = vmatpush.bf16.xpose.msra.mxu0 0
        %3675 = vmatpush.bf16.xpose.msra.mxu0 0
        %3676 = vmatpush.bf16.xpose.msra.mxu0 0
        %3677 = vmatpush.bf16.xpose.msra.mxu0 0
        %3678 = vmatpush.bf16.xpose.msra.mxu0 %v3669
        %3679 = vmatmul.bf16.gmra.mxu0 %v3666
        %v3680 = vpop.f32.mrf.mxu0
        %v3681 = vadd.f32 0.0, %v3680
        %v3682 = vpop.f32.mrf.mxu0
        %3683 = vdwg.mxu0
        %v3685 = vunpack.c.l.b16 %v2902
        %v3686 = vpack.c.b16 %v3685, %v3685
        %3687 = vrot.lane.b32.xlu0 %v3686, 96
        %v3688 = vpop.permute.xlu0 %3687
        %v3690 = vsel %vm3112, %v2561, 0
        %v3693 = vsel %vm3112, %v3688, 0
        %3695 = vmatpush.bf16.xpose.msra.mxu0 0
        %3696 = vmatpush.bf16.xpose.msra.mxu0 0
        %3697 = vmatpush.bf16.xpose.msra.mxu0 0
        %3698 = vmatpush.bf16.xpose.msra.mxu0 0
        %3699 = vmatpush.bf16.xpose.msra.mxu0 0
        %3700 = vmatpush.bf16.xpose.msra.mxu0 0
        %3701 = vmatpush.bf16.xpose.msra.mxu0 0
        %3702 = vmatpush.bf16.xpose.msra.mxu0 %v3693
        %3703 = vmatmul.bf16.gmra.mxu0 %v3690
        %v3704 = vpop.f32.mrf.mxu0
        %v3705 = vadd.f32 0.0, %v3704
        %v3706 = vpop.f32.mrf.mxu0
        %3707 = vdwg.mxu0
        %v3709 = vunpack.c.l.b16 %v2903
        %v3710 = vpack.c.b16 %v3709, %v3709
        %3711 = vrot.lane.b32.xlu0 %v3710, 96
        %v3712 = vpop.permute.xlu0 %3711
        %v3714 = vsel %vm3112, %v2562, 0
        %v3717 = vsel %vm3112, %v3712, 0
        %3719 = vmatpush.bf16.xpose.msra.mxu0 0
        %3720 = vmatpush.bf16.xpose.msra.mxu0 0
        %3721 = vmatpush.bf16.xpose.msra.mxu0 0
        %3722 = vmatpush.bf16.xpose.msra.mxu0 0
        %3723 = vmatpush.bf16.xpose.msra.mxu0 0
        %3724 = vmatpush.bf16.xpose.msra.mxu0 0
        %3725 = vmatpush.bf16.xpose.msra.mxu0 0
        %3726 = vmatpush.bf16.xpose.msra.mxu0 %v3717
        %3727 = vmatmul.bf16.gmra.mxu0 %v3714
        %v3728 = vpop.f32.mrf.mxu0
        %v3729 = vadd.f32 0.0, %v3728
        %v3730 = vpop.f32.mrf.mxu0
        %3731 = vdwg.mxu0
        %v3733 = vunpack.c.l.b16 %v2904
        %v3734 = vpack.c.b16 %v3733, %v3733
        %3735 = vrot.lane.b32.xlu0 %v3734, 96
        %v3736 = vpop.permute.xlu0 %3735
        %v3738 = vsel %vm3112, %v2563, 0
        %v3741 = vsel %vm3112, %v3736, 0
        %3743 = vmatpush.bf16.xpose.msra.mxu0 0
        %3744 = vmatpush.bf16.xpose.msra.mxu0 0
        %3745 = vmatpush.bf16.xpose.msra.mxu0 0
        %3746 = vmatpush.bf16.xpose.msra.mxu0 0
        %3747 = vmatpush.bf16.xpose.msra.mxu0 0
        %3748 = vmatpush.bf16.xpose.msra.mxu0 0
        %3749 = vmatpush.bf16.xpose.msra.mxu0 0
        %3750 = vmatpush.bf16.xpose.msra.mxu0 %v3741
        %3751 = vmatmul.bf16.gmra.mxu0 %v3738
        %v3752 = vpop.f32.mrf.mxu0
        %v3753 = vadd.f32 0.0, %v3752
        %v3754 = vpop.f32.mrf.mxu0
        %3755 = vdwg.mxu0
        %v3757 = vunpack.c.l.b16 %v2905
        %v3758 = vpack.c.b16 %v3757, %v3757
        %3759 = vrot.lane.b32.xlu0 %v3758, 96
        %v3760 = vpop.permute.xlu0 %3759
        %v3762 = vsel %vm3112, %v2564, 0
        %v3765 = vsel %vm3112, %v3760, 0
        %3767 = vmatpush.bf16.xpose.msra.mxu0 0
        %3768 = vmatpush.bf16.xpose.msra.mxu0 0
        %3769 = vmatpush.bf16.xpose.msra.mxu0 0
        %3770 = vmatpush.bf16.xpose.msra.mxu0 0
        %3771 = vmatpush.bf16.xpose.msra.mxu0 0
        %3772 = vmatpush.bf16.xpose.msra.mxu0 0
        %3773 = vmatpush.bf16.xpose.msra.mxu0 0
        %3774 = vmatpush.bf16.xpose.msra.mxu0 %v3765
        %3775 = vmatmul.bf16.gmra.mxu0 %v3762
        %v3776 = vpop.f32.mrf.mxu0
        %v3777 = vadd.f32 0.0, %v3776
        %v3778 = vpop.f32.mrf.mxu0
        %3779 = vdwg.mxu0
        %v3781 = vunpack.c.l.b16 %v2906
        %v3782 = vpack.c.b16 %v3781, %v3781
        %3783 = vrot.lane.b32.xlu0 %v3782, 96
        %v3784 = vpop.permute.xlu0 %3783
        %v3786 = vsel %vm3112, %v2565, 0
        %v3789 = vsel %vm3112, %v3784, 0
        %3791 = vmatpush.bf16.xpose.msra.mxu0 0
        %3792 = vmatpush.bf16.xpose.msra.mxu0 0
        %3793 = vmatpush.bf16.xpose.msra.mxu0 0
        %3794 = vmatpush.bf16.xpose.msra.mxu0 0
        %3795 = vmatpush.bf16.xpose.msra.mxu0 0
        %3796 = vmatpush.bf16.xpose.msra.mxu0 0
        %3797 = vmatpush.bf16.xpose.msra.mxu0 0
        %3798 = vmatpush.bf16.xpose.msra.mxu0 %v3789
        %3799 = vmatmul.bf16.gmra.mxu0 %v3786
        %v3800 = vpop.f32.mrf.mxu0
        %v3801 = vadd.f32 0.0, %v3800
        %v3802 = vpop.f32.mrf.mxu0
        %3803 = vdwg.mxu0
        %v3805 = vunpack.c.l.b16 %v2907
        %v3806 = vpack.c.b16 %v3805, %v3805
        %3807 = vrot.lane.b32.xlu0 %v3806, 96
        %v3808 = vpop.permute.xlu0 %3807
        %v3810 = vsel %vm3112, %v2566, 0
        %v3813 = vsel %vm3112, %v3808, 0
        %3815 = vmatpush.bf16.xpose.msra.mxu0 0
        %3816 = vmatpush.bf16.xpose.msra.mxu0 0
        %3817 = vmatpush.bf16.xpose.msra.mxu0 0
        %3818 = vmatpush.bf16.xpose.msra.mxu0 0
        %3819 = vmatpush.bf16.xpose.msra.mxu0 0
        %3820 = vmatpush.bf16.xpose.msra.mxu0 0
        %3821 = vmatpush.bf16.xpose.msra.mxu0 0
        %3822 = vmatpush.bf16.xpose.msra.mxu0 %v3813
        %3823 = vmatmul.bf16.gmra.mxu0 %v3810
        %v3824 = vpop.f32.mrf.mxu0
        %v3825 = vadd.f32 0.0, %v3824
        %v3826 = vpop.f32.mrf.mxu0
        %3827 = vdwg.mxu0
        %v3829 = vunpack.c.l.b16 %v2908
        %v3830 = vpack.c.b16 %v3829, %v3829
        %3831 = vrot.lane.b32.xlu0 %v3830, 96
        %v3832 = vpop.permute.xlu0 %3831
        %v3834 = vsel %vm3112, %v2567, 0
        %v3837 = vsel %vm3112, %v3832, 0
        %3839 = vmatpush.bf16.xpose.msra.mxu0 0
        %3840 = vmatpush.bf16.xpose.msra.mxu0 0
        %3841 = vmatpush.bf16.xpose.msra.mxu0 0
        %3842 = vmatpush.bf16.xpose.msra.mxu0 0
        %3843 = vmatpush.bf16.xpose.msra.mxu0 0
        %3844 = vmatpush.bf16.xpose.msra.mxu0 0
        %3845 = vmatpush.bf16.xpose.msra.mxu0 0
        %3846 = vmatpush.bf16.xpose.msra.mxu0 %v3837
        %3847 = vmatmul.bf16.gmra.mxu0 %v3834
        %v3848 = vpop.f32.mrf.mxu0
        %v3849 = vadd.f32 0.0, %v3848
        %v3850 = vpop.f32.mrf.mxu0
        %3851 = vdwg.mxu0
        %v3853 = vunpack.c.l.b16 %v2909
        %v3854 = vpack.c.b16 %v3853, %v3853
        %3855 = vrot.lane.b32.xlu0 %v3854, 96
        %v3856 = vpop.permute.xlu0 %3855
        %v3858 = vsel %vm3112, %v2568, 0
        %v3861 = vsel %vm3112, %v3856, 0
        %3863 = vmatpush.bf16.xpose.msra.mxu0 0
        %3864 = vmatpush.bf16.xpose.msra.mxu0 0
        %3865 = vmatpush.bf16.xpose.msra.mxu0 0
        %3866 = vmatpush.bf16.xpose.msra.mxu0 0
        %3867 = vmatpush.bf16.xpose.msra.mxu0 0
        %3868 = vmatpush.bf16.xpose.msra.mxu0 0
        %3869 = vmatpush.bf16.xpose.msra.mxu0 0
        %3870 = vmatpush.bf16.xpose.msra.mxu0 %v3861
        %3871 = vmatmul.bf16.gmra.mxu0 %v3858
        %v3872 = vpop.f32.mrf.mxu0
        %v3873 = vadd.f32 0.0, %v3872
        %v3874 = vpop.f32.mrf.mxu0
        %3875 = vdwg.mxu0
        %vm3876 = vcmask 46080
        %v3877 = vsel %vm3876, %v3129, -inf
        %3878 = vmax.xlane.f32.xlu0 %v3877
        %v3879 = vpop.xlane.xlu0 %3878
        %v3880 = vsel %vm3876, %v3153, -inf
        %3881 = vmax.xlane.f32.xlu0 %v3880
        %v3882 = vpop.xlane.xlu0 %3881
        %v3883 = vsel %vm3876, %v3177, -inf
        %3884 = vmax.xlane.f32.xlu0 %v3883
        %v3885 = vpop.xlane.xlu0 %3884
        %v3886 = vsel %vm3876, %v3201, -inf
        %3887 = vmax.xlane.f32.xlu0 %v3886
        %v3888 = vpop.xlane.xlu0 %3887
        %v3889 = vsel %vm3876, %v3225, -inf
        %3890 = vmax.xlane.f32.xlu0 %v3889
        %v3891 = vpop.xlane.xlu0 %3890
        %v3892 = vsel %vm3876, %v3249, -inf
        %3893 = vmax.xlane.f32.xlu0 %v3892
        %v3894 = vpop.xlane.xlu0 %3893
        %v3895 = vsel %vm3876, %v3273, -inf
        %3896 = vmax.xlane.f32.xlu0 %v3895
        %v3897 = vpop.xlane.xlu0 %3896
        %v3898 = vsel %vm3876, %v3297, -inf
        %3899 = vmax.xlane.f32.xlu0 %v3898
        %v3900 = vpop.xlane.xlu0 %3899
        %v3901 = vsel %vm3876, %v3321, -inf
        %3902 = vmax.xlane.f32.xlu0 %v3901
        %v3903 = vpop.xlane.xlu0 %3902
        %v3904 = vsel %vm3876, %v3345, -inf
        %3905 = vmax.xlane.f32.xlu0 %v3904
        %v3906 = vpop.xlane.xlu0 %3905
        %v3907 = vsel %vm3876, %v3369, -inf
        %3908 = vmax.xlane.f32.xlu0 %v3907
        %v3909 = vpop.xlane.xlu0 %3908
        %v3910 = vsel %vm3876, %v3393, -inf
        %3911 = vmax.xlane.f32.xlu0 %v3910
        %v3912 = vpop.xlane.xlu0 %3911
        %v3913 = vsel %vm3876, %v3417, -inf
        %3914 = vmax.xlane.f32.xlu0 %v3913
        %v3915 = vpop.xlane.xlu0 %3914
        %v3916 = vsel %vm3876, %v3441, -inf
        %3917 = vmax.xlane.f32.xlu0 %v3916
        %v3918 = vpop.xlane.xlu0 %3917
        %v3919 = vsel %vm3876, %v3465, -inf
        %3920 = vmax.xlane.f32.xlu0 %v3919
        %v3921 = vpop.xlane.xlu0 %3920
        %v3922 = vsel %vm3876, %v3489, -inf
        %3923 = vmax.xlane.f32.xlu0 %v3922
        %v3924 = vpop.xlane.xlu0 %3923
        %v3925 = vsel %vm3876, %v3513, -inf
        %3926 = vmax.xlane.f32.xlu0 %v3925
        %v3927 = vpop.xlane.xlu0 %3926
        %v3928 = vsel %vm3876, %v3537, -inf
        %3929 = vmax.xlane.f32.xlu0 %v3928
        %v3930 = vpop.xlane.xlu0 %3929
        %v3931 = vsel %vm3876, %v3561, -inf
        %3932 = vmax.xlane.f32.xlu0 %v3931
        %v3933 = vpop.xlane.xlu0 %3932
        %v3934 = vsel %vm3876, %v3585, -inf
        %3935 = vmax.xlane.f32.xlu0 %v3934
        %v3936 = vpop.xlane.xlu0 %3935
        %v3937 = vsel %vm3876, %v3609, -inf
        %3938 = vmax.xlane.f32.xlu0 %v3937
        %v3939 = vpop.xlane.xlu0 %3938
        %v3940 = vsel %vm3876, %v3633, -inf
        %3941 = vmax.xlane.f32.xlu0 %v3940
        %v3942 = vpop.xlane.xlu0 %3941
        %v3943 = vsel %vm3876, %v3657, -inf
        %3944 = vmax.xlane.f32.xlu0 %v3943
        %v3945 = vpop.xlane.xlu0 %3944
        %v3946 = vsel %vm3876, %v3681, -inf
        %3947 = vmax.xlane.f32.xlu0 %v3946
        %v3948 = vpop.xlane.xlu0 %3947
        %v3949 = vsel %vm3876, %v3705, -inf
        %3950 = vmax.xlane.f32.xlu0 %v3949
        %v3951 = vpop.xlane.xlu0 %3950
        %v3952 = vsel %vm3876, %v3729, -inf
        %3953 = vmax.xlane.f32.xlu0 %v3952
        %v3954 = vpop.xlane.xlu0 %3953
        %v3955 = vsel %vm3876, %v3753, -inf
        %3956 = vmax.xlane.f32.xlu0 %v3955
        %v3957 = vpop.xlane.xlu0 %3956
        %v3958 = vsel %vm3876, %v3777, -inf
        %3959 = vmax.xlane.f32.xlu0 %v3958
        %v3960 = vpop.xlane.xlu0 %3959
        %v3961 = vsel %vm3876, %v3801, -inf
        %3962 = vmax.xlane.f32.xlu0 %v3961
        %v3963 = vpop.xlane.xlu0 %3962
        %v3964 = vsel %vm3876, %v3825, -inf
        %3965 = vmax.xlane.f32.xlu0 %v3964
        %v3966 = vpop.xlane.xlu0 %3965
        %v3967 = vsel %vm3876, %v3849, -inf
        %3968 = vmax.xlane.f32.xlu0 %v3967
        %v3969 = vpop.xlane.xlu0 %3968
        %v3970 = vsel %vm3876, %v3873, -inf
        %3971 = vmax.xlane.f32.xlu0 %v3970
        %v3972 = vpop.xlane.xlu0 %3971
        %v3973 = vsub.f32 %v3129, %v3879
        %v3974 = vsub.f32 %v3153, %v3882
        %v3975 = vsub.f32 %v3177, %v3885
        %v3976 = vsub.f32 %v3201, %v3888
        %v3977 = vsub.f32 %v3225, %v3891
        %v3978 = vsub.f32 %v3249, %v3894
        %v3979 = vsub.f32 %v3273, %v3897
        %v3980 = vsub.f32 %v3297, %v3900
        %v3981 = vsub.f32 %v3321, %v3903
        %v3982 = vsub.f32 %v3345, %v3906
        %v3983 = vsub.f32 %v3369, %v3909
        %v3984 = vsub.f32 %v3393, %v3912
        %v3985 = vsub.f32 %v3417, %v3915
        %v3986 = vsub.f32 %v3441, %v3918
        %v3987 = vsub.f32 %v3465, %v3921
        %v3988 = vsub.f32 %v3489, %v3924
        %v3989 = vsub.f32 %v3513, %v3927
        %v3990 = vsub.f32 %v3537, %v3930
        %v3991 = vsub.f32 %v3561, %v3933
        %v3992 = vsub.f32 %v3585, %v3936
        %v3993 = vsub.f32 %v3609, %v3939
        %v3994 = vsub.f32 %v3633, %v3942
        %v3995 = vsub.f32 %v3657, %v3945
        %v3996 = vsub.f32 %v3681, %v3948
        %v3997 = vsub.f32 %v3705, %v3951
        %v3998 = vsub.f32 %v3729, %v3954
        %v3999 = vsub.f32 %v3753, %v3957
        %v4000 = vsub.f32 %v3777, %v3960
        %v4001 = vsub.f32 %v3801, %v3963
        %v4002 = vsub.f32 %v3825, %v3966
        %v4003 = vsub.f32 %v3849, %v3969
        %v4004 = vsub.f32 %v3873, %v3972
        %v4005 = vmul.f32 %v3973, 1.442695
        %v4006 = vpow.pop %v4005
        %v4007 = vmul.f32 %v3974, 1.442695
        %v4008 = vpow.pop %v4007
        %v4009 = vmul.f32 %v3975, 1.442695
        %v4010 = vpow.pop %v4009
        %v4011 = vmul.f32 %v3976, 1.442695
        %v4012 = vpow.pop %v4011
        %v4013 = vmul.f32 %v3977, 1.442695
        %v4014 = vpow.pop %v4013
        %v4015 = vmul.f32 %v3978, 1.442695
        %v4016 = vpow.pop %v4015
        %v4017 = vmul.f32 %v3979, 1.442695
        %v4018 = vpow.pop %v4017
        %v4019 = vmul.f32 %v3980, 1.442695
        %v4020 = vpow.pop %v4019
        %v4021 = vmul.f32 %v3981, 1.442695
        %v4022 = vpow.pop %v4021
        %v4023 = vmul.f32 %v3982, 1.442695
        %v4024 = vpow.pop %v4023
        %v4025 = vmul.f32 %v3983, 1.442695
        %v4026 = vpow.pop %v4025
        %v4027 = vmul.f32 %v3984, 1.442695
        %v4028 = vpow.pop %v4027
        %v4029 = vmul.f32 %v3985, 1.442695
        %v4030 = vpow.pop %v4029
        %v4031 = vmul.f32 %v3986, 1.442695
        %v4032 = vpow.pop %v4031
        %v4033 = vmul.f32 %v3987, 1.442695
        %v4034 = vpow.pop %v4033
        %v4035 = vmul.f32 %v3988, 1.442695
        %v4036 = vpow.pop %v4035
        %v4037 = vmul.f32 %v3989, 1.442695
        %v4038 = vpow.pop %v4037
        %v4039 = vmul.f32 %v3990, 1.442695
        %v4040 = vpow.pop %v4039
        %v4041 = vmul.f32 %v3991, 1.442695
        %v4042 = vpow.pop %v4041
        %v4043 = vmul.f32 %v3992, 1.442695
        %v4044 = vpow.pop %v4043
        %v4045 = vmul.f32 %v3993, 1.442695
        %v4046 = vpow.pop %v4045
        %v4047 = vmul.f32 %v3994, 1.442695
        %v4048 = vpow.pop %v4047
        %v4049 = vmul.f32 %v3995, 1.442695
        %v4050 = vpow.pop %v4049
        %v4051 = vmul.f32 %v3996, 1.442695
        %v4052 = vpow.pop %v4051
        %v4053 = vmul.f32 %v3997, 1.442695
        %v4054 = vpow.pop %v4053
        %v4055 = vmul.f32 %v3998, 1.442695
        %v4056 = vpow.pop %v4055
        %v4057 = vmul.f32 %v3999, 1.442695
        %v4058 = vpow.pop %v4057
        %v4059 = vmul.f32 %v4000, 1.442695
        %v4060 = vpow.pop %v4059
        %v4061 = vmul.f32 %v4001, 1.442695
        %v4062 = vpow.pop %v4061
        %v4063 = vmul.f32 %v4002, 1.442695
        %v4064 = vpow.pop %v4063
        %v4065 = vmul.f32 %v4003, 1.442695
        %v4066 = vpow.pop %v4065
        %v4067 = vmul.f32 %v4004, 1.442695
        %v4068 = vpow.pop %v4067
        %v4069 = vsel %vm3876, %v4006, 0.0
        %4070 = vadd.xlane.f32.xlu0 %v4069
        %v4071 = vpop.xlane.xlu0 %4070
        %v4072 = vsel %vm3876, %v4008, 0.0
        %4073 = vadd.xlane.f32.xlu0 %v4072
        %v4074 = vpop.xlane.xlu0 %4073
        %v4075 = vsel %vm3876, %v4010, 0.0
        %4076 = vadd.xlane.f32.xlu0 %v4075
        %v4077 = vpop.xlane.xlu0 %4076
        %v4078 = vsel %vm3876, %v4012, 0.0
        %4079 = vadd.xlane.f32.xlu0 %v4078
        %v4080 = vpop.xlane.xlu0 %4079
        %v4081 = vsel %vm3876, %v4014, 0.0
        %4082 = vadd.xlane.f32.xlu0 %v4081
        %v4083 = vpop.xlane.xlu0 %4082
        %v4084 = vsel %vm3876, %v4016, 0.0
        %4085 = vadd.xlane.f32.xlu0 %v4084
        %v4086 = vpop.xlane.xlu0 %4085
        %v4087 = vsel %vm3876, %v4018, 0.0
        %4088 = vadd.xlane.f32.xlu0 %v4087
        %v4089 = vpop.xlane.xlu0 %4088
        %v4090 = vsel %vm3876, %v4020, 0.0
        %4091 = vadd.xlane.f32.xlu0 %v4090
        %v4092 = vpop.xlane.xlu0 %4091
        %v4093 = vsel %vm3876, %v4022, 0.0
        %4094 = vadd.xlane.f32.xlu0 %v4093
        %v4095 = vpop.xlane.xlu0 %4094
        %v4096 = vsel %vm3876, %v4024, 0.0
        %4097 = vadd.xlane.f32.xlu0 %v4096
        %v4098 = vpop.xlane.xlu0 %4097
        %v4099 = vsel %vm3876, %v4026, 0.0
        %4100 = vadd.xlane.f32.xlu0 %v4099
        %v4101 = vpop.xlane.xlu0 %4100
        %v4102 = vsel %vm3876, %v4028, 0.0
        %4103 = vadd.xlane.f32.xlu0 %v4102
        %v4104 = vpop.xlane.xlu0 %4103
        %v4105 = vsel %vm3876, %v4030, 0.0
        %4106 = vadd.xlane.f32.xlu0 %v4105
        %v4107 = vpop.xlane.xlu0 %4106
        %v4108 = vsel %vm3876, %v4032, 0.0
        %4109 = vadd.xlane.f32.xlu0 %v4108
        %v4110 = vpop.xlane.xlu0 %4109
        %v4111 = vsel %vm3876, %v4034, 0.0
        %4112 = vadd.xlane.f32.xlu0 %v4111
        %v4113 = vpop.xlane.xlu0 %4112
        %v4114 = vsel %vm3876, %v4036, 0.0
        %4115 = vadd.xlane.f32.xlu0 %v4114
        %v4116 = vpop.xlane.xlu0 %4115
        %v4117 = vsel %vm3876, %v4038, 0.0
        %4118 = vadd.xlane.f32.xlu0 %v4117
        %v4119 = vpop.xlane.xlu0 %4118
        %v4120 = vsel %vm3876, %v4040, 0.0
        %4121 = vadd.xlane.f32.xlu0 %v4120
        %v4122 = vpop.xlane.xlu0 %4121
        %v4123 = vsel %vm3876, %v4042, 0.0
        %4124 = vadd.xlane.f32.xlu0 %v4123
        %v4125 = vpop.xlane.xlu0 %4124
        %v4126 = vsel %vm3876, %v4044, 0.0
        %4127 = vadd.xlane.f32.xlu0 %v4126
        %v4128 = vpop.xlane.xlu0 %4127
        %v4129 = vsel %vm3876, %v4046, 0.0
        %4130 = vadd.xlane.f32.xlu0 %v4129
        %v4131 = vpop.xlane.xlu0 %4130
        %v4132 = vsel %vm3876, %v4048, 0.0
        %4133 = vadd.xlane.f32.xlu0 %v4132
        %v4134 = vpop.xlane.xlu0 %4133
        %v4135 = vsel %vm3876, %v4050, 0.0
        %4136 = vadd.xlane.f32.xlu0 %v4135
        %v4137 = vpop.xlane.xlu0 %4136
        %v4138 = vsel %vm3876, %v4052, 0.0
        %4139 = vadd.xlane.f32.xlu0 %v4138
        %v4140 = vpop.xlane.xlu0 %4139
        %v4141 = vsel %vm3876, %v4054, 0.0
        %4142 = vadd.xlane.f32.xlu0 %v4141
        %v4143 = vpop.xlane.xlu0 %4142
        %v4144 = vsel %vm3876, %v4056, 0.0
        %4145 = vadd.xlane.f32.xlu0 %v4144
        %v4146 = vpop.xlane.xlu0 %4145
        %v4147 = vsel %vm3876, %v4058, 0.0
        %4148 = vadd.xlane.f32.xlu0 %v4147
        %v4149 = vpop.xlane.xlu0 %4148
        %v4150 = vsel %vm3876, %v4060, 0.0
        %4151 = vadd.xlane.f32.xlu0 %v4150
        %v4152 = vpop.xlane.xlu0 %4151
        %v4153 = vsel %vm3876, %v4062, 0.0
        %4154 = vadd.xlane.f32.xlu0 %v4153
        %v4155 = vpop.xlane.xlu0 %4154
        %v4156 = vsel %vm3876, %v4064, 0.0
        %4157 = vadd.xlane.f32.xlu0 %v4156
        %v4158 = vpop.xlane.xlu0 %4157
        %v4159 = vsel %vm3876, %v4066, 0.0
        %4160 = vadd.xlane.f32.xlu0 %v4159
        %v4161 = vpop.xlane.xlu0 %4160
        %v4162 = vsel %vm3876, %v4068, 0.0
        %4163 = vadd.xlane.f32.xlu0 %v4162
        %v4164 = vpop.xlane.xlu0 %4163
        %v4165 = vrcp.pop %v4071
        %v4166 = vrcp.pop %v4074
        %v4167 = vrcp.pop %v4077
        %v4168 = vrcp.pop %v4080
        %v4169 = vrcp.pop %v4083
        %v4170 = vrcp.pop %v4086
        %v4171 = vrcp.pop %v4089
        %v4172 = vrcp.pop %v4092
        %v4173 = vrcp.pop %v4095
        %v4174 = vrcp.pop %v4098
        %v4175 = vrcp.pop %v4101
        %v4176 = vrcp.pop %v4104
        %v4177 = vrcp.pop %v4107
        %v4178 = vrcp.pop %v4110
        %v4179 = vrcp.pop %v4113
        %v4180 = vrcp.pop %v4116
        %v4181 = vrcp.pop %v4119
        %v4182 = vrcp.pop %v4122
        %v4183 = vrcp.pop %v4125
        %v4184 = vrcp.pop %v4128
        %v4185 = vrcp.pop %v4131
        %v4186 = vrcp.pop %v4134
        %v4187 = vrcp.pop %v4137
        %v4188 = vrcp.pop %v4140
        %v4189 = vrcp.pop %v4143
        %v4190 = vrcp.pop %v4146
        %v4191 = vrcp.pop %v4149
        %v4192 = vrcp.pop %v4152
        %v4193 = vrcp.pop %v4155
        %v4194 = vrcp.pop %v4158
        %v4195 = vrcp.pop %v4161
        %v4196 = vrcp.pop %v4164
        %v4197 = vmul.f32 %v4006, %v4165
        %v4198 = vmul.f32 %v4008, %v4166
        %v4199 = vmul.f32 %v4010, %v4167
        %v4200 = vmul.f32 %v4012, %v4168
        %v4201 = vmul.f32 %v4014, %v4169
        %v4202 = vmul.f32 %v4016, %v4170
        %v4203 = vmul.f32 %v4018, %v4171
        %v4204 = vmul.f32 %v4020, %v4172
        %v4205 = vmul.f32 %v4022, %v4173
        %v4206 = vmul.f32 %v4024, %v4174
        %v4207 = vmul.f32 %v4026, %v4175
        %v4208 = vmul.f32 %v4028, %v4176
        %v4209 = vmul.f32 %v4030, %v4177
        %v4210 = vmul.f32 %v4032, %v4178
        %v4211 = vmul.f32 %v4034, %v4179
        %v4212 = vmul.f32 %v4036, %v4180
        %v4213 = vmul.f32 %v4038, %v4181
        %v4214 = vmul.f32 %v4040, %v4182
        %v4215 = vmul.f32 %v4042, %v4183
        %v4216 = vmul.f32 %v4044, %v4184
        %v4217 = vmul.f32 %v4046, %v4185
        %v4218 = vmul.f32 %v4048, %v4186
        %v4219 = vmul.f32 %v4050, %v4187
        %v4220 = vmul.f32 %v4052, %v4188
        %v4221 = vmul.f32 %v4054, %v4189
        %v4222 = vmul.f32 %v4056, %v4190
        %v4223 = vmul.f32 %v4058, %v4191
        %v4224 = vmul.f32 %v4060, %v4192
        %v4225 = vmul.f32 %v4062, %v4193
        %v4226 = vmul.f32 %v4064, %v4194
        %v4227 = vmul.f32 %v4066, %v4195
        %v4228 = vmul.f32 %v4068, %v4196
        %v4229 = vpack.c.bf16 %v4197, %v4197
        %v4230 = vpack.c.bf16 %v4198, %v4198
        %v4231 = vpack.c.bf16 %v4199, %v4199
        %v4232 = vpack.c.bf16 %v4200, %v4200
        %v4233 = vpack.c.bf16 %v4201, %v4201
        %v4234 = vpack.c.bf16 %v4202, %v4202
        %v4235 = vpack.c.bf16 %v4203, %v4203
        %v4236 = vpack.c.bf16 %v4204, %v4204
        %v4237 = vpack.c.bf16 %v4205, %v4205
        %v4238 = vpack.c.bf16 %v4206, %v4206
        %v4239 = vpack.c.bf16 %v4207, %v4207
        %v4240 = vpack.c.bf16 %v4208, %v4208
        %v4241 = vpack.c.bf16 %v4209, %v4209
        %v4242 = vpack.c.bf16 %v4210, %v4210
        %v4243 = vpack.c.bf16 %v4211, %v4211
        %v4244 = vpack.c.bf16 %v4212, %v4212
        %v4245 = vpack.c.bf16 %v4213, %v4213
        %v4246 = vpack.c.bf16 %v4214, %v4214
        %v4247 = vpack.c.bf16 %v4215, %v4215
        %v4248 = vpack.c.bf16 %v4216, %v4216
        %v4249 = vpack.c.bf16 %v4217, %v4217
        %v4250 = vpack.c.bf16 %v4218, %v4218
        %v4251 = vpack.c.bf16 %v4219, %v4219
        %v4252 = vpack.c.bf16 %v4220, %v4220
        %v4253 = vpack.c.bf16 %v4221, %v4221
        %v4254 = vpack.c.bf16 %v4222, %v4222
        %v4255 = vpack.c.bf16 %v4223, %v4223
        %v4256 = vpack.c.bf16 %v4224, %v4224
        %v4257 = vpack.c.bf16 %v4225, %v4225
        %v4258 = vpack.c.bf16 %v4226, %v4226
        %v4259 = vpack.c.bf16 %v4227, %v4227
        %v4260 = vpack.c.bf16 %v4228, %v4228
        %v4262 = vunpack.c.l.b16 %v3075
        %v4263 = vpack.c.b16 %v4262, %v4262
        %4264 = vrot.lane.b32.xlu0 %v4263, 64
        %v4265 = vpop.permute.xlu0 %4264
        %vm4266 = vcmask 48128
        %v4268 = vsel %vm4266, %v4229, 0
        %vm4270 = vcmask 1042432
        %v4272 = vsel %vm4270, %v4265, 0
        %4274 = vmatpush.bf16.msra.mxu0 0
        %4275 = vmatpush.bf16.msra.mxu0 0
        %4276 = vmatpush.bf16.msra.mxu0 0
        %4277 = vmatpush.bf16.msra.mxu0 0
        %4278 = vmatpush.bf16.msra.mxu0 0
        %4279 = vmatpush.bf16.msra.mxu0 0
        %4280 = vmatpush.bf16.msra.mxu0 0
        %4281 = vmatpush.bf16.msra.mxu0 %v4272
        %4282 = vmatmul.bf16.gmra.mxu0 %v4268
        %v4283 = vpop.f32.mrf.mxu0
        %v4284 = vadd.f32 0.0, %v4283
        %v4285 = vpop.f32.mrf.mxu0
        %4286 = vdwg.mxu0
        %v4288 = vunpack.c.l.b16 %v3076
        %v4289 = vpack.c.b16 %v4288, %v4288
        %4290 = vrot.lane.b32.xlu0 %v4289, 64
        %v4291 = vpop.permute.xlu0 %4290
        %v4293 = vsel %vm4266, %v4230, 0
        %v4296 = vsel %vm4270, %v4291, 0
        %4298 = vmatpush.bf16.msra.mxu0 0
        %4299 = vmatpush.bf16.msra.mxu0 0
        %4300 = vmatpush.bf16.msra.mxu0 0
        %4301 = vmatpush.bf16.msra.mxu0 0
        %4302 = vmatpush.bf16.msra.mxu0 0
        %4303 = vmatpush.bf16.msra.mxu0 0
        %4304 = vmatpush.bf16.msra.mxu0 0
        %4305 = vmatpush.bf16.msra.mxu0 %v4296
        %4306 = vmatmul.bf16.gmra.mxu0 %v4293
        %v4307 = vpop.f32.mrf.mxu0
        %v4308 = vadd.f32 0.0, %v4307
        %v4309 = vpop.f32.mrf.mxu0
        %4310 = vdwg.mxu0
        %v4312 = vunpack.c.l.b16 %v3077
        %v4313 = vpack.c.b16 %v4312, %v4312
        %4314 = vrot.lane.b32.xlu0 %v4313, 64
        %v4315 = vpop.permute.xlu0 %4314
        %v4317 = vsel %vm4266, %v4231, 0
        %v4320 = vsel %vm4270, %v4315, 0
        %4322 = vmatpush.bf16.msra.mxu0 0
        %4323 = vmatpush.bf16.msra.mxu0 0
        %4324 = vmatpush.bf16.msra.mxu0 0
        %4325 = vmatpush.bf16.msra.mxu0 0
        %4326 = vmatpush.bf16.msra.mxu0 0
        %4327 = vmatpush.bf16.msra.mxu0 0
        %4328 = vmatpush.bf16.msra.mxu0 0
        %4329 = vmatpush.bf16.msra.mxu0 %v4320
        %4330 = vmatmul.bf16.gmra.mxu0 %v4317
        %v4331 = vpop.f32.mrf.mxu0
        %v4332 = vadd.f32 0.0, %v4331
        %v4333 = vpop.f32.mrf.mxu0
        %4334 = vdwg.mxu0
        %v4336 = vunpack.c.l.b16 %v3078
        %v4337 = vpack.c.b16 %v4336, %v4336
        %4338 = vrot.lane.b32.xlu0 %v4337, 64
        %v4339 = vpop.permute.xlu0 %4338
        %v4341 = vsel %vm4266, %v4232, 0
        %v4344 = vsel %vm4270, %v4339, 0
        %4346 = vmatpush.bf16.msra.mxu0 0
        %4347 = vmatpush.bf16.msra.mxu0 0
        %4348 = vmatpush.bf16.msra.mxu0 0
        %4349 = vmatpush.bf16.msra.mxu0 0
        %4350 = vmatpush.bf16.msra.mxu0 0
        %4351 = vmatpush.bf16.msra.mxu0 0
        %4352 = vmatpush.bf16.msra.mxu0 0
        %4353 = vmatpush.bf16.msra.mxu0 %v4344
        %4354 = vmatmul.bf16.gmra.mxu0 %v4341
        %v4355 = vpop.f32.mrf.mxu0
        %v4356 = vadd.f32 0.0, %v4355
        %v4357 = vpop.f32.mrf.mxu0
        %4358 = vdwg.mxu0
        %v4360 = vunpack.c.l.b16 %v3079
        %v4361 = vpack.c.b16 %v4360, %v4360
        %4362 = vrot.lane.b32.xlu0 %v4361, 64
        %v4363 = vpop.permute.xlu0 %4362
        %v4365 = vsel %vm4266, %v4233, 0
        %v4368 = vsel %vm4270, %v4363, 0
        %4370 = vmatpush.bf16.msra.mxu0 0
        %4371 = vmatpush.bf16.msra.mxu0 0
        %4372 = vmatpush.bf16.msra.mxu0 0
        %4373 = vmatpush.bf16.msra.mxu0 0
        %4374 = vmatpush.bf16.msra.mxu0 0
        %4375 = vmatpush.bf16.msra.mxu0 0
        %4376 = vmatpush.bf16.msra.mxu0 0
        %4377 = vmatpush.bf16.msra.mxu0 %v4368
        %4378 = vmatmul.bf16.gmra.mxu0 %v4365
        %v4379 = vpop.f32.mrf.mxu0
        %v4380 = vadd.f32 0.0, %v4379
        %v4381 = vpop.f32.mrf.mxu0
        %4382 = vdwg.mxu0
        %v4384 = vunpack.c.l.b16 %v3080
        %v4385 = vpack.c.b16 %v4384, %v4384
        %4386 = vrot.lane.b32.xlu0 %v4385, 64
        %v4387 = vpop.permute.xlu0 %4386
        %v4389 = vsel %vm4266, %v4234, 0
        %v4392 = vsel %vm4270, %v4387, 0
        %4394 = vmatpush.bf16.msra.mxu0 0
        %4395 = vmatpush.bf16.msra.mxu0 0
        %4396 = vmatpush.bf16.msra.mxu0 0
        %4397 = vmatpush.bf16.msra.mxu0 0
        %4398 = vmatpush.bf16.msra.mxu0 0
        %4399 = vmatpush.bf16.msra.mxu0 0
        %4400 = vmatpush.bf16.msra.mxu0 0
        %4401 = vmatpush.bf16.msra.mxu0 %v4392
        %4402 = vmatmul.bf16.gmra.mxu0 %v4389
        %v4403 = vpop.f32.mrf.mxu0
        %v4404 = vadd.f32 0.0, %v4403
        %v4405 = vpop.f32.mrf.mxu0
        %4406 = vdwg.mxu0
        %v4408 = vunpack.c.l.b16 %v3081
        %v4409 = vpack.c.b16 %v4408, %v4408
        %4410 = vrot.lane.b32.xlu0 %v4409, 64
        %v4411 = vpop.permute.xlu0 %4410
        %v4413 = vsel %vm4266, %v4235, 0
        %v4416 = vsel %vm4270, %v4411, 0
        %4418 = vmatpush.bf16.msra.mxu0 0
        %4419 = vmatpush.bf16.msra.mxu0 0
        %4420 = vmatpush.bf16.msra.mxu0 0
        %4421 = vmatpush.bf16.msra.mxu0 0
        %4422 = vmatpush.bf16.msra.mxu0 0
        %4423 = vmatpush.bf16.msra.mxu0 0
        %4424 = vmatpush.bf16.msra.mxu0 0
        %4425 = vmatpush.bf16.msra.mxu0 %v4416
        %4426 = vmatmul.bf16.gmra.mxu0 %v4413
        %v4427 = vpop.f32.mrf.mxu0
        %v4428 = vadd.f32 0.0, %v4427
        %v4429 = vpop.f32.mrf.mxu0
        %4430 = vdwg.mxu0
        %v4432 = vunpack.c.l.b16 %v3082
        %v4433 = vpack.c.b16 %v4432, %v4432
        %4434 = vrot.lane.b32.xlu0 %v4433, 64
        %v4435 = vpop.permute.xlu0 %4434
        %v4437 = vsel %vm4266, %v4236, 0
        %v4440 = vsel %vm4270, %v4435, 0
        %4442 = vmatpush.bf16.msra.mxu0 0
        %4443 = vmatpush.bf16.msra.mxu0 0
        %4444 = vmatpush.bf16.msra.mxu0 0
        %4445 = vmatpush.bf16.msra.mxu0 0
        %4446 = vmatpush.bf16.msra.mxu0 0
        %4447 = vmatpush.bf16.msra.mxu0 0
        %4448 = vmatpush.bf16.msra.mxu0 0
        %4449 = vmatpush.bf16.msra.mxu0 %v4440
        %4450 = vmatmul.bf16.gmra.mxu0 %v4437
        %v4451 = vpop.f32.mrf.mxu0
        %v4452 = vadd.f32 0.0, %v4451
        %v4453 = vpop.f32.mrf.mxu0
        %4454 = vdwg.mxu0
        %v4456 = vunpack.c.l.b16 %v3083
        %v4457 = vpack.c.b16 %v4456, %v4456
        %4458 = vrot.lane.b32.xlu0 %v4457, 64
        %v4459 = vpop.permute.xlu0 %4458
        %v4461 = vsel %vm4266, %v4237, 0
        %v4464 = vsel %vm4270, %v4459, 0
        %4466 = vmatpush.bf16.msra.mxu0 0
        %4467 = vmatpush.bf16.msra.mxu0 0
        %4468 = vmatpush.bf16.msra.mxu0 0
        %4469 = vmatpush.bf16.msra.mxu0 0
        %4470 = vmatpush.bf16.msra.mxu0 0
        %4471 = vmatpush.bf16.msra.mxu0 0
        %4472 = vmatpush.bf16.msra.mxu0 0
        %4473 = vmatpush.bf16.msra.mxu0 %v4464
        %4474 = vmatmul.bf16.gmra.mxu0 %v4461
        %v4475 = vpop.f32.mrf.mxu0
        %v4476 = vadd.f32 0.0, %v4475
        %v4477 = vpop.f32.mrf.mxu0
        %4478 = vdwg.mxu0
        %v4480 = vunpack.c.l.b16 %v3084
        %v4481 = vpack.c.b16 %v4480, %v4480
        %4482 = vrot.lane.b32.xlu0 %v4481, 64
        %v4483 = vpop.permute.xlu0 %4482
        %v4485 = vsel %vm4266, %v4238, 0
        %v4488 = vsel %vm4270, %v4483, 0
        %4490 = vmatpush.bf16.msra.mxu0 0
        %4491 = vmatpush.bf16.msra.mxu0 0
        %4492 = vmatpush.bf16.msra.mxu0 0
        %4493 = vmatpush.bf16.msra.mxu0 0
        %4494 = vmatpush.bf16.msra.mxu0 0
        %4495 = vmatpush.bf16.msra.mxu0 0
        %4496 = vmatpush.bf16.msra.mxu0 0
        %4497 = vmatpush.bf16.msra.mxu0 %v4488
        %4498 = vmatmul.bf16.gmra.mxu0 %v4485
        %v4499 = vpop.f32.mrf.mxu0
        %v4500 = vadd.f32 0.0, %v4499
        %v4501 = vpop.f32.mrf.mxu0
        %4502 = vdwg.mxu0
        %v4504 = vunpack.c.l.b16 %v3085
        %v4505 = vpack.c.b16 %v4504, %v4504
        %4506 = vrot.lane.b32.xlu0 %v4505, 64
        %v4507 = vpop.permute.xlu0 %4506
        %v4509 = vsel %vm4266, %v4239, 0
        %v4512 = vsel %vm4270, %v4507, 0
        %4514 = vmatpush.bf16.msra.mxu0 0
        %4515 = vmatpush.bf16.msra.mxu0 0
        %4516 = vmatpush.bf16.msra.mxu0 0
        %4517 = vmatpush.bf16.msra.mxu0 0
        %4518 = vmatpush.bf16.msra.mxu0 0
        %4519 = vmatpush.bf16.msra.mxu0 0
        %4520 = vmatpush.bf16.msra.mxu0 0
        %4521 = vmatpush.bf16.msra.mxu0 %v4512
        %4522 = vmatmul.bf16.gmra.mxu0 %v4509
        %v4523 = vpop.f32.mrf.mxu0
        %v4524 = vadd.f32 0.0, %v4523
        %v4525 = vpop.f32.mrf.mxu0
        %4526 = vdwg.mxu0
        %v4528 = vunpack.c.l.b16 %v3086
        %v4529 = vpack.c.b16 %v4528, %v4528
        %4530 = vrot.lane.b32.xlu0 %v4529, 64
        %v4531 = vpop.permute.xlu0 %4530
        %v4533 = vsel %vm4266, %v4240, 0
        %v4536 = vsel %vm4270, %v4531, 0
        %4538 = vmatpush.bf16.msra.mxu0 0
        %4539 = vmatpush.bf16.msra.mxu0 0
        %4540 = vmatpush.bf16.msra.mxu0 0
        %4541 = vmatpush.bf16.msra.mxu0 0
        %4542 = vmatpush.bf16.msra.mxu0 0
        %4543 = vmatpush.bf16.msra.mxu0 0
        %4544 = vmatpush.bf16.msra.mxu0 0
        %4545 = vmatpush.bf16.msra.mxu0 %v4536
        %4546 = vmatmul.bf16.gmra.mxu0 %v4533
        %v4547 = vpop.f32.mrf.mxu0
        %v4548 = vadd.f32 0.0, %v4547
        %v4549 = vpop.f32.mrf.mxu0
        %4550 = vdwg.mxu0
        %v4552 = vunpack.c.l.b16 %v3087
        %v4553 = vpack.c.b16 %v4552, %v4552
        %4554 = vrot.lane.b32.xlu0 %v4553, 64
        %v4555 = vpop.permute.xlu0 %4554
        %v4557 = vsel %vm4266, %v4241, 0
        %v4560 = vsel %vm4270, %v4555, 0
        %4562 = vmatpush.bf16.msra.mxu0 0
        %4563 = vmatpush.bf16.msra.mxu0 0
        %4564 = vmatpush.bf16.msra.mxu0 0
        %4565 = vmatpush.bf16.msra.mxu0 0
        %4566 = vmatpush.bf16.msra.mxu0 0
        %4567 = vmatpush.bf16.msra.mxu0 0
        %4568 = vmatpush.bf16.msra.mxu0 0
        %4569 = vmatpush.bf16.msra.mxu0 %v4560
        %4570 = vmatmul.bf16.gmra.mxu0 %v4557
        %v4571 = vpop.f32.mrf.mxu0
        %v4572 = vadd.f32 0.0, %v4571
        %v4573 = vpop.f32.mrf.mxu0
        %4574 = vdwg.mxu0
        %v4576 = vunpack.c.l.b16 %v3088
        %v4577 = vpack.c.b16 %v4576, %v4576
        %4578 = vrot.lane.b32.xlu0 %v4577, 64
        %v4579 = vpop.permute.xlu0 %4578
        %v4581 = vsel %vm4266, %v4242, 0
        %v4584 = vsel %vm4270, %v4579, 0
        %4586 = vmatpush.bf16.msra.mxu0 0
        %4587 = vmatpush.bf16.msra.mxu0 0
        %4588 = vmatpush.bf16.msra.mxu0 0
        %4589 = vmatpush.bf16.msra.mxu0 0
        %4590 = vmatpush.bf16.msra.mxu0 0
        %4591 = vmatpush.bf16.msra.mxu0 0
        %4592 = vmatpush.bf16.msra.mxu0 0
        %4593 = vmatpush.bf16.msra.mxu0 %v4584
        %4594 = vmatmul.bf16.gmra.mxu0 %v4581
        %v4595 = vpop.f32.mrf.mxu0
        %v4596 = vadd.f32 0.0, %v4595
        %v4597 = vpop.f32.mrf.mxu0
        %4598 = vdwg.mxu0
        %v4600 = vunpack.c.l.b16 %v3089
        %v4601 = vpack.c.b16 %v4600, %v4600
        %4602 = vrot.lane.b32.xlu0 %v4601, 64
        %v4603 = vpop.permute.xlu0 %4602
        %v4605 = vsel %vm4266, %v4243, 0
        %v4608 = vsel %vm4270, %v4603, 0
        %4610 = vmatpush.bf16.msra.mxu0 0
        %4611 = vmatpush.bf16.msra.mxu0 0
        %4612 = vmatpush.bf16.msra.mxu0 0
        %4613 = vmatpush.bf16.msra.mxu0 0
        %4614 = vmatpush.bf16.msra.mxu0 0
        %4615 = vmatpush.bf16.msra.mxu0 0
        %4616 = vmatpush.bf16.msra.mxu0 0
        %4617 = vmatpush.bf16.msra.mxu0 %v4608
        %4618 = vmatmul.bf16.gmra.mxu0 %v4605
        %v4619 = vpop.f32.mrf.mxu0
        %v4620 = vadd.f32 0.0, %v4619
        %v4621 = vpop.f32.mrf.mxu0
        %4622 = vdwg.mxu0
        %v4624 = vunpack.c.l.b16 %v3090
        %v4625 = vpack.c.b16 %v4624, %v4624
        %4626 = vrot.lane.b32.xlu0 %v4625, 64
        %v4627 = vpop.permute.xlu0 %4626
        %v4629 = vsel %vm4266, %v4244, 0
        %v4632 = vsel %vm4270, %v4627, 0
        %4634 = vmatpush.bf16.msra.mxu0 0
        %4635 = vmatpush.bf16.msra.mxu0 0
        %4636 = vmatpush.bf16.msra.mxu0 0
        %4637 = vmatpush.bf16.msra.mxu0 0
        %4638 = vmatpush.bf16.msra.mxu0 0
        %4639 = vmatpush.bf16.msra.mxu0 0
        %4640 = vmatpush.bf16.msra.mxu0 0
        %4641 = vmatpush.bf16.msra.mxu0 %v4632
        %4642 = vmatmul.bf16.gmra.mxu0 %v4629
        %v4643 = vpop.f32.mrf.mxu0
        %v4644 = vadd.f32 0.0, %v4643
        %v4645 = vpop.f32.mrf.mxu0
        %4646 = vdwg.mxu0
        %v4648 = vunpack.c.l.b16 %v3091
        %v4649 = vpack.c.b16 %v4648, %v4648
        %4650 = vrot.lane.b32.xlu0 %v4649, 64
        %v4651 = vpop.permute.xlu0 %4650
        %v4653 = vsel %vm4266, %v4245, 0
        %v4656 = vsel %vm4270, %v4651, 0
        %4658 = vmatpush.bf16.msra.mxu0 0
        %4659 = vmatpush.bf16.msra.mxu0 0
        %4660 = vmatpush.bf16.msra.mxu0 0
        %4661 = vmatpush.bf16.msra.mxu0 0
        %4662 = vmatpush.bf16.msra.mxu0 0
        %4663 = vmatpush.bf16.msra.mxu0 0
        %4664 = vmatpush.bf16.msra.mxu0 0
        %4665 = vmatpush.bf16.msra.mxu0 %v4656
        %4666 = vmatmul.bf16.gmra.mxu0 %v4653
        %v4667 = vpop.f32.mrf.mxu0
        %v4668 = vadd.f32 0.0, %v4667
        %v4669 = vpop.f32.mrf.mxu0
        %4670 = vdwg.mxu0
        %v4672 = vunpack.c.l.b16 %v3092
        %v4673 = vpack.c.b16 %v4672, %v4672
        %4674 = vrot.lane.b32.xlu0 %v4673, 64
        %v4675 = vpop.permute.xlu0 %4674
        %v4677 = vsel %vm4266, %v4246, 0
        %v4680 = vsel %vm4270, %v4675, 0
        %4682 = vmatpush.bf16.msra.mxu0 0
        %4683 = vmatpush.bf16.msra.mxu0 0
        %4684 = vmatpush.bf16.msra.mxu0 0
        %4685 = vmatpush.bf16.msra.mxu0 0
        %4686 = vmatpush.bf16.msra.mxu0 0
        %4687 = vmatpush.bf16.msra.mxu0 0
        %4688 = vmatpush.bf16.msra.mxu0 0
        %4689 = vmatpush.bf16.msra.mxu0 %v4680
        %4690 = vmatmul.bf16.gmra.mxu0 %v4677
        %v4691 = vpop.f32.mrf.mxu0
        %v4692 = vadd.f32 0.0, %v4691
        %v4693 = vpop.f32.mrf.mxu0
        %4694 = vdwg.mxu0
        %v4696 = vunpack.c.l.b16 %v3093
        %v4697 = vpack.c.b16 %v4696, %v4696
        %4698 = vrot.lane.b32.xlu0 %v4697, 64
        %v4699 = vpop.permute.xlu0 %4698
        %v4701 = vsel %vm4266, %v4247, 0
        %v4704 = vsel %vm4270, %v4699, 0
        %4706 = vmatpush.bf16.msra.mxu0 0
        %4707 = vmatpush.bf16.msra.mxu0 0
        %4708 = vmatpush.bf16.msra.mxu0 0
        %4709 = vmatpush.bf16.msra.mxu0 0
        %4710 = vmatpush.bf16.msra.mxu0 0
        %4711 = vmatpush.bf16.msra.mxu0 0
        %4712 = vmatpush.bf16.msra.mxu0 0
        %4713 = vmatpush.bf16.msra.mxu0 %v4704
        %4714 = vmatmul.bf16.gmra.mxu0 %v4701
        %v4715 = vpop.f32.mrf.mxu0
        %v4716 = vadd.f32 0.0, %v4715
        %v4717 = vpop.f32.mrf.mxu0
        %4718 = vdwg.mxu0
        %v4720 = vunpack.c.l.b16 %v3094
        %v4721 = vpack.c.b16 %v4720, %v4720
        %4722 = vrot.lane.b32.xlu0 %v4721, 64
        %v4723 = vpop.permute.xlu0 %4722
        %v4725 = vsel %vm4266, %v4248, 0
        %v4728 = vsel %vm4270, %v4723, 0
        %4730 = vmatpush.bf16.msra.mxu0 0
        %4731 = vmatpush.bf16.msra.mxu0 0
        %4732 = vmatpush.bf16.msra.mxu0 0
        %4733 = vmatpush.bf16.msra.mxu0 0
        %4734 = vmatpush.bf16.msra.mxu0 0
        %4735 = vmatpush.bf16.msra.mxu0 0
        %4736 = vmatpush.bf16.msra.mxu0 0
        %4737 = vmatpush.bf16.msra.mxu0 %v4728
        %4738 = vmatmul.bf16.gmra.mxu0 %v4725
        %v4739 = vpop.f32.mrf.mxu0
        %v4740 = vadd.f32 0.0, %v4739
        %v4741 = vpop.f32.mrf.mxu0
        %4742 = vdwg.mxu0
        %v4744 = vunpack.c.l.b16 %v3095
        %v4745 = vpack.c.b16 %v4744, %v4744
        %4746 = vrot.lane.b32.xlu0 %v4745, 64
        %v4747 = vpop.permute.xlu0 %4746
        %v4749 = vsel %vm4266, %v4249, 0
        %v4752 = vsel %vm4270, %v4747, 0
        %4754 = vmatpush.bf16.msra.mxu0 0
        %4755 = vmatpush.bf16.msra.mxu0 0
        %4756 = vmatpush.bf16.msra.mxu0 0
        %4757 = vmatpush.bf16.msra.mxu0 0
        %4758 = vmatpush.bf16.msra.mxu0 0
        %4759 = vmatpush.bf16.msra.mxu0 0
        %4760 = vmatpush.bf16.msra.mxu0 0
        %4761 = vmatpush.bf16.msra.mxu0 %v4752
        %4762 = vmatmul.bf16.gmra.mxu0 %v4749
        %v4763 = vpop.f32.mrf.mxu0
        %v4764 = vadd.f32 0.0, %v4763
        %v4765 = vpop.f32.mrf.mxu0
        %4766 = vdwg.mxu0
        %v4768 = vunpack.c.l.b16 %v3096
        %v4769 = vpack.c.b16 %v4768, %v4768
        %4770 = vrot.lane.b32.xlu0 %v4769, 64
        %v4771 = vpop.permute.xlu0 %4770
        %v4773 = vsel %vm4266, %v4250, 0
        %v4776 = vsel %vm4270, %v4771, 0
        %4778 = vmatpush.bf16.msra.mxu0 0
        %4779 = vmatpush.bf16.msra.mxu0 0
        %4780 = vmatpush.bf16.msra.mxu0 0
        %4781 = vmatpush.bf16.msra.mxu0 0
        %4782 = vmatpush.bf16.msra.mxu0 0
        %4783 = vmatpush.bf16.msra.mxu0 0
        %4784 = vmatpush.bf16.msra.mxu0 0
        %4785 = vmatpush.bf16.msra.mxu0 %v4776
        %4786 = vmatmul.bf16.gmra.mxu0 %v4773
        %v4787 = vpop.f32.mrf.mxu0
        %v4788 = vadd.f32 0.0, %v4787
        %v4789 = vpop.f32.mrf.mxu0
        %4790 = vdwg.mxu0
        %v4792 = vunpack.c.l.b16 %v3097
        %v4793 = vpack.c.b16 %v4792, %v4792
        %4794 = vrot.lane.b32.xlu0 %v4793, 64
        %v4795 = vpop.permute.xlu0 %4794
        %v4797 = vsel %vm4266, %v4251, 0
        %v4800 = vsel %vm4270, %v4795, 0
        %4802 = vmatpush.bf16.msra.mxu0 0
        %4803 = vmatpush.bf16.msra.mxu0 0
        %4804 = vmatpush.bf16.msra.mxu0 0
        %4805 = vmatpush.bf16.msra.mxu0 0
        %4806 = vmatpush.bf16.msra.mxu0 0
        %4807 = vmatpush.bf16.msra.mxu0 0
        %4808 = vmatpush.bf16.msra.mxu0 0
        %4809 = vmatpush.bf16.msra.mxu0 %v4800
        %4810 = vmatmul.bf16.gmra.mxu0 %v4797
        %v4811 = vpop.f32.mrf.mxu0
        %v4812 = vadd.f32 0.0, %v4811
        %v4813 = vpop.f32.mrf.mxu0
        %4814 = vdwg.mxu0
        %v4816 = vunpack.c.l.b16 %v3098
        %v4817 = vpack.c.b16 %v4816, %v4816
        %4818 = vrot.lane.b32.xlu0 %v4817, 64
        %v4819 = vpop.permute.xlu0 %4818
        %v4821 = vsel %vm4266, %v4252, 0
        %v4824 = vsel %vm4270, %v4819, 0
        %4826 = vmatpush.bf16.msra.mxu0 0
        %4827 = vmatpush.bf16.msra.mxu0 0
        %4828 = vmatpush.bf16.msra.mxu0 0
        %4829 = vmatpush.bf16.msra.mxu0 0
        %4830 = vmatpush.bf16.msra.mxu0 0
        %4831 = vmatpush.bf16.msra.mxu0 0
        %4832 = vmatpush.bf16.msra.mxu0 0
        %4833 = vmatpush.bf16.msra.mxu0 %v4824
        %4834 = vmatmul.bf16.gmra.mxu0 %v4821
        %v4835 = vpop.f32.mrf.mxu0
        %v4836 = vadd.f32 0.0, %v4835
        %v4837 = vpop.f32.mrf.mxu0
        %4838 = vdwg.mxu0
        %v4840 = vunpack.c.l.b16 %v3099
        %v4841 = vpack.c.b16 %v4840, %v4840
        %4842 = vrot.lane.b32.xlu0 %v4841, 64
        %v4843 = vpop.permute.xlu0 %4842
        %v4845 = vsel %vm4266, %v4253, 0
        %v4848 = vsel %vm4270, %v4843, 0
        %4850 = vmatpush.bf16.msra.mxu0 0
        %4851 = vmatpush.bf16.msra.mxu0 0
        %4852 = vmatpush.bf16.msra.mxu0 0
        %4853 = vmatpush.bf16.msra.mxu0 0
        %4854 = vmatpush.bf16.msra.mxu0 0
        %4855 = vmatpush.bf16.msra.mxu0 0
        %4856 = vmatpush.bf16.msra.mxu0 0
        %4857 = vmatpush.bf16.msra.mxu0 %v4848
        %4858 = vmatmul.bf16.gmra.mxu0 %v4845
        %v4859 = vpop.f32.mrf.mxu0
        %v4860 = vadd.f32 0.0, %v4859
        %v4861 = vpop.f32.mrf.mxu0
        %4862 = vdwg.mxu0
        %v4864 = vunpack.c.l.b16 %v3100
        %v4865 = vpack.c.b16 %v4864, %v4864
        %4866 = vrot.lane.b32.xlu0 %v4865, 64
        %v4867 = vpop.permute.xlu0 %4866
        %v4869 = vsel %vm4266, %v4254, 0
        %v4872 = vsel %vm4270, %v4867, 0
        %4874 = vmatpush.bf16.msra.mxu0 0
        %4875 = vmatpush.bf16.msra.mxu0 0
        %4876 = vmatpush.bf16.msra.mxu0 0
        %4877 = vmatpush.bf16.msra.mxu0 0
        %4878 = vmatpush.bf16.msra.mxu0 0
        %4879 = vmatpush.bf16.msra.mxu0 0
        %4880 = vmatpush.bf16.msra.mxu0 0
        %4881 = vmatpush.bf16.msra.mxu0 %v4872
        %4882 = vmatmul.bf16.gmra.mxu0 %v4869
        %v4883 = vpop.f32.mrf.mxu0
        %v4884 = vadd.f32 0.0, %v4883
        %v4885 = vpop.f32.mrf.mxu0
        %4886 = vdwg.mxu0
        %v4888 = vunpack.c.l.b16 %v3101
        %v4889 = vpack.c.b16 %v4888, %v4888
        %4890 = vrot.lane.b32.xlu0 %v4889, 64
        %v4891 = vpop.permute.xlu0 %4890
        %v4893 = vsel %vm4266, %v4255, 0
        %v4896 = vsel %vm4270, %v4891, 0
        %4898 = vmatpush.bf16.msra.mxu0 0
        %4899 = vmatpush.bf16.msra.mxu0 0
        %4900 = vmatpush.bf16.msra.mxu0 0
        %4901 = vmatpush.bf16.msra.mxu0 0
        %4902 = vmatpush.bf16.msra.mxu0 0
        %4903 = vmatpush.bf16.msra.mxu0 0
        %4904 = vmatpush.bf16.msra.mxu0 0
        %4905 = vmatpush.bf16.msra.mxu0 %v4896
        %4906 = vmatmul.bf16.gmra.mxu0 %v4893
        %v4907 = vpop.f32.mrf.mxu0
        %v4908 = vadd.f32 0.0, %v4907
        %v4909 = vpop.f32.mrf.mxu0
        %4910 = vdwg.mxu0
        %v4912 = vunpack.c.l.b16 %v3102
        %v4913 = vpack.c.b16 %v4912, %v4912
        %4914 = vrot.lane.b32.xlu0 %v4913, 64
        %v4915 = vpop.permute.xlu0 %4914
        %v4917 = vsel %vm4266, %v4256, 0
        %v4920 = vsel %vm4270, %v4915, 0
        %4922 = vmatpush.bf16.msra.mxu0 0
        %4923 = vmatpush.bf16.msra.mxu0 0
        %4924 = vmatpush.bf16.msra.mxu0 0
        %4925 = vmatpush.bf16.msra.mxu0 0
        %4926 = vmatpush.bf16.msra.mxu0 0
        %4927 = vmatpush.bf16.msra.mxu0 0
        %4928 = vmatpush.bf16.msra.mxu0 0
        %4929 = vmatpush.bf16.msra.mxu0 %v4920
        %4930 = vmatmul.bf16.gmra.mxu0 %v4917
        %v4931 = vpop.f32.mrf.mxu0
        %v4932 = vadd.f32 0.0, %v4931
        %v4933 = vpop.f32.mrf.mxu0
        %4934 = vdwg.mxu0
        %v4936 = vunpack.c.l.b16 %v3103
        %v4937 = vpack.c.b16 %v4936, %v4936
        %4938 = vrot.lane.b32.xlu0 %v4937, 64
        %v4939 = vpop.permute.xlu0 %4938
        %v4941 = vsel %vm4266, %v4257, 0
        %v4944 = vsel %vm4270, %v4939, 0
        %4946 = vmatpush.bf16.msra.mxu0 0
        %4947 = vmatpush.bf16.msra.mxu0 0
        %4948 = vmatpush.bf16.msra.mxu0 0
        %4949 = vmatpush.bf16.msra.mxu0 0
        %4950 = vmatpush.bf16.msra.mxu0 0
        %4951 = vmatpush.bf16.msra.mxu0 0
        %4952 = vmatpush.bf16.msra.mxu0 0
        %4953 = vmatpush.bf16.msra.mxu0 %v4944
        %4954 = vmatmul.bf16.gmra.mxu0 %v4941
        %v4955 = vpop.f32.mrf.mxu0
        %v4956 = vadd.f32 0.0, %v4955
        %v4957 = vpop.f32.mrf.mxu0
        %4958 = vdwg.mxu0
        %v4960 = vunpack.c.l.b16 %v3104
        %v4961 = vpack.c.b16 %v4960, %v4960
        %4962 = vrot.lane.b32.xlu0 %v4961, 64
        %v4963 = vpop.permute.xlu0 %4962
        %v4965 = vsel %vm4266, %v4258, 0
        %v4968 = vsel %vm4270, %v4963, 0
        %4970 = vmatpush.bf16.msra.mxu0 0
        %4971 = vmatpush.bf16.msra.mxu0 0
        %4972 = vmatpush.bf16.msra.mxu0 0
        %4973 = vmatpush.bf16.msra.mxu0 0
        %4974 = vmatpush.bf16.msra.mxu0 0
        %4975 = vmatpush.bf16.msra.mxu0 0
        %4976 = vmatpush.bf16.msra.mxu0 0
        %4977 = vmatpush.bf16.msra.mxu0 %v4968
        %4978 = vmatmul.bf16.gmra.mxu0 %v4965
        %v4979 = vpop.f32.mrf.mxu0
        %v4980 = vadd.f32 0.0, %v4979
        %v4981 = vpop.f32.mrf.mxu0
        %4982 = vdwg.mxu0
        %v4984 = vunpack.c.l.b16 %v3105
        %v4985 = vpack.c.b16 %v4984, %v4984
        %4986 = vrot.lane.b32.xlu0 %v4985, 64
        %v4987 = vpop.permute.xlu0 %4986
        %v4989 = vsel %vm4266, %v4259, 0
        %v4992 = vsel %vm4270, %v4987, 0
        %4994 = vmatpush.bf16.msra.mxu0 0
        %4995 = vmatpush.bf16.msra.mxu0 0
        %4996 = vmatpush.bf16.msra.mxu0 0
        %4997 = vmatpush.bf16.msra.mxu0 0
        %4998 = vmatpush.bf16.msra.mxu0 0
        %4999 = vmatpush.bf16.msra.mxu0 0
        %5000 = vmatpush.bf16.msra.mxu0 0
        %5001 = vmatpush.bf16.msra.mxu0 %v4992
        %5002 = vmatmul.bf16.gmra.mxu0 %v4989
        %v5003 = vpop.f32.mrf.mxu0
        %v5004 = vadd.f32 0.0, %v5003
        %v5005 = vpop.f32.mrf.mxu0
        %5006 = vdwg.mxu0
        %v5008 = vunpack.c.l.b16 %v3106
        %v5009 = vpack.c.b16 %v5008, %v5008
        %5010 = vrot.lane.b32.xlu0 %v5009, 64
        %v5011 = vpop.permute.xlu0 %5010
        %v5013 = vsel %vm4266, %v4260, 0
        %v5016 = vsel %vm4270, %v5011, 0
        %5018 = vmatpush.bf16.msra.mxu0 0
        %5019 = vmatpush.bf16.msra.mxu0 0
        %5020 = vmatpush.bf16.msra.mxu0 0
        %5021 = vmatpush.bf16.msra.mxu0 0
        %5022 = vmatpush.bf16.msra.mxu0 0
        %5023 = vmatpush.bf16.msra.mxu0 0
        %5024 = vmatpush.bf16.msra.mxu0 0
        %5025 = vmatpush.bf16.msra.mxu0 %v5016
        %5026 = vmatmul.bf16.gmra.mxu0 %v5013
        %v5027 = vpop.f32.mrf.mxu0
        %v5028 = vadd.f32 0.0, %v5027
        %v5029 = vpop.f32.mrf.mxu0
        %5030 = vdwg.mxu0
        %vm5031 = vcmask 128000
        %v5032 = vsel %vm5031, %v4284, 0.0
        %v5033 = vsel %vm5031, %v4308, 0.0
        %v5034 = vadd.f32 %v5032, %v5033
        %v5035 = vsel %vm5031, %v4332, 0.0
        %v5036 = vadd.f32 %v5034, %v5035
        %v5037 = vsel %vm5031, %v4356, 0.0
        %v5038 = vadd.f32 %v5036, %v5037
        %v5039 = vsel %vm5031, %v4380, 0.0
        %v5040 = vadd.f32 %v5038, %v5039
        %v5041 = vsel %vm5031, %v4404, 0.0
        %v5042 = vadd.f32 %v5040, %v5041
        %v5043 = vsel %vm5031, %v4428, 0.0
        %v5044 = vadd.f32 %v5042, %v5043
        %v5045 = vsel %vm5031, %v4452, 0.0
        %v5046 = vadd.f32 %v5044, %v5045
        %v5047 = vsel %vm5031, %v4476, 0.0
        %v5048 = vadd.f32 %v5046, %v5047
        %v5049 = vsel %vm5031, %v4500, 0.0
        %v5050 = vadd.f32 %v5048, %v5049
        %v5051 = vsel %vm5031, %v4524, 0.0
        %v5052 = vadd.f32 %v5050, %v5051
        %v5053 = vsel %vm5031, %v4548, 0.0
        %v5054 = vadd.f32 %v5052, %v5053
        %v5055 = vsel %vm5031, %v4572, 0.0
        %v5056 = vadd.f32 %v5054, %v5055
        %v5057 = vsel %vm5031, %v4596, 0.0
        %v5058 = vadd.f32 %v5056, %v5057
        %v5059 = vsel %vm5031, %v4620, 0.0
        %v5060 = vadd.f32 %v5058, %v5059
        %v5061 = vsel %vm5031, %v4644, 0.0
        %v5062 = vadd.f32 %v5060, %v5061
        %v5063 = vsel %vm5031, %v4668, 0.0
        %v5064 = vsel %vm5031, %v4692, 0.0
        %v5065 = vadd.f32 %v5063, %v5064
        %v5066 = vsel %vm5031, %v4716, 0.0
        %v5067 = vadd.f32 %v5065, %v5066
        %v5068 = vsel %vm5031, %v4740, 0.0
        %v5069 = vadd.f32 %v5067, %v5068
        %v5070 = vsel %vm5031, %v4764, 0.0
        %v5071 = vadd.f32 %v5069, %v5070
        %v5072 = vsel %vm5031, %v4788, 0.0
        %v5073 = vadd.f32 %v5071, %v5072
        %v5074 = vsel %vm5031, %v4812, 0.0
        %v5075 = vadd.f32 %v5073, %v5074
        %v5076 = vsel %vm5031, %v4836, 0.0
        %v5077 = vadd.f32 %v5075, %v5076
        %v5078 = vsel %vm5031, %v4860, 0.0
        %v5079 = vadd.f32 %v5077, %v5078
        %v5080 = vsel %vm5031, %v4884, 0.0
        %v5081 = vadd.f32 %v5079, %v5080
        %v5082 = vsel %vm5031, %v4908, 0.0
        %v5083 = vadd.f32 %v5081, %v5082
        %v5084 = vsel %vm5031, %v4932, 0.0
        %v5085 = vadd.f32 %v5083, %v5084
        %v5086 = vsel %vm5031, %v4956, 0.0
        %v5087 = vadd.f32 %v5085, %v5086
        %v5088 = vsel %vm5031, %v4980, 0.0
        %v5089 = vadd.f32 %v5087, %v5088
        %v5090 = vsel %vm5031, %v5004, 0.0
        %v5091 = vadd.f32 %v5089, %v5090
        %v5092 = vsel %vm5031, %v5028, 0.0
        %v5093 = vadd.f32 %v5091, %v5092
        %v5094 = vrcp.pop 16.0
        %v5095 = vmul.f32 16.0, %v5094
        %v5096 = vsub.f32 1.0, %v5095
        %v5097 = vmul.f32 %v5094, %v5096
        %v5098 = vadd.f32 %v5094, %v5097
        %vm5099 = vweird.f32 %v5094
        %v5100 = vsel %vm5099, %v5094, %v5098
        %v5101 = vmul.f32 %v5062, %v5100
        %v5102 = vmul.f32 %v5093, %v5100
        %v5105 = vrot.slane %v5101, 1
        %v5106 = vrot.slane %v5101, 2
        %v5107 = vrot.slane %v5101, 3
        %v5108 = vrot.slane %v5101, 4
        %v5109 = vrot.slane %v5101, 5
        %v5110 = vrot.slane %v5102, 1
        %v5111 = vrot.slane %v5102, 2
        %v5112 = vrot.slane %v5102, 3
        %v5113 = vrot.slane %v5102, 4
        %v5114 = vrot.slane %v5102, 5
        %5115 = vst [vmem:[#allocation1] ss:$9 sm:$0xff] %v5101
        %s5116 = scalar_lea.vmem [#allocation1], 1
        %5117 = vst [vmem:[%s5116] ss:$9 sm:$0xff] %v5105
        %s5118 = scalar_lea.vmem [#allocation1], 2
        %5119 = vst [vmem:[%s5118] ss:$9 sm:$0xff] %v5106
        %v5120 = vld [vmem:[#allocation1] sm:$0xff]
        %5121 = vst [vmem:[#allocation1] ss:$9 sm:$0xff] %v5107
        %5122 = vst [vmem:[%s5116] ss:$9 sm:$0xff] %v5108
        %5123 = vst [vmem:[%s5118] ss:$9 sm:$0xff] %v5109
        %v5124 = vld [vmem:[#allocation1] sm:$0xff]
        %5125 = vst [vmem:[#allocation1] ss:$9 sm:$0xff] %v5102
        %5126 = vst [vmem:[%s5116] ss:$9 sm:$0xff] %v5110
        %5127 = vst [vmem:[%s5118] ss:$9 sm:$0xff] %v5111
        %v5128 = vld [vmem:[#allocation1] sm:$0xff]
        %5129 = vst [vmem:[#allocation1] ss:$9 sm:$0xff] %v5112
        %5130 = vst [vmem:[%s5116] ss:$9 sm:$0xff] %v5113
        %5131 = vst [vmem:[%s5118] ss:$9 sm:$0xff] %v5114
        %v5132 = vld [vmem:[#allocation1] sm:$0xff]
        %vm5137 = vcmask 124928
        %v5138 = vsel %vm5137, %v5120, 0.0
        %v5139 = vrot.slane %v5138, 4
        %v5140 = vadd.f32 %v5138, %v5139
        %v5141 = vrot.slane %v5140, 2
        %v5142 = vadd.f32 %v5140, %v5141
        %v5143 = vrot.slane %v5142, 1
        %v5144 = vadd.f32 %v5142, %v5143
        %v5145 = vsel %vm5137, %v5124, 0.0
        %v5146 = vrot.slane %v5145, 4
        %v5147 = vadd.f32 %v5145, %v5146
        %v5148 = vrot.slane %v5147, 2
        %v5149 = vadd.f32 %v5147, %v5148
        %v5150 = vrot.slane %v5149, 1
        %v5151 = vadd.f32 %v5149, %v5150
        %v5152 = vsel %vm5137, %v5128, 0.0
        %v5153 = vrot.slane %v5152, 4
        %v5154 = vadd.f32 %v5152, %v5153
        %v5155 = vrot.slane %v5154, 2
        %v5156 = vadd.f32 %v5154, %v5155
        %v5157 = vrot.slane %v5156, 1
        %v5158 = vadd.f32 %v5156, %v5157
        %v5159 = vsel %vm5137, %v5132, 0.0
        %v5160 = vrot.slane %v5159, 4
        %v5161 = vadd.f32 %v5159, %v5160
        %v5162 = vrot.slane %v5161, 2
        %v5163 = vadd.f32 %v5161, %v5162
        %v5164 = vrot.slane %v5163, 1
        %v5165 = vadd.f32 %v5163, %v5164
        %v5166 = vrcp.pop 3.0
        %v5167 = vmul.f32 3.0, %v5166
        %v5168 = vsub.f32 1.0, %v5167
        %v5169 = vmul.f32 %v5166, %v5168
        %v5170 = vadd.f32 %v5166, %v5169
        %vm5171 = vweird.f32 %v5166
        %v5172 = vsel %vm5171, %v5166, %v5170
        %v5173 = vmul.f32 %v5144, %v5172
        %v5174 = vmul.f32 %v5151, %v5172
        %v5175 = vmul.f32 %v5158, %v5172
        %v5176 = vmul.f32 %v5165, %v5172
        %vm5181 = vcmask 1041409
        %v5182 = vsel %vm5181, %v5174, %v5173
        %v5183 = vsel %vm5181, %v5176, %v5175
        %v5186 = vrot.slane %v5183, 4
        %v5187 = vsel %vm886, %v5186, %v5182
        %v5189 = vunpack.c.l.s4 1934713408
        %v5190 = vunpack.c.0.s8 %v5189
        %v5191 = vperm.slane %v5187, %v5190
        %v5192 = vrot.slane %v5191, 4
        %v5193 = vsel %vm886, 0.0, %v5192
        %v5194 = vrot.slane %v5193, 4
        %v5195 = vsel %vm886, %v5194, %v5191
        %v5197 = vunpack.c.l.s4 1934713408
        %v5198 = vunpack.c.0.s8 %v5197
        %v5199 = vperm.slane %v5195, %v5198
        %v5200 = vrot.slane %v5199, 4
        %v5201 = vsel %vm886, 0.0, %v5200
        %5203 = vrot.lane.b32.xlu0 %v5201, 16
        %v5204 = vpop.permute.xlu0 %5203
        %v5206 = vsel %vm3112, %v5199, %v5204
        %v5207 = vld [vmem:[%s6] sm:$0xff]
        %v5208 = vld [vmem:[%s6 + $0x8] sm:$0xff]
        %v5209 = vld [vmem:[%s6 + $0x10] sm:$0xff]
        %v5210 = vld [vmem:[%s6 + $0x18] sm:$0xff]
        %v5211 = vld [vmem:[%s7] sm:$0x1]
        %v5213 = vperm.slane %v5211, 0
        %v5216 = vsel %vm587, %v5206, 0
        %5218 = vmatpush.msra.mxu0 0.0
        %5219 = vmatpush.msra.mxu0 0.0
        %5220 = vmatpush.msra.mxu0 0.0
        %5221 = vmatpush.msra.mxu0 0.0
        %5222 = vmatpush.msra.mxu0 0.0
        %5223 = vmatpush.msra.mxu0 0.0
        %5224 = vmatpush.msra.mxu0 0.0
        %5225 = vmatpush.msra.mxu0 0.0
        %5226 = vmatpush.msra.mxu0 0.0
        %5227 = vmatpush.msra.mxu0 0.0
        %5228 = vmatpush.msra.mxu0 0.0
        %5229 = vmatpush.msra.mxu0 0.0
        %5230 = vmatpush.msra.mxu0 %v5210
        %5231 = vmatpush.msra.mxu0 %v5209
        %5232 = vmatpush.msra.mxu0 %v5208
        %5233 = vmatpush.msra.mxu0 %v5207
        %5234 = vmatmul.f32.gmra.mxu0 %v5216
        %v5235 = vpop.f32.mrf.mxu0
        %v5236 = vadd.f32 %v5213, %v5235
        %5237 = vdwg.mxu0
        %vm5238 = vcmask 254976
        %5239 = vst.msk [vmem:[%s313] sm:$0x3] %vm5238, %v5236
        %s5240 = sand.u32 %s208, 1
        %s5241 = scalar_lea.sflag [#allocation3], %s5240
        %s5242 = sand.u32 %s208, 1
        %s5243 = smul.addr %s5242, 2
        %s5244 = scalar_lea.vmem [#allocation2], %s5243
        // Predicated region
        $region53: #{tpu_custom_call.1} parent=51 // pred_check
          %p5245 = pneg %p218
        $region54: #{tpu_custom_call.1} parent=51 // pred_check_branch
          %5247 = sbr.rel (%p5245) target = $region56
        $region55: #{tpu_custom_call.1} parent=51 // pred_region
          %5249 = vsyncadd %s5241, 0
          %s5250 = smul.addr %s22, 2
          %s5251 = scalar_lea.hbm %s8, %s5250
          %s5253 = sshll.u32 %s5244, 4
          %s5254 = int_to_ptr.vmem [resolvable:$true] %s5253
          %s5255 = sshll.u32 %s5251, 4
          %s5256 = int_to_ptr.hbm [resolvable:$true] %s5255
          %5258 = dma.vmem_to_hbm [thread:$0]  %s5254, 32, %s5256, %s5241
        $region56: #{tpu_custom_call.1} parent=51 // pred_fallthru
          _
      $region52: #{tpu_custom_call.1} parent=5 // pred_fallthru
        _
      %p5259 = scmp.le.s32.totalorder 2, %s17
      // Predicated region
      $region57: #{tpu_custom_call.1} parent=5 // pred_check
        %p5260 = pneg %p5259
      $region58: #{tpu_custom_call.1} parent=5 // pred_check_branch
        %5262 = sbr.rel (%p5260) target = $region60
      $region59: #{tpu_custom_call.1} parent=5 // pred_region
        %s5263 = ssub.s32 %s17, 2
        // Predicated region
        $region61: #{tpu_custom_call.1} parent=59 // pred_check
          %p5264 = pneg %p224
        $region62: #{tpu_custom_call.1} parent=59 // pred_check_branch
          %5266 = sbr.rel (%p5264) target = $region64
        $region63: #{tpu_custom_call.1} parent=59 // pred_region
          %s5267 = sand.u32 %s209, 1
          %s5268 = scalar_lea.sflag [#allocation3], %s5267
          %s5269 = sand.u32 %s209, 1
          %s5270 = smul.addr %s5269, 2
          %s5271 = scalar_lea.vmem [#allocation2], %s5270
          %5273 = dma.done %s5268, 32
        $region64: #{tpu_custom_call.1} parent=59 // pred_fallthru
          _
      $region60: #{tpu_custom_call.1} parent=5 // pred_fallthru
        _
    $region6: #{tpu_custom_call.1} parent=1 // loop_footer
      %s21 = sadd.s32 1, %s17
    $region7: #{tpu_custom_call.1} parent=1 // loop_footer_branch
      %16 = sbr.rel target = $region3
    $region8: #{tpu_custom_call.1} parent=1 // loop_exit
      _
    %5274 = vsyncpa [#allocation3], 1
    %s5275 = scalar_lea.sflag [#allocation3], 1
    %5276 = vsyncpa %s5275, 1

</llo_original>
